<compile_context>
chip_gen: v5e
topology: v5e:2x2
jax: 0.10.0
libtpu: 0.0.40
codegen_flags: <defaults>
</compile_context>

<pallas_src>
import jax
import jax.numpy as jnp
from jax.experimental import pallas as pl
from jax.experimental.pallas import tpu as pltpu

HIDDEN_SIZE = 128
INPUT_SIZE = 28
NUM_CLASSES = 10
NUM_LAYERS = 2  # implemented explicitly as two stacked cells in the kernel

_UNROLL_T_MAX = 16          # fully unroll the time loops when T is this small
MATMUL_DTYPE = jnp.float32  # jnp.bfloat16 is a drop-in win on v6e/v7x at larger B/H


def _mm(a, b):
    """MXU matmul with optional reduced-precision operands, f32 accumulate."""
    return jnp.dot(a.astype(MATMUL_DTYPE), b.astype(MATMUL_DTYPE),
                   preferred_element_type=jnp.float32)


def _lstm_fc_kernel(x_ref, w0_ref, wpack_ref, bpack_ref, fcw_ref,
                    out_ref, pre_ref, h0_ref):
    """Single-invocation kernel: whole sequence in VMEM, layer-by-layer recurrence."""
    T, Bp, _ = x_ref.shape
    H = HIDDEN_SIZE
    G = 4 * H

    # Resident weights (tile-aligned static slices of the packed operand).
    whh0 = wpack_ref[0 * H:1 * H, :]      # (H, 4H)  layer-0 recurrent weights (transposed)
    wih1 = wpack_ref[1 * H:2 * H, :]      # (H, 4H)  layer-1 input weights (transposed)
    whh1 = wpack_ref[2 * H:3 * H, :]      # (H, 4H)  layer-1 recurrent weights (transposed)
    b1 = bpack_ref[0:1, :]                # (1, 4H)  fused layer-1 bias (b_ih + b_hh)

    def cell_from_gates(gates, c):
        # PyTorch gate order [i, f, g, o]; sigmoid on the contiguous [i, f] slab.
        if_s = jax.nn.sigmoid(gates[:, 0:2 * H])
        g = jnp.tanh(gates[:, 2 * H:3 * H])
        o = jax.nn.sigmoid(gates[:, 3 * H:4 * H])
        c_new = if_s[:, H:2 * H] * c + if_s[:, 0:H] * g
        h_new = o * jnp.tanh(c_new)
        return h_new, c_new

    zeros = jnp.zeros((Bp, H), jnp.float32)

    # ---- Layer 0: one batched input projection (bias folded via ones-column / bias-row).
    x_flat = x_ref[...].reshape(T * Bp, x_ref.shape[2])
    pre_ref[...] = _mm(x_flat, w0_ref[...]).reshape(T, Bp, G)

    # ---- Layer 0 recurrence: one K=128 matmul per step; h0_t stored time-major.
    def l0_step(t, carry):
        h, c = carry
        gates = pre_ref[t] + _mm(h, whh0)
        h, c = cell_from_gates(gates, c)
        h0_ref[t] = h
        return (h, c)

    if T <= _UNROLL_T_MAX:
        carry = (zeros, zeros)
        for t in range(T):               # fully unrolled (static indices, LLO-visible)
            carry = l0_step(t, carry)
    else:
        jax.lax.fori_loop(0, T, l0_step, (zeros, zeros), unroll=2)

    # ---- Layer 1: one batched input projection from the stored layer-0 hiddens.
    h0_flat = h0_ref[...].reshape(T * Bp, H)
    pre_ref[...] = (_mm(h0_flat, wih1) + b1).reshape(T, Bp, G)

    # ---- Layer 1 recurrence.
    def l1_step(t, carry):
        h, c = carry
        gates = pre_ref[t] + _mm(h, whh1)
        return cell_from_gates(gates, c)

    if T <= _UNROLL_T_MAX:
        carry = (zeros, zeros)
        for t in range(T):
            carry = l1_step(t, carry)
        h_top = carry[0]
    else:
        h_top, _ = jax.lax.fori_loop(0, T, l1_step, (zeros, zeros), unroll=2)

    # ---- FC head: lane-dense (Bp, 128) store; fc bias packed in bpack row 1.
    fcb = bpack_ref[1:2, 0:out_ref.shape[1]]
    out_ref[...] = _mm(h_top, fcw_ref[...]) + fcb


def rnn_forward(x, params):
    """x: (B, T, I) float32, batch_first like PyTorch. Returns (B, NUM_CLASSES)."""
    B, T, I = x.shape
    H, C = HIDDEN_SIZE, NUM_CLASSES
    G = 4 * H

    Bp = max(8, -(-B // 8) * 8)                      # sublane-align the batch
    Ipad = max(128, -(-(I + 1) // 128) * 128)        # lane-align (+1 room for bias column)
    Cpad = 128                                       # lane-dense FC output

    # Time-major, lane-padded input with a constant 1.0 at column I (feeds the bias row).
    x_tm = jnp.transpose(x, (1, 0, 2)).astype(jnp.float32)            # (T, B, I)
    x_p = jnp.zeros((T, Bp, Ipad), jnp.float32)
    x_p = x_p.at[:, :B, :I].set(x_tm)
    x_p = x_p.at[:, :, I].set(1.0)

    # Layer-0 input weights, pre-transposed, with the fused bias (b_ih + b_hh) as row I.
    w0 = jnp.zeros((Ipad, G), jnp.float32)
    w0 = w0.at[:I, :].set(params["w_ih_l0"].T)
    w0 = w0.at[I, :].set(params["b_ih_l0"] + params["b_hh_l0"])

    # Recurrent / layer-1 weights packed into a single (3H, 4H) operand.
    wpack = jnp.concatenate(
        [params["w_hh_l0"].T, params["w_ih_l1"].T, params["w_hh_l1"].T], axis=0)

    # Small bias pack: row 0 = fused layer-1 bias, row 1[:C] = fc bias.
    bpack = jnp.zeros((2, G), jnp.float32)
    bpack = bpack.at[0, :].set(params["b_ih_l1"] + params["b_hh_l1"])
    bpack = bpack.at[1, :C].set(params["fc_b"])

    # Lane-dense FC weights (real classes occupy the first C lanes).
    fcw = jnp.zeros((H, Cpad), jnp.float32).at[:, :C].set(params["fc_w"].T)

    vmem = pl.BlockSpec(memory_space=pltpu.MemorySpace.VMEM)
    out = pl.pallas_call(
        _lstm_fc_kernel,
        out_shape=jax.ShapeDtypeStruct((Bp, Cpad), jnp.float32),
        in_specs=[vmem] * 5,
        out_specs=vmem,
        scratch_shapes=[
            pltpu.VMEM((T, Bp, G), jnp.float32),   # pre: batched gate pre-activations
            pltpu.VMEM((T, Bp, H), jnp.float32),   # h0: layer-0 hiddens, time-major
        ],
    )(x_p, w0, wpack, bpack, fcw)
    return out[:B, :C]


def init_params(key):
    """Deterministic init mimicking PyTorch's U(-1/sqrt(H), 1/sqrt(H))."""
    H, I, C = HIDDEN_SIZE, INPUT_SIZE, NUM_CLASSES
    bound = 1.0 / jnp.sqrt(jnp.float32(H))
    shapes = {
        "w_ih_l0": (4 * H, I), "w_hh_l0": (4 * H, H),
        "b_ih_l0": (4 * H,), "b_hh_l0": (4 * H,),
        "w_ih_l1": (4 * H, H), "w_hh_l1": (4 * H, H),
        "b_ih_l1": (4 * H,), "b_hh_l1": (4 * H,),
        "fc_w": (C, H), "fc_b": (C,),
    }
    params = {}
    for name, shape in shapes.items():
        key, sub = jax.random.split(key)
        params[name] = jax.random.uniform(
            sub, shape, jnp.float32, minval=-bound, maxval=bound)
    return params


def rnn_reference(x, params):
    """Pure-JAX reference of the same forward pass (for verification)."""
    B, T, I = x.shape
    H = HIDDEN_SIZE

    def cell(inp, h, c, wih, whh, bih, bhh):
        gates = inp @ wih.T + bih + h @ whh.T + bhh
        i_g = jax.nn.sigmoid(gates[:, 0 * H:1 * H])
        f_g = jax.nn.sigmoid(gates[:, 1 * H:2 * H])
        g_g = jnp.tanh(gates[:, 2 * H:3 * H])
        o_g = jax.nn.sigmoid(gates[:, 3 * H:4 * H])
        c = f_g * c + i_g * g_g
        h = o_g * jnp.tanh(c)
        return h, c

    h0 = jnp.zeros((B, H)); c0 = jnp.zeros((B, H))
    h1 = jnp.zeros((B, H)); c1 = jnp.zeros((B, H))
    for t in range(T):
        h0, c0 = cell(x[:, t, :], h0, c0, params["w_ih_l0"], params["w_hh_l0"],
                      params["b_ih_l0"], params["b_hh_l0"])
        h1, c1 = cell(h0, h1, c1, params["w_ih_l1"], params["w_hh_l1"],
                      params["b_ih_l1"], params["b_hh_l1"])
    return h1 @ params["fc_w"].T + params["fc_b"]


if __name__ == "__main__":
    key = jax.random.PRNGKey(0)
    key, xkey = jax.random.split(key)

    B, T = 2, 8
    x = jax.random.normal(xkey, (B, T, INPUT_SIZE), jnp.float32)
    params = init_params(key)

    out = rnn_forward(x, params)
    out = jax.block_until_ready(out)

    ref = rnn_reference(x, params)
    assert out.shape == (B, NUM_CLASSES)
    assert jnp.allclose(out, ref, atol=1e-4, rtol=1e-4), \
        f"max abs err = {jnp.max(jnp.abs(out - ref))}"

    print("KERNEL_OK")
</pallas_src>

<mosaic_0001>
module attributes {stable_mosaic.version = 11 : i64} {
  func.func @_lstm_fc_kernel(%arg0: memref<8x8x128xf32, #tpu.memory_space<vmem>>, %arg1: memref<128x512xf32, #tpu.memory_space<vmem>>, %arg2: memref<384x512xf32, #tpu.memory_space<vmem>>, %arg3: memref<2x512xf32, #tpu.memory_space<vmem>>, %arg4: memref<128x128xf32, #tpu.memory_space<vmem>>, %arg5: memref<8x128xf32, #tpu.memory_space<vmem>>, %arg6: memref<8x8x512xf32, #tpu.memory_space<vmem>>, %arg7: memref<8x8x128xf32, #tpu.memory_space<vmem>>) attributes {dimension_semantics = [], scalar_prefetch = 0 : i64, scratch_operands = 2 : i64, tpu.core_type = #tpu.core_type<tc>} {
    %c0 = arith.constant 0 : index
    %c0_0 = arith.constant 0 : index
    %0 = vector.load %arg2[%c0, %c0_0] : memref<384x512xf32, #tpu.memory_space<vmem>>, vector<128x512xf32>
    %c128 = arith.constant 128 : index
    %c0_1 = arith.constant 0 : index
    %1 = vector.load %arg2[%c128, %c0_1] : memref<384x512xf32, #tpu.memory_space<vmem>>, vector<128x512xf32>
    %c256 = arith.constant 256 : index
    %c0_2 = arith.constant 0 : index
    %2 = vector.load %arg2[%c256, %c0_2] : memref<384x512xf32, #tpu.memory_space<vmem>>, vector<128x512xf32>
    %c0_3 = arith.constant 0 : index
    %c0_4 = arith.constant 0 : index
    %3 = vector.load %arg3[%c0_3, %c0_4] : memref<2x512xf32, #tpu.memory_space<vmem>>, vector<1x512xf32>
    %cst = arith.constant 0.000000e+00 : f32
    %4 = vector.broadcast %cst : f32 to vector<8x128xf32>
    %c0_5 = arith.constant 0 : index
    %c0_6 = arith.constant 0 : index
    %c0_7 = arith.constant 0 : index
    %5 = vector.load %arg0[%c0_5, %c0_6, %c0_7] : memref<8x8x128xf32, #tpu.memory_space<vmem>>, vector<8x8x128xf32>
    %6 = vector.shape_cast %5 : vector<8x8x128xf32> to vector<64x128xf32>
    %c0_8 = arith.constant 0 : index
    %c0_9 = arith.constant 0 : index
    %7 = vector.load %arg1[%c0_8, %c0_9] : memref<128x512xf32, #tpu.memory_space<vmem>>, vector<128x512xf32>
    %cst_10 = arith.constant dense<0.000000e+00> : vector<64x512xf32>
    %8 = tpu.matmul %6, %7, %cst_10 {dimension_numbers = #tpu.dot_dimension_numbers<[1], [0], [0], [1], [0, 0, 1, 1], [], []>} : vector<64x128xf32>, vector<128x512xf32>, vector<64x512xf32> -> vector<64x512xf32>
    %9 = vector.shape_cast %8 : vector<64x512xf32> to vector<8x8x512xf32>
    %c0_11 = arith.constant 0 : index
    %c0_12 = arith.constant 0 : index
    %c0_13 = arith.constant 0 : index
    %10 = vector.load %arg6[%c0_11, %c0_12, %c0_13] : memref<8x8x512xf32, #tpu.memory_space<vmem>>, vector<8x8x512xf32>
    tpu.vector_store %arg6[%c0_11, %c0_12, %c0_13], %9 {strides = array<i32>} : memref<8x8x512xf32, #tpu.memory_space<vmem>>, vector<8x8x512xf32>,
    %c0_14 = arith.constant 0 : index
    %c0_15 = arith.constant 0 : index
    %c0_16 = arith.constant 0 : index
    %11 = vector.load %arg6[%c0_14, %c0_15, %c0_16] : memref<8x8x512xf32, #tpu.memory_space<vmem>>, vector<1x8x512xf32>
    %12 = vector.shape_cast %11 : vector<1x8x512xf32> to vector<8x512xf32>
    %cst_17 = arith.constant dense<0.000000e+00> : vector<8x512xf32>
    %13 = tpu.matmul %4, %0, %cst_17 {dimension_numbers = #tpu.dot_dimension_numbers<[1], [0], [0], [1], [0, 0, 1, 1], [], []>} : vector<8x128xf32>, vector<128x512xf32>, vector<8x512xf32> -> vector<8x512xf32>
    %14 = arith.addf %12, %13 : vector<8x512xf32>
    %15 = vector.extract_strided_slice %14 {offsets = [0, 0], sizes = [8, 256], strides = [1, 1]} : vector<8x512xf32> to vector<8x256xf32>
    %16 = arith.negf %15 : vector<8x256xf32>
    %17 = math.exp %16 : vector<8x256xf32>
    %cst_18 = arith.constant 1.000000e+00 : f32
    %18 = vector.broadcast %cst_18 : f32 to vector<8x256xf32>
    %19 = arith.addf %18, %17 : vector<8x256xf32>
    %20 = arith.divf %18, %19 : vector<8x256xf32>
    %21 = vector.extract_strided_slice %14 {offsets = [0, 256], sizes = [8, 128], strides = [1, 1]} : vector<8x512xf32> to vector<8x128xf32>
    %22 = math.tanh %21 : vector<8x128xf32>
    %23 = vector.extract_strided_slice %14 {offsets = [0, 384], sizes = [8, 128], strides = [1, 1]} : vector<8x512xf32> to vector<8x128xf32>
    %24 = arith.negf %23 : vector<8x128xf32>
    %25 = math.exp %24 : vector<8x128xf32>
    %cst_19 = arith.constant 1.000000e+00 : f32
    %26 = vector.broadcast %cst_19 : f32 to vector<8x128xf32>
    %27 = arith.addf %26, %25 : vector<8x128xf32>
    %28 = arith.divf %26, %27 : vector<8x128xf32>
    %29 = vector.extract_strided_slice %20 {offsets = [0, 128], sizes = [8, 128], strides = [1, 1]} : vector<8x256xf32> to vector<8x128xf32>
    %30 = arith.mulf %29, %4 : vector<8x128xf32>
    %31 = vector.extract_strided_slice %20 {offsets = [0, 0], sizes = [8, 128], strides = [1, 1]} : vector<8x256xf32> to vector<8x128xf32>
    %32 = arith.mulf %31, %22 : vector<8x128xf32>
    %33 = arith.addf %30, %32 : vector<8x128xf32>
    %34 = math.tanh %33 : vector<8x128xf32>
    %35 = arith.mulf %28, %34 : vector<8x128xf32>
    %c0_20 = arith.constant 0 : index
    %c0_21 = arith.constant 0 : index
    %c0_22 = arith.constant 0 : index
    %36 = vector.load %arg7[%c0_20, %c0_21, %c0_22] : memref<8x8x128xf32, #tpu.memory_space<vmem>>, vector<1x8x128xf32>
    %37 = vector.shape_cast %36 : vector<1x8x128xf32> to vector<8x128xf32>
    %38 = vector.shape_cast %35 : vector<8x128xf32> to vector<1x8x128xf32>
    tpu.vector_store %arg7[%c0_20, %c0_21, %c0_22], %38 {strides = array<i32>} : memref<8x8x128xf32, #tpu.memory_space<vmem>>, vector<1x8x128xf32>,
    %c1 = arith.constant 1 : index
    %c0_23 = arith.constant 0 : index
    %c0_24 = arith.constant 0 : index
    %39 = vector.load %arg6[%c1, %c0_23, %c0_24] : memref<8x8x512xf32, #tpu.memory_space<vmem>>, vector<1x8x512xf32>
    %40 = vector.shape_cast %39 : vector<1x8x512xf32> to vector<8x512xf32>
    %cst_25 = arith.constant dense<0.000000e+00> : vector<8x512xf32>
    %41 = tpu.matmul %35, %0, %cst_25 {dimension_numbers = #tpu.dot_dimension_numbers<[1], [0], [0], [1], [0, 0, 1, 1], [], []>} : vector<8x128xf32>, vector<128x512xf32>, vector<8x512xf32> -> vector<8x512xf32>
    %42 = arith.addf %40, %41 : vector<8x512xf32>
    %43 = vector.extract_strided_slice %42 {offsets = [0, 0], sizes = [8, 256], strides = [1, 1]} : vector<8x512xf32> to vector<8x256xf32>
    %44 = arith.negf %43 : vector<8x256xf32>
    %45 = math.exp %44 : vector<8x256xf32>
    %cst_26 = arith.constant 1.000000e+00 : f32
    %46 = vector.broadcast %cst_26 : f32 to vector<8x256xf32>
    %47 = arith.addf %46, %45 : vector<8x256xf32>
    %48 = arith.divf %46, %47 : vector<8x256xf32>
    %49 = vector.extract_strided_slice %42 {offsets = [0, 256], sizes = [8, 128], strides = [1, 1]} : vector<8x512xf32> to vector<8x128xf32>
    %50 = math.tanh %49 : vector<8x128xf32>
    %51 = vector.extract_strided_slice %42 {offsets = [0, 384], sizes = [8, 128], strides = [1, 1]} : vector<8x512xf32> to vector<8x128xf32>
    %52 = arith.negf %51 : vector<8x128xf32>
    %53 = math.exp %52 : vector<8x128xf32>
    %cst_27 = arith.constant 1.000000e+00 : f32
    %54 = vector.broadcast %cst_27 : f32 to vector<8x128xf32>
    %55 = arith.addf %54, %53 : vector<8x128xf32>
    %56 = arith.divf %54, %55 : vector<8x128xf32>
    %57 = vector.extract_strided_slice %48 {offsets = [0, 128], sizes = [8, 128], strides = [1, 1]} : vector<8x256xf32> to vector<8x128xf32>
    %58 = arith.mulf %57, %33 : vector<8x128xf32>
    %59 = vector.extract_strided_slice %48 {offsets = [0, 0], sizes = [8, 128], strides = [1, 1]} : vector<8x256xf32> to vector<8x128xf32>
    %60 = arith.mulf %59, %50 : vector<8x128xf32>
    %61 = arith.addf %58, %60 : vector<8x128xf32>
    %62 = math.tanh %61 : vector<8x128xf32>
    %63 = arith.mulf %56, %62 : vector<8x128xf32>
    %c1_28 = arith.constant 1 : index
    %c0_29 = arith.constant 0 : index
    %c0_30 = arith.constant 0 : index
    %64 = vector.load %arg7[%c1_28, %c0_29, %c0_30] : memref<8x8x128xf32, #tpu.memory_space<vmem>>, vector<1x8x128xf32>
    %65 = vector.shape_cast %64 : vector<1x8x128xf32> to vector<8x128xf32>
    %66 = vector.shape_cast %63 : vector<8x128xf32> to vector<1x8x128xf32>
    tpu.vector_store %arg7[%c1_28, %c0_29, %c0_30], %66 {strides = array<i32>} : memref<8x8x128xf32, #tpu.memory_space<vmem>>, vector<1x8x128xf32>,
    %c2 = arith.constant 2 : index
    %c0_31 = arith.constant 0 : index
    %c0_32 = arith.constant 0 : index
    %67 = vector.load %arg6[%c2, %c0_31, %c0_32] : memref<8x8x512xf32, #tpu.memory_space<vmem>>, vector<1x8x512xf32>
    %68 = vector.shape_cast %67 : vector<1x8x512xf32> to vector<8x512xf32>
    %cst_33 = arith.constant dense<0.000000e+00> : vector<8x512xf32>
    %69 = tpu.matmul %63, %0, %cst_33 {dimension_numbers = #tpu.dot_dimension_numbers<[1], [0], [0], [1], [0, 0, 1, 1], [], []>} : vector<8x128xf32>, vector<128x512xf32>, vector<8x512xf32> -> vector<8x512xf32>
    %70 = arith.addf %68, %69 : vector<8x512xf32>
    %71 = vector.extract_strided_slice %70 {offsets = [0, 0], sizes = [8, 256], strides = [1, 1]} : vector<8x512xf32> to vector<8x256xf32>
    %72 = arith.negf %71 : vector<8x256xf32>
    %73 = math.exp %72 : vector<8x256xf32>
    %cst_34 = arith.constant 1.000000e+00 : f32
    %74 = vector.broadcast %cst_34 : f32 to vector<8x256xf32>
    %75 = arith.addf %74, %73 : vector<8x256xf32>
    %76 = arith.divf %74, %75 : vector<8x256xf32>
    %77 = vector.extract_strided_slice %70 {offsets = [0, 256], sizes = [8, 128], strides = [1, 1]} : vector<8x512xf32> to vector<8x128xf32>
    %78 = math.tanh %77 : vector<8x128xf32>
    %79 = vector.extract_strided_slice %70 {offsets = [0, 384], sizes = [8, 128], strides = [1, 1]} : vector<8x512xf32> to vector<8x128xf32>
    %80 = arith.negf %79 : vector<8x128xf32>
    %81 = math.exp %80 : vector<8x128xf32>
    %cst_35 = arith.constant 1.000000e+00 : f32
    %82 = vector.broadcast %cst_35 : f32 to vector<8x128xf32>
    %83 = arith.addf %82, %81 : vector<8x128xf32>
    %84 = arith.divf %82, %83 : vector<8x128xf32>
    %85 = vector.extract_strided_slice %76 {offsets = [0, 128], sizes = [8, 128], strides = [1, 1]} : vector<8x256xf32> to vector<8x128xf32>
    %86 = arith.mulf %85, %61 : vector<8x128xf32>
    %87 = vector.extract_strided_slice %76 {offsets = [0, 0], sizes = [8, 128], strides = [1, 1]} : vector<8x256xf32> to vector<8x128xf32>
    %88 = arith.mulf %87, %78 : vector<8x128xf32>
    %89 = arith.addf %86, %88 : vector<8x128xf32>
    %90 = math.tanh %89 : vector<8x128xf32>
    %91 = arith.mulf %84, %90 : vector<8x128xf32>
    %c2_36 = arith.constant 2 : index
    %c0_37 = arith.constant 0 : index
    %c0_38 = arith.constant 0 : index
    %92 = vector.load %arg7[%c2_36, %c0_37, %c0_38] : memref<8x8x128xf32, #tpu.memory_space<vmem>>, vector<1x8x128xf32>
    %93 = vector.shape_cast %92 : vector<1x8x128xf32> to vector<8x128xf32>
    %94 = vector.shape_cast %91 : vector<8x128xf32> to vector<1x8x128xf32>
    tpu.vector_store %arg7[%c2_36, %c0_37, %c0_38], %94 {strides = array<i32>} : memref<8x8x128xf32, #tpu.memory_space<vmem>>, vector<1x8x128xf32>,
    %c3 = arith.constant 3 : index
    %c0_39 = arith.constant 0 : index
    %c0_40 = arith.constant 0 : index
    %95 = vector.load %arg6[%c3, %c0_39, %c0_40] : memref<8x8x512xf32, #tpu.memory_space<vmem>>, vector<1x8x512xf32>
    %96 = vector.shape_cast %95 : vector<1x8x512xf32> to vector<8x512xf32>
    %cst_41 = arith.constant dense<0.000000e+00> : vector<8x512xf32>
    %97 = tpu.matmul %91, %0, %cst_41 {dimension_numbers = #tpu.dot_dimension_numbers<[1], [0], [0], [1], [0, 0, 1, 1], [], []>} : vector<8x128xf32>, vector<128x512xf32>, vector<8x512xf32> -> vector<8x512xf32>
    %98 = arith.addf %96, %97 : vector<8x512xf32>
    %99 = vector.extract_strided_slice %98 {offsets = [0, 0], sizes = [8, 256], strides = [1, 1]} : vector<8x512xf32> to vector<8x256xf32>
    %100 = arith.negf %99 : vector<8x256xf32>
    %101 = math.exp %100 : vector<8x256xf32>
    %cst_42 = arith.constant 1.000000e+00 : f32
    %102 = vector.broadcast %cst_42 : f32 to vector<8x256xf32>
    %103 = arith.addf %102, %101 : vector<8x256xf32>
    %104 = arith.divf %102, %103 : vector<8x256xf32>
    %105 = vector.extract_strided_slice %98 {offsets = [0, 256], sizes = [8, 128], strides = [1, 1]} : vector<8x512xf32> to vector<8x128xf32>
    %106 = math.tanh %105 : vector<8x128xf32>
    %107 = vector.extract_strided_slice %98 {offsets = [0, 384], sizes = [8, 128], strides = [1, 1]} : vector<8x512xf32> to vector<8x128xf32>
    %108 = arith.negf %107 : vector<8x128xf32>
    %109 = math.exp %108 : vector<8x128xf32>
    %cst_43 = arith.constant 1.000000e+00 : f32
    %110 = vector.broadcast %cst_43 : f32 to vector<8x128xf32>
    %111 = arith.addf %110, %109 : vector<8x128xf32>
    %112 = arith.divf %110, %111 : vector<8x128xf32>
    %113 = vector.extract_strided_slice %104 {offsets = [0, 128], sizes = [8, 128], strides = [1, 1]} : vector<8x256xf32> to vector<8x128xf32>
    %114 = arith.mulf %113, %89 : vector<8x128xf32>
    %115 = vector.extract_strided_slice %104 {offsets = [0, 0], sizes = [8, 128], strides = [1, 1]} : vector<8x256xf32> to vector<8x128xf32>
    %116 = arith.mulf %115, %106 : vector<8x128xf32>
    %117 = arith.addf %114, %116 : vector<8x128xf32>
    %118 = math.tanh %117 : vector<8x128xf32>
    %119 = arith.mulf %112, %118 : vector<8x128xf32>
    %c3_44 = arith.constant 3 : index
    %c0_45 = arith.constant 0 : index
    %c0_46 = arith.constant 0 : index
    %120 = vector.load %arg7[%c3_44, %c0_45, %c0_46] : memref<8x8x128xf32, #tpu.memory_space<vmem>>, vector<1x8x128xf32>
    %121 = vector.shape_cast %120 : vector<1x8x128xf32> to vector<8x128xf32>
    %122 = vector.shape_cast %119 : vector<8x128xf32> to vector<1x8x128xf32>
    tpu.vector_store %arg7[%c3_44, %c0_45, %c0_46], %122 {strides = array<i32>} : memref<8x8x128xf32, #tpu.memory_space<vmem>>, vector<1x8x128xf32>,
    %c4 = arith.constant 4 : index
    %c0_47 = arith.constant 0 : index
    %c0_48 = arith.constant 0 : index
    %123 = vector.load %arg6[%c4, %c0_47, %c0_48] : memref<8x8x512xf32, #tpu.memory_space<vmem>>, vector<1x8x512xf32>
    %124 = vector.shape_cast %123 : vector<1x8x512xf32> to vector<8x512xf32>
    %cst_49 = arith.constant dense<0.000000e+00> : vector<8x512xf32>
    %125 = tpu.matmul %119, %0, %cst_49 {dimension_numbers = #tpu.dot_dimension_numbers<[1], [0], [0], [1], [0, 0, 1, 1], [], []>} : vector<8x128xf32>, vector<128x512xf32>, vector<8x512xf32> -> vector<8x512xf32>
    %126 = arith.addf %124, %125 : vector<8x512xf32>
    %127 = vector.extract_strided_slice %126 {offsets = [0, 0], sizes = [8, 256], strides = [1, 1]} : vector<8x512xf32> to vector<8x256xf32>
    %128 = arith.negf %127 : vector<8x256xf32>
    %129 = math.exp %128 : vector<8x256xf32>
    %cst_50 = arith.constant 1.000000e+00 : f32
    %130 = vector.broadcast %cst_50 : f32 to vector<8x256xf32>
    %131 = arith.addf %130, %129 : vector<8x256xf32>
    %132 = arith.divf %130, %131 : vector<8x256xf32>
    %133 = vector.extract_strided_slice %126 {offsets = [0, 256], sizes = [8, 128], strides = [1, 1]} : vector<8x512xf32> to vector<8x128xf32>
    %134 = math.tanh %133 : vector<8x128xf32>
    %135 = vector.extract_strided_slice %126 {offsets = [0, 384], sizes = [8, 128], strides = [1, 1]} : vector<8x512xf32> to vector<8x128xf32>
    %136 = arith.negf %135 : vector<8x128xf32>
    %137 = math.exp %136 : vector<8x128xf32>
    %cst_51 = arith.constant 1.000000e+00 : f32
    %138 = vector.broadcast %cst_51 : f32 to vector<8x128xf32>
    %139 = arith.addf %138, %137 : vector<8x128xf32>
    %140 = arith.divf %138, %139 : vector<8x128xf32>
    %141 = vector.extract_strided_slice %132 {offsets = [0, 128], sizes = [8, 128], strides = [1, 1]} : vector<8x256xf32> to vector<8x128xf32>
    %142 = arith.mulf %141, %117 : vector<8x128xf32>
    %143 = vector.extract_strided_slice %132 {offsets = [0, 0], sizes = [8, 128], strides = [1, 1]} : vector<8x256xf32> to vector<8x128xf32>
    %144 = arith.mulf %143, %134 : vector<8x128xf32>
    %145 = arith.addf %142, %144 : vector<8x128xf32>
    %146 = math.tanh %145 : vector<8x128xf32>
    %147 = arith.mulf %140, %146 : vector<8x128xf32>
    %c4_52 = arith.constant 4 : index
    %c0_53 = arith.constant 0 : index
    %c0_54 = arith.constant 0 : index
    %148 = vector.load %arg7[%c4_52, %c0_53, %c0_54] : memref<8x8x128xf32, #tpu.memory_space<vmem>>, vector<1x8x128xf32>
    %149 = vector.shape_cast %148 : vector<1x8x128xf32> to vector<8x128xf32>
    %150 = vector.shape_cast %147 : vector<8x128xf32> to vector<1x8x128xf32>
    tpu.vector_store %arg7[%c4_52, %c0_53, %c0_54], %150 {strides = array<i32>} : memref<8x8x128xf32, #tpu.memory_space<vmem>>, vector<1x8x128xf32>,
    %c5 = arith.constant 5 : index
    %c0_55 = arith.constant 0 : index
    %c0_56 = arith.constant 0 : index
    %151 = vector.load %arg6[%c5, %c0_55, %c0_56] : memref<8x8x512xf32, #tpu.memory_space<vmem>>, vector<1x8x512xf32>
    %152 = vector.shape_cast %151 : vector<1x8x512xf32> to vector<8x512xf32>
    %cst_57 = arith.constant dense<0.000000e+00> : vector<8x512xf32>
    %153 = tpu.matmul %147, %0, %cst_57 {dimension_numbers = #tpu.dot_dimension_numbers<[1], [0], [0], [1], [0, 0, 1, 1], [], []>} : vector<8x128xf32>, vector<128x512xf32>, vector<8x512xf32> -> vector<8x512xf32>
    %154 = arith.addf %152, %153 : vector<8x512xf32>
    %155 = vector.extract_strided_slice %154 {offsets = [0, 0], sizes = [8, 256], strides = [1, 1]} : vector<8x512xf32> to vector<8x256xf32>
    %156 = arith.negf %155 : vector<8x256xf32>
    %157 = math.exp %156 : vector<8x256xf32>
    %cst_58 = arith.constant 1.000000e+00 : f32
    %158 = vector.broadcast %cst_58 : f32 to vector<8x256xf32>
    %159 = arith.addf %158, %157 : vector<8x256xf32>
    %160 = arith.divf %158, %159 : vector<8x256xf32>
    %161 = vector.extract_strided_slice %154 {offsets = [0, 256], sizes = [8, 128], strides = [1, 1]} : vector<8x512xf32> to vector<8x128xf32>
    %162 = math.tanh %161 : vector<8x128xf32>
    %163 = vector.extract_strided_slice %154 {offsets = [0, 384], sizes = [8, 128], strides = [1, 1]} : vector<8x512xf32> to vector<8x128xf32>
    %164 = arith.negf %163 : vector<8x128xf32>
    %165 = math.exp %164 : vector<8x128xf32>
    %cst_59 = arith.constant 1.000000e+00 : f32
    %166 = vector.broadcast %cst_59 : f32 to vector<8x128xf32>
    %167 = arith.addf %166, %165 : vector<8x128xf32>
    %168 = arith.divf %166, %167 : vector<8x128xf32>
    %169 = vector.extract_strided_slice %160 {offsets = [0, 128], sizes = [8, 128], strides = [1, 1]} : vector<8x256xf32> to vector<8x128xf32>
    %170 = arith.mulf %169, %145 : vector<8x128xf32>
    %171 = vector.extract_strided_slice %160 {offsets = [0, 0], sizes = [8, 128], strides = [1, 1]} : vector<8x256xf32> to vector<8x128xf32>
    %172 = arith.mulf %171, %162 : vector<8x128xf32>
    %173 = arith.addf %170, %172 : vector<8x128xf32>
    %174 = math.tanh %173 : vector<8x128xf32>
    %175 = arith.mulf %168, %174 : vector<8x128xf32>
    %c5_60 = arith.constant 5 : index
    %c0_61 = arith.constant 0 : index
    %c0_62 = arith.constant 0 : index
    %176 = vector.load %arg7[%c5_60, %c0_61, %c0_62] : memref<8x8x128xf32, #tpu.memory_space<vmem>>, vector<1x8x128xf32>
    %177 = vector.shape_cast %176 : vector<1x8x128xf32> to vector<8x128xf32>
    %178 = vector.shape_cast %175 : vector<8x128xf32> to vector<1x8x128xf32>
    tpu.vector_store %arg7[%c5_60, %c0_61, %c0_62], %178 {strides = array<i32>} : memref<8x8x128xf32, #tpu.memory_space<vmem>>, vector<1x8x128xf32>,
    %c6 = arith.constant 6 : index
    %c0_63 = arith.constant 0 : index
    %c0_64 = arith.constant 0 : index
    %179 = vector.load %arg6[%c6, %c0_63, %c0_64] : memref<8x8x512xf32, #tpu.memory_space<vmem>>, vector<1x8x512xf32>
    %180 = vector.shape_cast %179 : vector<1x8x512xf32> to vector<8x512xf32>
    %cst_65 = arith.constant dense<0.000000e+00> : vector<8x512xf32>
    %181 = tpu.matmul %175, %0, %cst_65 {dimension_numbers = #tpu.dot_dimension_numbers<[1], [0], [0], [1], [0, 0, 1, 1], [], []>} : vector<8x128xf32>, vector<128x512xf32>, vector<8x512xf32> -> vector<8x512xf32>
    %182 = arith.addf %180, %181 : vector<8x512xf32>
    %183 = vector.extract_strided_slice %182 {offsets = [0, 0], sizes = [8, 256], strides = [1, 1]} : vector<8x512xf32> to vector<8x256xf32>
    %184 = arith.negf %183 : vector<8x256xf32>
    %185 = math.exp %184 : vector<8x256xf32>
    %cst_66 = arith.constant 1.000000e+00 : f32
    %186 = vector.broadcast %cst_66 : f32 to vector<8x256xf32>
    %187 = arith.addf %186, %185 : vector<8x256xf32>
    %188 = arith.divf %186, %187 : vector<8x256xf32>
    %189 = vector.extract_strided_slice %182 {offsets = [0, 256], sizes = [8, 128], strides = [1, 1]} : vector<8x512xf32> to vector<8x128xf32>
    %190 = math.tanh %189 : vector<8x128xf32>
    %191 = vector.extract_strided_slice %182 {offsets = [0, 384], sizes = [8, 128], strides = [1, 1]} : vector<8x512xf32> to vector<8x128xf32>
    %192 = arith.negf %191 : vector<8x128xf32>
    %193 = math.exp %192 : vector<8x128xf32>
    %cst_67 = arith.constant 1.000000e+00 : f32
    %194 = vector.broadcast %cst_67 : f32 to vector<8x128xf32>
    %195 = arith.addf %194, %193 : vector<8x128xf32>
    %196 = arith.divf %194, %195 : vector<8x128xf32>
    %197 = vector.extract_strided_slice %188 {offsets = [0, 128], sizes = [8, 128], strides = [1, 1]} : vector<8x256xf32> to vector<8x128xf32>
    %198 = arith.mulf %197, %173 : vector<8x128xf32>
    %199 = vector.extract_strided_slice %188 {offsets = [0, 0], sizes = [8, 128], strides = [1, 1]} : vector<8x256xf32> to vector<8x128xf32>
    %200 = arith.mulf %199, %190 : vector<8x128xf32>
    %201 = arith.addf %198, %200 : vector<8x128xf32>
    %202 = math.tanh %201 : vector<8x128xf32>
    %203 = arith.mulf %196, %202 : vector<8x128xf32>
    %c6_68 = arith.constant 6 : index
    %c0_69 = arith.constant 0 : index
    %c0_70 = arith.constant 0 : index
    %204 = vector.load %arg7[%c6_68, %c0_69, %c0_70] : memref<8x8x128xf32, #tpu.memory_space<vmem>>, vector<1x8x128xf32>
    %205 = vector.shape_cast %204 : vector<1x8x128xf32> to vector<8x128xf32>
    %206 = vector.shape_cast %203 : vector<8x128xf32> to vector<1x8x128xf32>
    tpu.vector_store %arg7[%c6_68, %c0_69, %c0_70], %206 {strides = array<i32>} : memref<8x8x128xf32, #tpu.memory_space<vmem>>, vector<1x8x128xf32>,
    %c7 = arith.constant 7 : index
    %c0_71 = arith.constant 0 : index
    %c0_72 = arith.constant 0 : index
    %207 = vector.load %arg6[%c7, %c0_71, %c0_72] : memref<8x8x512xf32, #tpu.memory_space<vmem>>, vector<1x8x512xf32>
    %208 = vector.shape_cast %207 : vector<1x8x512xf32> to vector<8x512xf32>
    %cst_73 = arith.constant dense<0.000000e+00> : vector<8x512xf32>
    %209 = tpu.matmul %203, %0, %cst_73 {dimension_numbers = #tpu.dot_dimension_numbers<[1], [0], [0], [1], [0, 0, 1, 1], [], []>} : vector<8x128xf32>, vector<128x512xf32>, vector<8x512xf32> -> vector<8x512xf32>
    %210 = arith.addf %208, %209 : vector<8x512xf32>
    %211 = vector.extract_strided_slice %210 {offsets = [0, 0], sizes = [8, 256], strides = [1, 1]} : vector<8x512xf32> to vector<8x256xf32>
    %212 = arith.negf %211 : vector<8x256xf32>
    %213 = math.exp %212 : vector<8x256xf32>
    %cst_74 = arith.constant 1.000000e+00 : f32
    %214 = vector.broadcast %cst_74 : f32 to vector<8x256xf32>
    %215 = arith.addf %214, %213 : vector<8x256xf32>
    %216 = arith.divf %214, %215 : vector<8x256xf32>
    %217 = vector.extract_strided_slice %210 {offsets = [0, 256], sizes = [8, 128], strides = [1, 1]} : vector<8x512xf32> to vector<8x128xf32>
    %218 = math.tanh %217 : vector<8x128xf32>
    %219 = vector.extract_strided_slice %210 {offsets = [0, 384], sizes = [8, 128], strides = [1, 1]} : vector<8x512xf32> to vector<8x128xf32>
    %220 = arith.negf %219 : vector<8x128xf32>
    %221 = math.exp %220 : vector<8x128xf32>
    %cst_75 = arith.constant 1.000000e+00 : f32
    %222 = vector.broadcast %cst_75 : f32 to vector<8x128xf32>
    %223 = arith.addf %222, %221 : vector<8x128xf32>
    %224 = arith.divf %222, %223 : vector<8x128xf32>
    %225 = vector.extract_strided_slice %216 {offsets = [0, 128], sizes = [8, 128], strides = [1, 1]} : vector<8x256xf32> to vector<8x128xf32>
    %226 = arith.mulf %225, %201 : vector<8x128xf32>
    %227 = vector.extract_strided_slice %216 {offsets = [0, 0], sizes = [8, 128], strides = [1, 1]} : vector<8x256xf32> to vector<8x128xf32>
    %228 = arith.mulf %227, %218 : vector<8x128xf32>
    %229 = arith.addf %226, %228 : vector<8x128xf32>
    %230 = math.tanh %229 : vector<8x128xf32>
    %231 = arith.mulf %224, %230 : vector<8x128xf32>
    %c7_76 = arith.constant 7 : index
    %c0_77 = arith.constant 0 : index
    %c0_78 = arith.constant 0 : index
    %232 = vector.load %arg7[%c7_76, %c0_77, %c0_78] : memref<8x8x128xf32, #tpu.memory_space<vmem>>, vector<1x8x128xf32>
    %233 = vector.shape_cast %232 : vector<1x8x128xf32> to vector<8x128xf32>
    %234 = vector.shape_cast %231 : vector<8x128xf32> to vector<1x8x128xf32>
    tpu.vector_store %arg7[%c7_76, %c0_77, %c0_78], %234 {strides = array<i32>} : memref<8x8x128xf32, #tpu.memory_space<vmem>>, vector<1x8x128xf32>,
    %c0_79 = arith.constant 0 : index
    %c0_80 = arith.constant 0 : index
    %c0_81 = arith.constant 0 : index
    %235 = vector.load %arg7[%c0_79, %c0_80, %c0_81] : memref<8x8x128xf32, #tpu.memory_space<vmem>>, vector<8x8x128xf32>
    %236 = vector.shape_cast %235 : vector<8x8x128xf32> to vector<64x128xf32>
    %cst_82 = arith.constant dense<0.000000e+00> : vector<64x512xf32>
    %237 = tpu.matmul %236, %1, %cst_82 {dimension_numbers = #tpu.dot_dimension_numbers<[1], [0], [0], [1], [0, 0, 1, 1], [], []>} : vector<64x128xf32>, vector<128x512xf32>, vector<64x512xf32> -> vector<64x512xf32>
    %238 = vector.broadcast %3 : vector<1x512xf32> to vector<64x512xf32>
    %239 = arith.addf %237, %238 : vector<64x512xf32>
    %240 = vector.shape_cast %239 : vector<64x512xf32> to vector<8x8x512xf32>
    %c0_83 = arith.constant 0 : index
    %c0_84 = arith.constant 0 : index
    %c0_85 = arith.constant 0 : index
    %241 = vector.load %arg6[%c0_83, %c0_84, %c0_85] : memref<8x8x512xf32, #tpu.memory_space<vmem>>, vector<8x8x512xf32>
    tpu.vector_store %arg6[%c0_83, %c0_84, %c0_85], %240 {strides = array<i32>} : memref<8x8x512xf32, #tpu.memory_space<vmem>>, vector<8x8x512xf32>,
    %c0_86 = arith.constant 0 : index
    %c0_87 = arith.constant 0 : index
    %c0_88 = arith.constant 0 : index
    %242 = vector.load %arg6[%c0_86, %c0_87, %c0_88] : memref<8x8x512xf32, #tpu.memory_space<vmem>>, vector<1x8x512xf32>
    %243 = vector.shape_cast %242 : vector<1x8x512xf32> to vector<8x512xf32>
    %cst_89 = arith.constant dense<0.000000e+00> : vector<8x512xf32>
    %244 = tpu.matmul %4, %2, %cst_89 {dimension_numbers = #tpu.dot_dimension_numbers<[1], [0], [0], [1], [0, 0, 1, 1], [], []>} : vector<8x128xf32>, vector<128x512xf32>, vector<8x512xf32> -> vector<8x512xf32>
    %245 = arith.addf %243, %244 : vector<8x512xf32>
    %246 = vector.extract_strided_slice %245 {offsets = [0, 0], sizes = [8, 256], strides = [1, 1]} : vector<8x512xf32> to vector<8x256xf32>
    %247 = arith.negf %246 : vector<8x256xf32>
    %248 = math.exp %247 : vector<8x256xf32>
    %cst_90 = arith.constant 1.000000e+00 : f32
    %249 = vector.broadcast %cst_90 : f32 to vector<8x256xf32>
    %250 = arith.addf %249, %248 : vector<8x256xf32>
    %251 = arith.divf %249, %250 : vector<8x256xf32>
    %252 = vector.extract_strided_slice %245 {offsets = [0, 256], sizes = [8, 128], strides = [1, 1]} : vector<8x512xf32> to vector<8x128xf32>
    %253 = math.tanh %252 : vector<8x128xf32>
    %254 = vector.extract_strided_slice %245 {offsets = [0, 384], sizes = [8, 128], strides = [1, 1]} : vector<8x512xf32> to vector<8x128xf32>
    %255 = arith.negf %254 : vector<8x128xf32>
    %256 = math.exp %255 : vector<8x128xf32>
    %cst_91 = arith.constant 1.000000e+00 : f32
    %257 = vector.broadcast %cst_91 : f32 to vector<8x128xf32>
    %258 = arith.addf %257, %256 : vector<8x128xf32>
    %259 = arith.divf %257, %258 : vector<8x128xf32>
    %260 = vector.extract_strided_slice %251 {offsets = [0, 128], sizes = [8, 128], strides = [1, 1]} : vector<8x256xf32> to vector<8x128xf32>
    %261 = arith.mulf %260, %4 : vector<8x128xf32>
    %262 = vector.extract_strided_slice %251 {offsets = [0, 0], sizes = [8, 128], strides = [1, 1]} : vector<8x256xf32> to vector<8x128xf32>
    %263 = arith.mulf %262, %253 : vector<8x128xf32>
    %264 = arith.addf %261, %263 : vector<8x128xf32>
    %265 = math.tanh %264 : vector<8x128xf32>
    %266 = arith.mulf %259, %265 : vector<8x128xf32>
    %c1_92 = arith.constant 1 : index
    %c0_93 = arith.constant 0 : index
    %c0_94 = arith.constant 0 : index
    %267 = vector.load %arg6[%c1_92, %c0_93, %c0_94] : memref<8x8x512xf32, #tpu.memory_space<vmem>>, vector<1x8x512xf32>
    %268 = vector.shape_cast %267 : vector<1x8x512xf32> to vector<8x512xf32>
    %cst_95 = arith.constant dense<0.000000e+00> : vector<8x512xf32>
    %269 = tpu.matmul %266, %2, %cst_95 {dimension_numbers = #tpu.dot_dimension_numbers<[1], [0], [0], [1], [0, 0, 1, 1], [], []>} : vector<8x128xf32>, vector<128x512xf32>, vector<8x512xf32> -> vector<8x512xf32>
    %270 = arith.addf %268, %269 : vector<8x512xf32>
    %271 = vector.extract_strided_slice %270 {offsets = [0, 0], sizes = [8, 256], strides = [1, 1]} : vector<8x512xf32> to vector<8x256xf32>
    %272 = arith.negf %271 : vector<8x256xf32>
    %273 = math.exp %272 : vector<8x256xf32>
    %cst_96 = arith.constant 1.000000e+00 : f32
    %274 = vector.broadcast %cst_96 : f32 to vector<8x256xf32>
    %275 = arith.addf %274, %273 : vector<8x256xf32>
    %276 = arith.divf %274, %275 : vector<8x256xf32>
    %277 = vector.extract_strided_slice %270 {offsets = [0, 256], sizes = [8, 128], strides = [1, 1]} : vector<8x512xf32> to vector<8x128xf32>
    %278 = math.tanh %277 : vector<8x128xf32>
    %279 = vector.extract_strided_slice %270 {offsets = [0, 384], sizes = [8, 128], strides = [1, 1]} : vector<8x512xf32> to vector<8x128xf32>
    %280 = arith.negf %279 : vector<8x128xf32>
    %281 = math.exp %280 : vector<8x128xf32>
    %cst_97 = arith.constant 1.000000e+00 : f32
    %282 = vector.broadcast %cst_97 : f32 to vector<8x128xf32>
    %283 = arith.addf %282, %281 : vector<8x128xf32>
    %284 = arith.divf %282, %283 : vector<8x128xf32>
    %285 = vector.extract_strided_slice %276 {offsets = [0, 128], sizes = [8, 128], strides = [1, 1]} : vector<8x256xf32> to vector<8x128xf32>
    %286 = arith.mulf %285, %264 : vector<8x128xf32>
    %287 = vector.extract_strided_slice %276 {offsets = [0, 0], sizes = [8, 128], strides = [1, 1]} : vector<8x256xf32> to vector<8x128xf32>
    %288 = arith.mulf %287, %278 : vector<8x128xf32>
    %289 = arith.addf %286, %288 : vector<8x128xf32>
    %290 = math.tanh %289 : vector<8x128xf32>
    %291 = arith.mulf %284, %290 : vector<8x128xf32>
    %c2_98 = arith.constant 2 : index
    %c0_99 = arith.constant 0 : index
    %c0_100 = arith.constant 0 : index
    %292 = vector.load %arg6[%c2_98, %c0_99, %c0_100] : memref<8x8x512xf32, #tpu.memory_space<vmem>>, vector<1x8x512xf32>
    %293 = vector.shape_cast %292 : vector<1x8x512xf32> to vector<8x512xf32>
    %cst_101 = arith.constant dense<0.000000e+00> : vector<8x512xf32>
    %294 = tpu.matmul %291, %2, %cst_101 {dimension_numbers = #tpu.dot_dimension_numbers<[1], [0], [0], [1], [0, 0, 1, 1], [], []>} : vector<8x128xf32>, vector<128x512xf32>, vector<8x512xf32> -> vector<8x512xf32>
    %295 = arith.addf %293, %294 : vector<8x512xf32>
    %296 = vector.extract_strided_slice %295 {offsets = [0, 0], sizes = [8, 256], strides = [1, 1]} : vector<8x512xf32> to vector<8x256xf32>
    %297 = arith.negf %296 : vector<8x256xf32>
    %298 = math.exp %297 : vector<8x256xf32>
    %cst_102 = arith.constant 1.000000e+00 : f32
    %299 = vector.broadcast %cst_102 : f32 to vector<8x256xf32>
    %300 = arith.addf %299, %298 : vector<8x256xf32>
    %301 = arith.divf %299, %300 : vector<8x256xf32>
    %302 = vector.extract_strided_slice %295 {offsets = [0, 256], sizes = [8, 128], strides = [1, 1]} : vector<8x512xf32> to vector<8x128xf32>
    %303 = math.tanh %302 : vector<8x128xf32>
    %304 = vector.extract_strided_slice %295 {offsets = [0, 384], sizes = [8, 128], strides = [1, 1]} : vector<8x512xf32> to vector<8x128xf32>
    %305 = arith.negf %304 : vector<8x128xf32>
    %306 = math.exp %305 : vector<8x128xf32>
    %cst_103 = arith.constant 1.000000e+00 : f32
    %307 = vector.broadcast %cst_103 : f32 to vector<8x128xf32>
    %308 = arith.addf %307, %306 : vector<8x128xf32>
    %309 = arith.divf %307, %308 : vector<8x128xf32>
    %310 = vector.extract_strided_slice %301 {offsets = [0, 128], sizes = [8, 128], strides = [1, 1]} : vector<8x256xf32> to vector<8x128xf32>
    %311 = arith.mulf %310, %289 : vector<8x128xf32>
    %312 = vector.extract_strided_slice %301 {offsets = [0, 0], sizes = [8, 128], strides = [1, 1]} : vector<8x256xf32> to vector<8x128xf32>
    %313 = arith.mulf %312, %303 : vector<8x128xf32>
    %314 = arith.addf %311, %313 : vector<8x128xf32>
    %315 = math.tanh %314 : vector<8x128xf32>
    %316 = arith.mulf %309, %315 : vector<8x128xf32>
    %c3_104 = arith.constant 3 : index
    %c0_105 = arith.constant 0 : index
    %c0_106 = arith.constant 0 : index
    %317 = vector.load %arg6[%c3_104, %c0_105, %c0_106] : memref<8x8x512xf32, #tpu.memory_space<vmem>>, vector<1x8x512xf32>
    %318 = vector.shape_cast %317 : vector<1x8x512xf32> to vector<8x512xf32>
    %cst_107 = arith.constant dense<0.000000e+00> : vector<8x512xf32>
    %319 = tpu.matmul %316, %2, %cst_107 {dimension_numbers = #tpu.dot_dimension_numbers<[1], [0], [0], [1], [0, 0, 1, 1], [], []>} : vector<8x128xf32>, vector<128x512xf32>, vector<8x512xf32> -> vector<8x512xf32>
    %320 = arith.addf %318, %319 : vector<8x512xf32>
    %321 = vector.extract_strided_slice %320 {offsets = [0, 0], sizes = [8, 256], strides = [1, 1]} : vector<8x512xf32> to vector<8x256xf32>
    %322 = arith.negf %321 : vector<8x256xf32>
    %323 = math.exp %322 : vector<8x256xf32>
    %cst_108 = arith.constant 1.000000e+00 : f32
    %324 = vector.broadcast %cst_108 : f32 to vector<8x256xf32>
    %325 = arith.addf %324, %323 : vector<8x256xf32>
    %326 = arith.divf %324, %325 : vector<8x256xf32>
    %327 = vector.extract_strided_slice %320 {offsets = [0, 256], sizes = [8, 128], strides = [1, 1]} : vector<8x512xf32> to vector<8x128xf32>
    %328 = math.tanh %327 : vector<8x128xf32>
    %329 = vector.extract_strided_slice %320 {offsets = [0, 384], sizes = [8, 128], strides = [1, 1]} : vector<8x512xf32> to vector<8x128xf32>
    %330 = arith.negf %329 : vector<8x128xf32>
    %331 = math.exp %330 : vector<8x128xf32>
    %cst_109 = arith.constant 1.000000e+00 : f32
    %332 = vector.broadcast %cst_109 : f32 to vector<8x128xf32>
    %333 = arith.addf %332, %331 : vector<8x128xf32>
    %334 = arith.divf %332, %333 : vector<8x128xf32>
    %335 = vector.extract_strided_slice %326 {offsets = [0, 128], sizes = [8, 128], strides = [1, 1]} : vector<8x256xf32> to vector<8x128xf32>
    %336 = arith.mulf %335, %314 : vector<8x128xf32>
    %337 = vector.extract_strided_slice %326 {offsets = [0, 0], sizes = [8, 128], strides = [1, 1]} : vector<8x256xf32> to vector<8x128xf32>
    %338 = arith.mulf %337, %328 : vector<8x128xf32>
    %339 = arith.addf %336, %338 : vector<8x128xf32>
    %340 = math.tanh %339 : vector<8x128xf32>
    %341 = arith.mulf %334, %340 : vector<8x128xf32>
    %c4_110 = arith.constant 4 : index
    %c0_111 = arith.constant 0 : index
    %c0_112 = arith.constant 0 : index
    %342 = vector.load %arg6[%c4_110, %c0_111, %c0_112] : memref<8x8x512xf32, #tpu.memory_space<vmem>>, vector<1x8x512xf32>
    %343 = vector.shape_cast %342 : vector<1x8x512xf32> to vector<8x512xf32>
    %cst_113 = arith.constant dense<0.000000e+00> : vector<8x512xf32>
    %344 = tpu.matmul %341, %2, %cst_113 {dimension_numbers = #tpu.dot_dimension_numbers<[1], [0], [0], [1], [0, 0, 1, 1], [], []>} : vector<8x128xf32>, vector<128x512xf32>, vector<8x512xf32> -> vector<8x512xf32>
    %345 = arith.addf %343, %344 : vector<8x512xf32>
    %346 = vector.extract_strided_slice %345 {offsets = [0, 0], sizes = [8, 256], strides = [1, 1]} : vector<8x512xf32> to vector<8x256xf32>
    %347 = arith.negf %346 : vector<8x256xf32>
    %348 = math.exp %347 : vector<8x256xf32>
    %cst_114 = arith.constant 1.000000e+00 : f32
    %349 = vector.broadcast %cst_114 : f32 to vector<8x256xf32>
    %350 = arith.addf %349, %348 : vector<8x256xf32>
    %351 = arith.divf %349, %350 : vector<8x256xf32>
    %352 = vector.extract_strided_slice %345 {offsets = [0, 256], sizes = [8, 128], strides = [1, 1]} : vector<8x512xf32> to vector<8x128xf32>
    %353 = math.tanh %352 : vector<8x128xf32>
    %354 = vector.extract_strided_slice %345 {offsets = [0, 384], sizes = [8, 128], strides = [1, 1]} : vector<8x512xf32> to vector<8x128xf32>
    %355 = arith.negf %354 : vector<8x128xf32>
    %356 = math.exp %355 : vector<8x128xf32>
    %cst_115 = arith.constant 1.000000e+00 : f32
    %357 = vector.broadcast %cst_115 : f32 to vector<8x128xf32>
    %358 = arith.addf %357, %356 : vector<8x128xf32>
    %359 = arith.divf %357, %358 : vector<8x128xf32>
    %360 = vector.extract_strided_slice %351 {offsets = [0, 128], sizes = [8, 128], strides = [1, 1]} : vector<8x256xf32> to vector<8x128xf32>
    %361 = arith.mulf %360, %339 : vector<8x128xf32>
    %362 = vector.extract_strided_slice %351 {offsets = [0, 0], sizes = [8, 128], strides = [1, 1]} : vector<8x256xf32> to vector<8x128xf32>
    %363 = arith.mulf %362, %353 : vector<8x128xf32>
    %364 = arith.addf %361, %363 : vector<8x128xf32>
    %365 = math.tanh %364 : vector<8x128xf32>
    %366 = arith.mulf %359, %365 : vector<8x128xf32>
    %c5_116 = arith.constant 5 : index
    %c0_117 = arith.constant 0 : index
    %c0_118 = arith.constant 0 : index
    %367 = vector.load %arg6[%c5_116, %c0_117, %c0_118] : memref<8x8x512xf32, #tpu.memory_space<vmem>>, vector<1x8x512xf32>
    %368 = vector.shape_cast %367 : vector<1x8x512xf32> to vector<8x512xf32>
    %cst_119 = arith.constant dense<0.000000e+00> : vector<8x512xf32>
    %369 = tpu.matmul %366, %2, %cst_119 {dimension_numbers = #tpu.dot_dimension_numbers<[1], [0], [0], [1], [0, 0, 1, 1], [], []>} : vector<8x128xf32>, vector<128x512xf32>, vector<8x512xf32> -> vector<8x512xf32>
    %370 = arith.addf %368, %369 : vector<8x512xf32>
    %371 = vector.extract_strided_slice %370 {offsets = [0, 0], sizes = [8, 256], strides = [1, 1]} : vector<8x512xf32> to vector<8x256xf32>
    %372 = arith.negf %371 : vector<8x256xf32>
    %373 = math.exp %372 : vector<8x256xf32>
    %cst_120 = arith.constant 1.000000e+00 : f32
    %374 = vector.broadcast %cst_120 : f32 to vector<8x256xf32>
    %375 = arith.addf %374, %373 : vector<8x256xf32>
    %376 = arith.divf %374, %375 : vector<8x256xf32>
    %377 = vector.extract_strided_slice %370 {offsets = [0, 256], sizes = [8, 128], strides = [1, 1]} : vector<8x512xf32> to vector<8x128xf32>
    %378 = math.tanh %377 : vector<8x128xf32>
    %379 = vector.extract_strided_slice %370 {offsets = [0, 384], sizes = [8, 128], strides = [1, 1]} : vector<8x512xf32> to vector<8x128xf32>
    %380 = arith.negf %379 : vector<8x128xf32>
    %381 = math.exp %380 : vector<8x128xf32>
    %cst_121 = arith.constant 1.000000e+00 : f32
    %382 = vector.broadcast %cst_121 : f32 to vector<8x128xf32>
    %383 = arith.addf %382, %381 : vector<8x128xf32>
    %384 = arith.divf %382, %383 : vector<8x128xf32>
    %385 = vector.extract_strided_slice %376 {offsets = [0, 128], sizes = [8, 128], strides = [1, 1]} : vector<8x256xf32> to vector<8x128xf32>
    %386 = arith.mulf %385, %364 : vector<8x128xf32>
    %387 = vector.extract_strided_slice %376 {offsets = [0, 0], sizes = [8, 128], strides = [1, 1]} : vector<8x256xf32> to vector<8x128xf32>
    %388 = arith.mulf %387, %378 : vector<8x128xf32>
    %389 = arith.addf %386, %388 : vector<8x128xf32>
    %390 = math.tanh %389 : vector<8x128xf32>
    %391 = arith.mulf %384, %390 : vector<8x128xf32>
    %c6_122 = arith.constant 6 : index
    %c0_123 = arith.constant 0 : index
    %c0_124 = arith.constant 0 : index
    %392 = vector.load %arg6[%c6_122, %c0_123, %c0_124] : memref<8x8x512xf32, #tpu.memory_space<vmem>>, vector<1x8x512xf32>
    %393 = vector.shape_cast %392 : vector<1x8x512xf32> to vector<8x512xf32>
    %cst_125 = arith.constant dense<0.000000e+00> : vector<8x512xf32>
    %394 = tpu.matmul %391, %2, %cst_125 {dimension_numbers = #tpu.dot_dimension_numbers<[1], [0], [0], [1], [0, 0, 1, 1], [], []>} : vector<8x128xf32>, vector<128x512xf32>, vector<8x512xf32> -> vector<8x512xf32>
    %395 = arith.addf %393, %394 : vector<8x512xf32>
    %396 = vector.extract_strided_slice %395 {offsets = [0, 0], sizes = [8, 256], strides = [1, 1]} : vector<8x512xf32> to vector<8x256xf32>
    %397 = arith.negf %396 : vector<8x256xf32>
    %398 = math.exp %397 : vector<8x256xf32>
    %cst_126 = arith.constant 1.000000e+00 : f32
    %399 = vector.broadcast %cst_126 : f32 to vector<8x256xf32>
    %400 = arith.addf %399, %398 : vector<8x256xf32>
    %401 = arith.divf %399, %400 : vector<8x256xf32>
    %402 = vector.extract_strided_slice %395 {offsets = [0, 256], sizes = [8, 128], strides = [1, 1]} : vector<8x512xf32> to vector<8x128xf32>
    %403 = math.tanh %402 : vector<8x128xf32>
    %404 = vector.extract_strided_slice %395 {offsets = [0, 384], sizes = [8, 128], strides = [1, 1]} : vector<8x512xf32> to vector<8x128xf32>
    %405 = arith.negf %404 : vector<8x128xf32>
    %406 = math.exp %405 : vector<8x128xf32>
    %cst_127 = arith.constant 1.000000e+00 : f32
    %407 = vector.broadcast %cst_127 : f32 to vector<8x128xf32>
    %408 = arith.addf %407, %406 : vector<8x128xf32>
    %409 = arith.divf %407, %408 : vector<8x128xf32>
    %410 = vector.extract_strided_slice %401 {offsets = [0, 128], sizes = [8, 128], strides = [1, 1]} : vector<8x256xf32> to vector<8x128xf32>
    %411 = arith.mulf %410, %389 : vector<8x128xf32>
    %412 = vector.extract_strided_slice %401 {offsets = [0, 0], sizes = [8, 128], strides = [1, 1]} : vector<8x256xf32> to vector<8x128xf32>
    %413 = arith.mulf %412, %403 : vector<8x128xf32>
    %414 = arith.addf %411, %413 : vector<8x128xf32>
    %415 = math.tanh %414 : vector<8x128xf32>
    %416 = arith.mulf %409, %415 : vector<8x128xf32>
    %c7_128 = arith.constant 7 : index
    %c0_129 = arith.constant 0 : index
    %c0_130 = arith.constant 0 : index
    %417 = vector.load %arg6[%c7_128, %c0_129, %c0_130] : memref<8x8x512xf32, #tpu.memory_space<vmem>>, vector<1x8x512xf32>
    %418 = vector.shape_cast %417 : vector<1x8x512xf32> to vector<8x512xf32>
    %cst_131 = arith.constant dense<0.000000e+00> : vector<8x512xf32>
    %419 = tpu.matmul %416, %2, %cst_131 {dimension_numbers = #tpu.dot_dimension_numbers<[1], [0], [0], [1], [0, 0, 1, 1], [], []>} : vector<8x128xf32>, vector<128x512xf32>, vector<8x512xf32> -> vector<8x512xf32>
    %420 = arith.addf %418, %419 : vector<8x512xf32>
    %421 = vector.extract_strided_slice %420 {offsets = [0, 0], sizes = [8, 256], strides = [1, 1]} : vector<8x512xf32> to vector<8x256xf32>
    %422 = arith.negf %421 : vector<8x256xf32>
    %423 = math.exp %422 : vector<8x256xf32>
    %cst_132 = arith.constant 1.000000e+00 : f32
    %424 = vector.broadcast %cst_132 : f32 to vector<8x256xf32>
    %425 = arith.addf %424, %423 : vector<8x256xf32>
    %426 = arith.divf %424, %425 : vector<8x256xf32>
    %427 = vector.extract_strided_slice %420 {offsets = [0, 256], sizes = [8, 128], strides = [1, 1]} : vector<8x512xf32> to vector<8x128xf32>
    %428 = math.tanh %427 : vector<8x128xf32>
    %429 = vector.extract_strided_slice %420 {offsets = [0, 384], sizes = [8, 128], strides = [1, 1]} : vector<8x512xf32> to vector<8x128xf32>
    %430 = arith.negf %429 : vector<8x128xf32>
    %431 = math.exp %430 : vector<8x128xf32>
    %cst_133 = arith.constant 1.000000e+00 : f32
    %432 = vector.broadcast %cst_133 : f32 to vector<8x128xf32>
    %433 = arith.addf %432, %431 : vector<8x128xf32>
    %434 = arith.divf %432, %433 : vector<8x128xf32>
    %435 = vector.extract_strided_slice %426 {offsets = [0, 128], sizes = [8, 128], strides = [1, 1]} : vector<8x256xf32> to vector<8x128xf32>
    %436 = arith.mulf %435, %414 : vector<8x128xf32>
    %437 = vector.extract_strided_slice %426 {offsets = [0, 0], sizes = [8, 128], strides = [1, 1]} : vector<8x256xf32> to vector<8x128xf32>
    %438 = arith.mulf %437, %428 : vector<8x128xf32>
    %439 = arith.addf %436, %438 : vector<8x128xf32>
    %440 = math.tanh %439 : vector<8x128xf32>
    %441 = arith.mulf %434, %440 : vector<8x128xf32>
    %c1_134 = arith.constant 1 : index
    %c0_135 = arith.constant 0 : index
    %442 = vector.load %arg3[%c1_134, %c0_135] : memref<2x512xf32, #tpu.memory_space<vmem>>, vector<1x128xf32>
    %c0_136 = arith.constant 0 : index
    %c0_137 = arith.constant 0 : index
    %443 = vector.load %arg4[%c0_136, %c0_137] : memref<128x128xf32, #tpu.memory_space<vmem>>, vector<128x128xf32>
    %cst_138 = arith.constant dense<0.000000e+00> : vector<8x128xf32>
    %444 = tpu.matmul %441, %443, %cst_138 {dimension_numbers = #tpu.dot_dimension_numbers<[1], [0], [0], [1], [0, 0, 1, 1], [], []>} : vector<8x128xf32>, vector<128x128xf32>, vector<8x128xf32> -> vector<8x128xf32>
    %445 = vector.broadcast %442 : vector<1x128xf32> to vector<8x128xf32>
    %446 = arith.addf %444, %445 : vector<8x128xf32>
    %c0_139 = arith.constant 0 : index
    %c0_140 = arith.constant 0 : index
    %447 = vector.load %arg5[%c0_139, %c0_140] : memref<8x128xf32, #tpu.memory_space<vmem>>, vector<8x128xf32>
    tpu.vector_store %arg5[%c0_139, %c0_140], %446 {strides = array<i32>} : memref<8x128xf32, #tpu.memory_space<vmem>>, vector<8x128xf32>,
    return
  }
}

</mosaic_0001>

<llo_original>
// kernel: tpu_custom_call.1
$region0: #{tpu_custom_call.1}
  #allocation0 [shape = 'u32[]', space=smem, size = 0x4, offset = 0x4, fixed_abs, tag = 'smem constant byte address 0x4 - core index']
  #allocation1 [shape = 'u32[72,128]{1,0:T(1,128)}', space=vmem, size = 0x9000, scoped, tag = 'internal scratch']
  #allocation2 [shape = 'f32[8,8,512]{2,1,0:T(8,128)}', space=vmem, size = 0x20000, scoped, tag = 'scratch operand']
  #allocation3 [shape = 'f32[8,8,128]{2,1,0:T(8,128)}', space=vmem, size = 0x8000, scoped, tag = 'scratch operand']
  %s0 = inlined_call_operand.hbm [shape: f32[8,8,128], index: 0, kind: input, shape index: {}]
  %s1 = inlined_call_operand.hbm [shape: f32[128,512], index: 1, kind: input, shape index: {}]
  %s2 = inlined_call_operand.hbm [shape: f32[384,512], index: 2, kind: input, shape index: {}]
  %s3 = inlined_call_operand.hbm [shape: f32[2,512], index: 3, kind: input, shape index: {}]
  %s4 = inlined_call_operand.hbm [shape: f32[128,128], index: 4, kind: input, shape index: {}]
  %s5 = inlined_call_operand.hbm [shape: f32[8,128], index: 5, kind: output, shape index: {}]
  %s6 = sld [smem:[#allocation0]]
  $region50: #{tpu_custom_call.1} parent=0
    _
  %s8 = ssub.s32 1, %s6
  %s9 = scalar_select 0, %s8, %s6
  $region1: #{tpu_custom_call.1} parent=0
    #allocation4 [shape = 'u8[32768]{0}', space=vmem, size = 0x8000, scoped, tag = 'input window, operand 0, single buffered']
    #allocation5 [shape = 's32[1]{0}', space=sflag, size = 0x4, scoped, tag = 'scoped memory for tpu_custom_call.1']
    #allocation6 [shape = 's32[1]{0}', space=sflag, size = 0x4, scoped, tag = 'scoped memory for tpu_custom_call.1']
    #allocation7 [shape = 'u8[262144]{0}', space=vmem, size = 0x40000, scoped, tag = 'input window, operand 1, single buffered']
    #allocation8 [shape = 's32[1]{0}', space=sflag, size = 0x4, scoped, tag = 'scoped memory for tpu_custom_call.1']
    #allocation9 [shape = 'u8[786432]{0}', space=vmem, size = 0xc0000, scoped, tag = 'input window, operand 2, single buffered']
    #allocation10 [shape = 'u8[4096]{0}', space=vmem, size = 0x1000, scoped, tag = 'input window, operand 3, single buffered']
    #allocation11 [shape = 's32[1]{0}', space=sflag, size = 0x4, scoped, tag = 'scoped memory for tpu_custom_call.1']
    #allocation12 [shape = 'u8[65536]{0}', space=vmem, size = 0x10000, scoped, tag = 'input window, operand 4, single buffered']
    #allocation13 [shape = 'u8[4096]{0}', space=vmem, size = 0x1000, scoped, tag = 'output window, operand 0, single buffered']
    %10 = vsyncpa [#allocation5], 0
    %11 = vsyncpa [#allocation8], 0
    %12 = vsyncpa [#allocation11], 0
    %13 = vsyncpa [#allocation6], 0
    // Predicated region
    $region2: #{tpu_custom_call.1} parent=1 // pred_check
      _
    $region3: #{tpu_custom_call.1} parent=1 // pred_check_branch
      %15 = sbr.rel (0) target = $region5
    $region4: #{tpu_custom_call.1} parent=1 // pred_region
      %17 = vsyncadd [#allocation5], 0
      %s18 = sshll.u32 %s0, 4
      %s19 = int_to_ptr.hbm [resolvable:$true] %s18
      %s20 = sshll.u32 [#allocation4], 4
      %s21 = int_to_ptr.vmem [resolvable:$true] %s20
      %26 = dma.hbm_to_vmem [thread:$0]  %s19, 1024, %s21, [#allocation5], 128, 128, 8
    $region5: #{tpu_custom_call.1} parent=1 // pred_fallthru
      _
    // Predicated region
    $region6: #{tpu_custom_call.1} parent=1 // pred_check
      _
    $region7: #{tpu_custom_call.1} parent=1 // pred_check_branch
      %28 = sbr.rel (0) target = $region9
    $region8: #{tpu_custom_call.1} parent=1 // pred_region
      %30 = vsyncadd [#allocation8], 0
      %s31 = sshll.u32 %s1, 4
      %s32 = int_to_ptr.hbm [resolvable:$true] %s31
      %s33 = sshll.u32 [#allocation7], 4
      %s34 = int_to_ptr.vmem [resolvable:$true] %s33
      %39 = dma.hbm_to_vmem [thread:$0]  %s32, 8192, %s34, [#allocation8], 512, 512, 32
    $region9: #{tpu_custom_call.1} parent=1 // pred_fallthru
      _
    // Predicated region
    $region10: #{tpu_custom_call.1} parent=1 // pred_check
      _
    $region11: #{tpu_custom_call.1} parent=1 // pred_check_branch
      %41 = sbr.rel (0) target = $region13
    $region12: #{tpu_custom_call.1} parent=1 // pred_region
      %43 = vsyncadd [#allocation8], 0
      %s44 = sshll.u32 %s2, 4
      %s45 = int_to_ptr.hbm [resolvable:$true] %s44
      %s46 = sshll.u32 [#allocation9], 4
      %s47 = int_to_ptr.vmem [resolvable:$true] %s46
      %52 = dma.hbm_to_vmem [thread:$0]  %s45, 24576, %s47, [#allocation8], 512, 512, 32
    $region13: #{tpu_custom_call.1} parent=1 // pred_fallthru
      _
    // Predicated region
    $region14: #{tpu_custom_call.1} parent=1 // pred_check
      _
    $region15: #{tpu_custom_call.1} parent=1 // pred_check_branch
      %54 = sbr.rel (0) target = $region17
    $region16: #{tpu_custom_call.1} parent=1 // pred_region
      %56 = vsyncadd [#allocation11], 0
      %s58 = sshll.u32 %s3, 4
      %s59 = int_to_ptr.hbm [resolvable:$true] %s58
      %s60 = sshll.u32 [#allocation10], 4
      %s61 = int_to_ptr.vmem [resolvable:$true] %s60
      %63 = dma.hbm_to_vmem [thread:$0]  %s59, 128, %s61, [#allocation11]
    $region17: #{tpu_custom_call.1} parent=1 // pred_fallthru
      _
    // Predicated region
    $region18: #{tpu_custom_call.1} parent=1 // pred_check
      _
    $region19: #{tpu_custom_call.1} parent=1 // pred_check_branch
      %65 = sbr.rel (0) target = $region21
    $region20: #{tpu_custom_call.1} parent=1 // pred_region
      %67 = vsyncadd [#allocation11], 0
      %s68 = sshll.u32 %s4, 4
      %s69 = int_to_ptr.hbm [resolvable:$true] %s68
      %s70 = sshll.u32 [#allocation12], 4
      %s71 = int_to_ptr.vmem [resolvable:$true] %s70
      %76 = dma.hbm_to_vmem [thread:$0]  %s69, 2048, %s71, [#allocation11], 128, 128, 8
    $region21: #{tpu_custom_call.1} parent=1 // pred_fallthru
      _
    // Predicated region
    $region22: #{tpu_custom_call.1} parent=1 // pred_check
      _
    $region23: #{tpu_custom_call.1} parent=1 // pred_check_branch
      %78 = sbr.rel (0) target = $region25
    $region24: #{tpu_custom_call.1} parent=1 // pred_region
      %80 = dma.done [#allocation5], 1024
    $region25: #{tpu_custom_call.1} parent=1 // pred_fallthru
      _
    // Predicated region
    $region26: #{tpu_custom_call.1} parent=1 // pred_check
      _
    $region27: #{tpu_custom_call.1} parent=1 // pred_check_branch
      %82 = sbr.rel (0) target = $region29
    $region28: #{tpu_custom_call.1} parent=1 // pred_region
      %84 = dma.done [#allocation8], 8192
    $region29: #{tpu_custom_call.1} parent=1 // pred_fallthru
      _
    // Predicated region
    $region30: #{tpu_custom_call.1} parent=1 // pred_check
      _
    $region31: #{tpu_custom_call.1} parent=1 // pred_check_branch
      %86 = sbr.rel (0) target = $region33
    $region32: #{tpu_custom_call.1} parent=1 // pred_region
      %88 = dma.done [#allocation8], 24576
    $region33: #{tpu_custom_call.1} parent=1 // pred_fallthru
      _
    // Predicated region
    $region34: #{tpu_custom_call.1} parent=1 // pred_check
      _
    $region35: #{tpu_custom_call.1} parent=1 // pred_check_branch
      %90 = sbr.rel (0) target = $region37
    $region36: #{tpu_custom_call.1} parent=1 // pred_region
      %92 = dma.done [#allocation11], 128
    $region37: #{tpu_custom_call.1} parent=1 // pred_fallthru
      _
    // Predicated region
    $region38: #{tpu_custom_call.1} parent=1 // pred_check
      _
    $region39: #{tpu_custom_call.1} parent=1 // pred_check_branch
      %94 = sbr.rel (0) target = $region41
    $region40: #{tpu_custom_call.1} parent=1 // pred_region
      %96 = dma.done [#allocation11], 2048
    $region41: #{tpu_custom_call.1} parent=1 // pred_fallthru
      _
    %v97 = vld [vmem:[#allocation9] sm:$0xff]
    %v98 = vld [vmem:[#allocation9 + $0x8] sm:$0xff]
    %v99 = vld [vmem:[#allocation9 + $0x10] sm:$0xff]
    %v100 = vld [vmem:[#allocation9 + $0x18] sm:$0xff]
    %v101 = vld [vmem:[#allocation9 + $0x20] sm:$0xff]
    %v102 = vld [vmem:[#allocation9 + $0x28] sm:$0xff]
    %v103 = vld [vmem:[#allocation9 + $0x30] sm:$0xff]
    %v104 = vld [vmem:[#allocation9 + $0x38] sm:$0xff]
    %v105 = vld [vmem:[#allocation9 + $0x40] sm:$0xff]
    %v106 = vld [vmem:[#allocation9 + $0x48] sm:$0xff]
    %v107 = vld [vmem:[#allocation9 + $0x50] sm:$0xff]
    %v108 = vld [vmem:[#allocation9 + $0x58] sm:$0xff]
    %v109 = vld [vmem:[#allocation9 + $0x60] sm:$0xff]
    %v110 = vld [vmem:[#allocation9 + $0x68] sm:$0xff]
    %v111 = vld [vmem:[#allocation9 + $0x70] sm:$0xff]
    %v112 = vld [vmem:[#allocation9 + $0x78] sm:$0xff]
    %v113 = vld [vmem:[#allocation9 + $0x80] sm:$0xff]
    %v114 = vld [vmem:[#allocation9 + $0x88] sm:$0xff]
    %v115 = vld [vmem:[#allocation9 + $0x90] sm:$0xff]
    %v116 = vld [vmem:[#allocation9 + $0x98] sm:$0xff]
    %v117 = vld [vmem:[#allocation9 + $0xa0] sm:$0xff]
    %v118 = vld [vmem:[#allocation9 + $0xa8] sm:$0xff]
    %v119 = vld [vmem:[#allocation9 + $0xb0] sm:$0xff]
    %v120 = vld [vmem:[#allocation9 + $0xb8] sm:$0xff]
    %v121 = vld [vmem:[#allocation9 + $0xc0] sm:$0xff]
    %v122 = vld [vmem:[#allocation9 + $0xc8] sm:$0xff]
    %v123 = vld [vmem:[#allocation9 + $0xd0] sm:$0xff]
    %v124 = vld [vmem:[#allocation9 + $0xd8] sm:$0xff]
    %v125 = vld [vmem:[#allocation9 + $0xe0] sm:$0xff]
    %v126 = vld [vmem:[#allocation9 + $0xe8] sm:$0xff]
    %v127 = vld [vmem:[#allocation9 + $0xf0] sm:$0xff]
    %v128 = vld [vmem:[#allocation9 + $0xf8] sm:$0xff]
    %v129 = vld [vmem:[#allocation9 + $0x100] sm:$0xff]
    %v130 = vld [vmem:[#allocation9 + $0x108] sm:$0xff]
    %v131 = vld [vmem:[#allocation9 + $0x110] sm:$0xff]
    %v132 = vld [vmem:[#allocation9 + $0x118] sm:$0xff]
    %v133 = vld [vmem:[#allocation9 + $0x120] sm:$0xff]
    %v134 = vld [vmem:[#allocation9 + $0x128] sm:$0xff]
    %v135 = vld [vmem:[#allocation9 + $0x130] sm:$0xff]
    %v136 = vld [vmem:[#allocation9 + $0x138] sm:$0xff]
    %v137 = vld [vmem:[#allocation9 + $0x140] sm:$0xff]
    %v138 = vld [vmem:[#allocation9 + $0x148] sm:$0xff]
    %v139 = vld [vmem:[#allocation9 + $0x150] sm:$0xff]
    %v140 = vld [vmem:[#allocation9 + $0x158] sm:$0xff]
    %v141 = vld [vmem:[#allocation9 + $0x160] sm:$0xff]
    %v142 = vld [vmem:[#allocation9 + $0x168] sm:$0xff]
    %v143 = vld [vmem:[#allocation9 + $0x170] sm:$0xff]
    %v144 = vld [vmem:[#allocation9 + $0x178] sm:$0xff]
    %v145 = vld [vmem:[#allocation9 + $0x180] sm:$0xff]
    %v146 = vld [vmem:[#allocation9 + $0x188] sm:$0xff]
    %v147 = vld [vmem:[#allocation9 + $0x190] sm:$0xff]
    %v148 = vld [vmem:[#allocation9 + $0x198] sm:$0xff]
    %v149 = vld [vmem:[#allocation9 + $0x1a0] sm:$0xff]
    %v150 = vld [vmem:[#allocation9 + $0x1a8] sm:$0xff]
    %v151 = vld [vmem:[#allocation9 + $0x1b0] sm:$0xff]
    %v152 = vld [vmem:[#allocation9 + $0x1b8] sm:$0xff]
    %v153 = vld [vmem:[#allocation9 + $0x1c0] sm:$0xff]
    %v154 = vld [vmem:[#allocation9 + $0x1c8] sm:$0xff]
    %v155 = vld [vmem:[#allocation9 + $0x1d0] sm:$0xff]
    %v156 = vld [vmem:[#allocation9 + $0x1d8] sm:$0xff]
    %v157 = vld [vmem:[#allocation9 + $0x1e0] sm:$0xff]
    %v158 = vld [vmem:[#allocation9 + $0x1e8] sm:$0xff]
    %v159 = vld [vmem:[#allocation9 + $0x1f0] sm:$0xff]
    %v160 = vld [vmem:[#allocation9 + $0x1f8] sm:$0xff]
    %v161 = vld [vmem:[#allocation9 + $0x200] sm:$0xff]
    %v162 = vld [vmem:[#allocation9 + $0x208] sm:$0xff]
    %v163 = vld [vmem:[#allocation9 + $0x210] sm:$0xff]
    %v164 = vld [vmem:[#allocation9 + $0x218] sm:$0xff]
    %v165 = vld [vmem:[#allocation9 + $0x220] sm:$0xff]
    %v166 = vld [vmem:[#allocation9 + $0x228] sm:$0xff]
    %v167 = vld [vmem:[#allocation9 + $0x230] sm:$0xff]
    %v168 = vld [vmem:[#allocation9 + $0x238] sm:$0xff]
    %v169 = vld [vmem:[#allocation9 + $0x240] sm:$0xff]
    %v170 = vld [vmem:[#allocation9 + $0x248] sm:$0xff]
    %v171 = vld [vmem:[#allocation9 + $0x250] sm:$0xff]
    %v172 = vld [vmem:[#allocation9 + $0x258] sm:$0xff]
    %v173 = vld [vmem:[#allocation9 + $0x260] sm:$0xff]
    %v174 = vld [vmem:[#allocation9 + $0x268] sm:$0xff]
    %v175 = vld [vmem:[#allocation9 + $0x270] sm:$0xff]
    %v176 = vld [vmem:[#allocation9 + $0x278] sm:$0xff]
    %v177 = vld [vmem:[#allocation9 + $0x280] sm:$0xff]
    %v178 = vld [vmem:[#allocation9 + $0x288] sm:$0xff]
    %v179 = vld [vmem:[#allocation9 + $0x290] sm:$0xff]
    %v180 = vld [vmem:[#allocation9 + $0x298] sm:$0xff]
    %v181 = vld [vmem:[#allocation9 + $0x2a0] sm:$0xff]
    %v182 = vld [vmem:[#allocation9 + $0x2a8] sm:$0xff]
    %v183 = vld [vmem:[#allocation9 + $0x2b0] sm:$0xff]
    %v184 = vld [vmem:[#allocation9 + $0x2b8] sm:$0xff]
    %v185 = vld [vmem:[#allocation9 + $0x2c0] sm:$0xff]
    %v186 = vld [vmem:[#allocation9 + $0x2c8] sm:$0xff]
    %v187 = vld [vmem:[#allocation9 + $0x2d0] sm:$0xff]
    %v188 = vld [vmem:[#allocation9 + $0x2d8] sm:$0xff]
    %v189 = vld [vmem:[#allocation9 + $0x2e0] sm:$0xff]
    %v190 = vld [vmem:[#allocation9 + $0x2e8] sm:$0xff]
    %v191 = vld [vmem:[#allocation9 + $0x2f0] sm:$0xff]
    %v192 = vld [vmem:[#allocation9 + $0x2f8] sm:$0xff]
    %v193 = vld [vmem:[#allocation9 + $0x300] sm:$0xff]
    %v194 = vld [vmem:[#allocation9 + $0x308] sm:$0xff]
    %v195 = vld [vmem:[#allocation9 + $0x310] sm:$0xff]
    %v196 = vld [vmem:[#allocation9 + $0x318] sm:$0xff]
    %v197 = vld [vmem:[#allocation9 + $0x320] sm:$0xff]
    %v198 = vld [vmem:[#allocation9 + $0x328] sm:$0xff]
    %v199 = vld [vmem:[#allocation9 + $0x330] sm:$0xff]
    %v200 = vld [vmem:[#allocation9 + $0x338] sm:$0xff]
    %v201 = vld [vmem:[#allocation9 + $0x340] sm:$0xff]
    %v202 = vld [vmem:[#allocation9 + $0x348] sm:$0xff]
    %v203 = vld [vmem:[#allocation9 + $0x350] sm:$0xff]
    %v204 = vld [vmem:[#allocation9 + $0x358] sm:$0xff]
    %v205 = vld [vmem:[#allocation9 + $0x360] sm:$0xff]
    %v206 = vld [vmem:[#allocation9 + $0x368] sm:$0xff]
    %v207 = vld [vmem:[#allocation9 + $0x370] sm:$0xff]
    %v208 = vld [vmem:[#allocation9 + $0x378] sm:$0xff]
    %v209 = vld [vmem:[#allocation9 + $0x380] sm:$0xff]
    %v210 = vld [vmem:[#allocation9 + $0x388] sm:$0xff]
    %v211 = vld [vmem:[#allocation9 + $0x390] sm:$0xff]
    %v212 = vld [vmem:[#allocation9 + $0x398] sm:$0xff]
    %v213 = vld [vmem:[#allocation9 + $0x3a0] sm:$0xff]
    %v214 = vld [vmem:[#allocation9 + $0x3a8] sm:$0xff]
    %v215 = vld [vmem:[#allocation9 + $0x3b0] sm:$0xff]
    %v216 = vld [vmem:[#allocation9 + $0x3b8] sm:$0xff]
    %v217 = vld [vmem:[#allocation9 + $0x3c0] sm:$0xff]
    %v218 = vld [vmem:[#allocation9 + $0x3c8] sm:$0xff]
    %v219 = vld [vmem:[#allocation9 + $0x3d0] sm:$0xff]
    %v220 = vld [vmem:[#allocation9 + $0x3d8] sm:$0xff]
    %v221 = vld [vmem:[#allocation9 + $0x3e0] sm:$0xff]
    %v222 = vld [vmem:[#allocation9 + $0x3e8] sm:$0xff]
    %v223 = vld [vmem:[#allocation9 + $0x3f0] sm:$0xff]
    %v224 = vld [vmem:[#allocation9 + $0x3f8] sm:$0xff]
    %v225 = vld [vmem:[#allocation9 + $0x400] sm:$0xff]
    %v226 = vld [vmem:[#allocation9 + $0x408] sm:$0xff]
    %v227 = vld [vmem:[#allocation9 + $0x410] sm:$0xff]
    %v228 = vld [vmem:[#allocation9 + $0x418] sm:$0xff]
    %v229 = vld [vmem:[#allocation9 + $0x420] sm:$0xff]
    %v230 = vld [vmem:[#allocation9 + $0x428] sm:$0xff]
    %v231 = vld [vmem:[#allocation9 + $0x430] sm:$0xff]
    %v232 = vld [vmem:[#allocation9 + $0x438] sm:$0xff]
    %v233 = vld [vmem:[#allocation9 + $0x440] sm:$0xff]
    %v234 = vld [vmem:[#allocation9 + $0x448] sm:$0xff]
    %v235 = vld [vmem:[#allocation9 + $0x450] sm:$0xff]
    %v236 = vld [vmem:[#allocation9 + $0x458] sm:$0xff]
    %v237 = vld [vmem:[#allocation9 + $0x460] sm:$0xff]
    %v238 = vld [vmem:[#allocation9 + $0x468] sm:$0xff]
    %v239 = vld [vmem:[#allocation9 + $0x470] sm:$0xff]
    %v240 = vld [vmem:[#allocation9 + $0x478] sm:$0xff]
    %v241 = vld [vmem:[#allocation9 + $0x480] sm:$0xff]
    %v242 = vld [vmem:[#allocation9 + $0x488] sm:$0xff]
    %v243 = vld [vmem:[#allocation9 + $0x490] sm:$0xff]
    %v244 = vld [vmem:[#allocation9 + $0x498] sm:$0xff]
    %v245 = vld [vmem:[#allocation9 + $0x4a0] sm:$0xff]
    %v246 = vld [vmem:[#allocation9 + $0x4a8] sm:$0xff]
    %v247 = vld [vmem:[#allocation9 + $0x4b0] sm:$0xff]
    %v248 = vld [vmem:[#allocation9 + $0x4b8] sm:$0xff]
    %v249 = vld [vmem:[#allocation9 + $0x4c0] sm:$0xff]
    %v250 = vld [vmem:[#allocation9 + $0x4c8] sm:$0xff]
    %v251 = vld [vmem:[#allocation9 + $0x4d0] sm:$0xff]
    %v252 = vld [vmem:[#allocation9 + $0x4d8] sm:$0xff]
    %v253 = vld [vmem:[#allocation9 + $0x4e0] sm:$0xff]
    %v254 = vld [vmem:[#allocation9 + $0x4e8] sm:$0xff]
    %v255 = vld [vmem:[#allocation9 + $0x4f0] sm:$0xff]
    %v256 = vld [vmem:[#allocation9 + $0x4f8] sm:$0xff]
    %v257 = vld [vmem:[#allocation9 + $0x500] sm:$0xff]
    %v258 = vld [vmem:[#allocation9 + $0x508] sm:$0xff]
    %v259 = vld [vmem:[#allocation9 + $0x510] sm:$0xff]
    %v260 = vld [vmem:[#allocation9 + $0x518] sm:$0xff]
    %v261 = vld [vmem:[#allocation9 + $0x520] sm:$0xff]
    %v262 = vld [vmem:[#allocation9 + $0x528] sm:$0xff]
    %v263 = vld [vmem:[#allocation9 + $0x530] sm:$0xff]
    %v264 = vld [vmem:[#allocation9 + $0x538] sm:$0xff]
    %v265 = vld [vmem:[#allocation9 + $0x540] sm:$0xff]
    %v266 = vld [vmem:[#allocation9 + $0x548] sm:$0xff]
    %v267 = vld [vmem:[#allocation9 + $0x550] sm:$0xff]
    %v268 = vld [vmem:[#allocation9 + $0x558] sm:$0xff]
    %v269 = vld [vmem:[#allocation9 + $0x560] sm:$0xff]
    %v270 = vld [vmem:[#allocation9 + $0x568] sm:$0xff]
    %v271 = vld [vmem:[#allocation9 + $0x570] sm:$0xff]
    %v272 = vld [vmem:[#allocation9 + $0x578] sm:$0xff]
    %v273 = vld [vmem:[#allocation9 + $0x580] sm:$0xff]
    %v274 = vld [vmem:[#allocation9 + $0x588] sm:$0xff]
    %v275 = vld [vmem:[#allocation9 + $0x590] sm:$0xff]
    %v276 = vld [vmem:[#allocation9 + $0x598] sm:$0xff]
    %v277 = vld [vmem:[#allocation9 + $0x5a0] sm:$0xff]
    %v278 = vld [vmem:[#allocation9 + $0x5a8] sm:$0xff]
    %v279 = vld [vmem:[#allocation9 + $0x5b0] sm:$0xff]
    %v280 = vld [vmem:[#allocation9 + $0x5b8] sm:$0xff]
    %v281 = vld [vmem:[#allocation9 + $0x5c0] sm:$0xff]
    %v282 = vld [vmem:[#allocation9 + $0x5c8] sm:$0xff]
    %v283 = vld [vmem:[#allocation9 + $0x5d0] sm:$0xff]
    %v284 = vld [vmem:[#allocation9 + $0x5d8] sm:$0xff]
    %v285 = vld [vmem:[#allocation9 + $0x5e0] sm:$0xff]
    %v286 = vld [vmem:[#allocation9 + $0x5e8] sm:$0xff]
    %v287 = vld [vmem:[#allocation9 + $0x5f0] sm:$0xff]
    %v288 = vld [vmem:[#allocation9 + $0x5f8] sm:$0xff]
    %v289 = vld [vmem:[#allocation10] ss:$2 sm:$0xf]
    %v290 = vld [vmem:[#allocation4] sm:$0xff]
    %v291 = vld [vmem:[#allocation4 + $0x8] sm:$0xff]
    %v292 = vld [vmem:[#allocation4 + $0x10] sm:$0xff]
    %v293 = vld [vmem:[#allocation4 + $0x18] sm:$0xff]
    %v294 = vld [vmem:[#allocation4 + $0x20] sm:$0xff]
    %v295 = vld [vmem:[#allocation4 + $0x28] sm:$0xff]
    %v296 = vld [vmem:[#allocation4 + $0x30] sm:$0xff]
    %v297 = vld [vmem:[#allocation4 + $0x38] sm:$0xff]
    %v298 = vld [vmem:[#allocation7] sm:$0xff]
    %v299 = vld [vmem:[#allocation7 + $0x8] sm:$0xff]
    %v300 = vld [vmem:[#allocation7 + $0x10] sm:$0xff]
    %v301 = vld [vmem:[#allocation7 + $0x18] sm:$0xff]
    %v302 = vld [vmem:[#allocation7 + $0x20] sm:$0xff]
    %v303 = vld [vmem:[#allocation7 + $0x28] sm:$0xff]
    %v304 = vld [vmem:[#allocation7 + $0x30] sm:$0xff]
    %v305 = vld [vmem:[#allocation7 + $0x38] sm:$0xff]
    %v306 = vld [vmem:[#allocation7 + $0x40] sm:$0xff]
    %v307 = vld [vmem:[#allocation7 + $0x48] sm:$0xff]
    %v308 = vld [vmem:[#allocation7 + $0x50] sm:$0xff]
    %v309 = vld [vmem:[#allocation7 + $0x58] sm:$0xff]
    %v310 = vld [vmem:[#allocation7 + $0x60] sm:$0xff]
    %v311 = vld [vmem:[#allocation7 + $0x68] sm:$0xff]
    %v312 = vld [vmem:[#allocation7 + $0x70] sm:$0xff]
    %v313 = vld [vmem:[#allocation7 + $0x78] sm:$0xff]
    %v314 = vld [vmem:[#allocation7 + $0x80] sm:$0xff]
    %v315 = vld [vmem:[#allocation7 + $0x88] sm:$0xff]
    %v316 = vld [vmem:[#allocation7 + $0x90] sm:$0xff]
    %v317 = vld [vmem:[#allocation7 + $0x98] sm:$0xff]
    %v318 = vld [vmem:[#allocation7 + $0xa0] sm:$0xff]
    %v319 = vld [vmem:[#allocation7 + $0xa8] sm:$0xff]
    %v320 = vld [vmem:[#allocation7 + $0xb0] sm:$0xff]
    %v321 = vld [vmem:[#allocation7 + $0xb8] sm:$0xff]
    %v322 = vld [vmem:[#allocation7 + $0xc0] sm:$0xff]
    %v323 = vld [vmem:[#allocation7 + $0xc8] sm:$0xff]
    %v324 = vld [vmem:[#allocation7 + $0xd0] sm:$0xff]
    %v325 = vld [vmem:[#allocation7 + $0xd8] sm:$0xff]
    %v326 = vld [vmem:[#allocation7 + $0xe0] sm:$0xff]
    %v327 = vld [vmem:[#allocation7 + $0xe8] sm:$0xff]
    %v328 = vld [vmem:[#allocation7 + $0xf0] sm:$0xff]
    %v329 = vld [vmem:[#allocation7 + $0xf8] sm:$0xff]
    %v330 = vld [vmem:[#allocation7 + $0x100] sm:$0xff]
    %v331 = vld [vmem:[#allocation7 + $0x108] sm:$0xff]
    %v332 = vld [vmem:[#allocation7 + $0x110] sm:$0xff]
    %v333 = vld [vmem:[#allocation7 + $0x118] sm:$0xff]
    %v334 = vld [vmem:[#allocation7 + $0x120] sm:$0xff]
    %v335 = vld [vmem:[#allocation7 + $0x128] sm:$0xff]
    %v336 = vld [vmem:[#allocation7 + $0x130] sm:$0xff]
    %v337 = vld [vmem:[#allocation7 + $0x138] sm:$0xff]
    %v338 = vld [vmem:[#allocation7 + $0x140] sm:$0xff]
    %v339 = vld [vmem:[#allocation7 + $0x148] sm:$0xff]
    %v340 = vld [vmem:[#allocation7 + $0x150] sm:$0xff]
    %v341 = vld [vmem:[#allocation7 + $0x158] sm:$0xff]
    %v342 = vld [vmem:[#allocation7 + $0x160] sm:$0xff]
    %v343 = vld [vmem:[#allocation7 + $0x168] sm:$0xff]
    %v344 = vld [vmem:[#allocation7 + $0x170] sm:$0xff]
    %v345 = vld [vmem:[#allocation7 + $0x178] sm:$0xff]
    %v346 = vld [vmem:[#allocation7 + $0x180] sm:$0xff]
    %v347 = vld [vmem:[#allocation7 + $0x188] sm:$0xff]
    %v348 = vld [vmem:[#allocation7 + $0x190] sm:$0xff]
    %v349 = vld [vmem:[#allocation7 + $0x198] sm:$0xff]
    %v350 = vld [vmem:[#allocation7 + $0x1a0] sm:$0xff]
    %v351 = vld [vmem:[#allocation7 + $0x1a8] sm:$0xff]
    %v352 = vld [vmem:[#allocation7 + $0x1b0] sm:$0xff]
    %v353 = vld [vmem:[#allocation7 + $0x1b8] sm:$0xff]
    %v354 = vld [vmem:[#allocation7 + $0x1c0] sm:$0xff]
    %v355 = vld [vmem:[#allocation7 + $0x1c8] sm:$0xff]
    %v356 = vld [vmem:[#allocation7 + $0x1d0] sm:$0xff]
    %v357 = vld [vmem:[#allocation7 + $0x1d8] sm:$0xff]
    %v358 = vld [vmem:[#allocation7 + $0x1e0] sm:$0xff]
    %v359 = vld [vmem:[#allocation7 + $0x1e8] sm:$0xff]
    %v360 = vld [vmem:[#allocation7 + $0x1f0] sm:$0xff]
    %v361 = vld [vmem:[#allocation7 + $0x1f8] sm:$0xff]
    %362 = vmatpush.msra.mxu0 %v358
    %363 = vmatpush.msra.mxu0 %v354
    %364 = vmatpush.msra.mxu0 %v350
    %365 = vmatpush.msra.mxu0 %v346
    %366 = vmatpush.msra.mxu0 %v342
    %367 = vmatpush.msra.mxu0 %v338
    %368 = vmatpush.msra.mxu0 %v334
    %369 = vmatpush.msra.mxu0 %v330
    %370 = vmatpush.msra.mxu0 %v326
    %371 = vmatpush.msra.mxu0 %v322
    %372 = vmatpush.msra.mxu0 %v318
    %373 = vmatpush.msra.mxu0 %v314
    %374 = vmatpush.msra.mxu0 %v310
    %375 = vmatpush.msra.mxu0 %v306
    %376 = vmatpush.msra.mxu0 %v302
    %377 = vmatpush.msra.mxu0 %v298
    %378 = vmatmul.f32.gmra.mxu0 %v290
    %v379 = vpop.f32.mrf.mxu0
    %v380 = vadd.f32 0.0, %v379
    %381 = vmatmul.f32.gmra.mxu0 %v291
    %v382 = vpop.f32.mrf.mxu0
    %v383 = vadd.f32 0.0, %v382
    %384 = vmatmul.f32.gmra.mxu0 %v292
    %v385 = vpop.f32.mrf.mxu0
    %v386 = vadd.f32 0.0, %v385
    %387 = vmatmul.f32.gmra.mxu0 %v293
    %v388 = vpop.f32.mrf.mxu0
    %v389 = vadd.f32 0.0, %v388
    %390 = vmatmul.f32.gmra.mxu0 %v294
    %v391 = vpop.f32.mrf.mxu0
    %v392 = vadd.f32 0.0, %v391
    %393 = vmatmul.f32.gmra.mxu0 %v295
    %v394 = vpop.f32.mrf.mxu0
    %v395 = vadd.f32 0.0, %v394
    %396 = vmatmul.f32.gmra.mxu0 %v296
    %v397 = vpop.f32.mrf.mxu0
    %v398 = vadd.f32 0.0, %v397
    %399 = vmatmul.f32.gmra.mxu0 %v297
    %v400 = vpop.f32.mrf.mxu0
    %v401 = vadd.f32 0.0, %v400
    %402 = vdwg.mxu0
    %403 = vmatpush.msra.mxu0 %v359
    %404 = vmatpush.msra.mxu0 %v355
    %405 = vmatpush.msra.mxu0 %v351
    %406 = vmatpush.msra.mxu0 %v347
    %407 = vmatpush.msra.mxu0 %v343
    %408 = vmatpush.msra.mxu0 %v339
    %409 = vmatpush.msra.mxu0 %v335
    %410 = vmatpush.msra.mxu0 %v331
    %411 = vmatpush.msra.mxu0 %v327
    %412 = vmatpush.msra.mxu0 %v323
    %413 = vmatpush.msra.mxu0 %v319
    %414 = vmatpush.msra.mxu0 %v315
    %415 = vmatpush.msra.mxu0 %v311
    %416 = vmatpush.msra.mxu0 %v307
    %417 = vmatpush.msra.mxu0 %v303
    %418 = vmatpush.msra.mxu0 %v299
    %419 = vmatmul.f32.gmra.mxu0 %v290
    %v420 = vpop.f32.mrf.mxu0
    %v421 = vadd.f32 0.0, %v420
    %422 = vmatmul.f32.gmra.mxu0 %v291
    %v423 = vpop.f32.mrf.mxu0
    %v424 = vadd.f32 0.0, %v423
    %425 = vmatmul.f32.gmra.mxu0 %v292
    %v426 = vpop.f32.mrf.mxu0
    %v427 = vadd.f32 0.0, %v426
    %428 = vmatmul.f32.gmra.mxu0 %v293
    %v429 = vpop.f32.mrf.mxu0
    %v430 = vadd.f32 0.0, %v429
    %431 = vmatmul.f32.gmra.mxu0 %v294
    %v432 = vpop.f32.mrf.mxu0
    %v433 = vadd.f32 0.0, %v432
    %434 = vmatmul.f32.gmra.mxu0 %v295
    %v435 = vpop.f32.mrf.mxu0
    %v436 = vadd.f32 0.0, %v435
    %437 = vmatmul.f32.gmra.mxu0 %v296
    %v438 = vpop.f32.mrf.mxu0
    %v439 = vadd.f32 0.0, %v438
    %440 = vmatmul.f32.gmra.mxu0 %v297
    %v441 = vpop.f32.mrf.mxu0
    %v442 = vadd.f32 0.0, %v441
    %443 = vdwg.mxu0
    %444 = vmatpush.msra.mxu0 %v360
    %445 = vmatpush.msra.mxu0 %v356
    %446 = vmatpush.msra.mxu0 %v352
    %447 = vmatpush.msra.mxu0 %v348
    %448 = vmatpush.msra.mxu0 %v344
    %449 = vmatpush.msra.mxu0 %v340
    %450 = vmatpush.msra.mxu0 %v336
    %451 = vmatpush.msra.mxu0 %v332
    %452 = vmatpush.msra.mxu0 %v328
    %453 = vmatpush.msra.mxu0 %v324
    %454 = vmatpush.msra.mxu0 %v320
    %455 = vmatpush.msra.mxu0 %v316
    %456 = vmatpush.msra.mxu0 %v312
    %457 = vmatpush.msra.mxu0 %v308
    %458 = vmatpush.msra.mxu0 %v304
    %459 = vmatpush.msra.mxu0 %v300
    %460 = vmatmul.f32.gmra.mxu0 %v290
    %v461 = vpop.f32.mrf.mxu0
    %v462 = vadd.f32 0.0, %v461
    %463 = vmatmul.f32.gmra.mxu0 %v291
    %v464 = vpop.f32.mrf.mxu0
    %v465 = vadd.f32 0.0, %v464
    %466 = vmatmul.f32.gmra.mxu0 %v292
    %v467 = vpop.f32.mrf.mxu0
    %v468 = vadd.f32 0.0, %v467
    %469 = vmatmul.f32.gmra.mxu0 %v293
    %v470 = vpop.f32.mrf.mxu0
    %v471 = vadd.f32 0.0, %v470
    %472 = vmatmul.f32.gmra.mxu0 %v294
    %v473 = vpop.f32.mrf.mxu0
    %v474 = vadd.f32 0.0, %v473
    %475 = vmatmul.f32.gmra.mxu0 %v295
    %v476 = vpop.f32.mrf.mxu0
    %v477 = vadd.f32 0.0, %v476
    %478 = vmatmul.f32.gmra.mxu0 %v296
    %v479 = vpop.f32.mrf.mxu0
    %v480 = vadd.f32 0.0, %v479
    %481 = vmatmul.f32.gmra.mxu0 %v297
    %v482 = vpop.f32.mrf.mxu0
    %v483 = vadd.f32 0.0, %v482
    %484 = vdwg.mxu0
    %485 = vmatpush.msra.mxu0 %v361
    %486 = vmatpush.msra.mxu0 %v357
    %487 = vmatpush.msra.mxu0 %v353
    %488 = vmatpush.msra.mxu0 %v349
    %489 = vmatpush.msra.mxu0 %v345
    %490 = vmatpush.msra.mxu0 %v341
    %491 = vmatpush.msra.mxu0 %v337
    %492 = vmatpush.msra.mxu0 %v333
    %493 = vmatpush.msra.mxu0 %v329
    %494 = vmatpush.msra.mxu0 %v325
    %495 = vmatpush.msra.mxu0 %v321
    %496 = vmatpush.msra.mxu0 %v317
    %497 = vmatpush.msra.mxu0 %v313
    %498 = vmatpush.msra.mxu0 %v309
    %499 = vmatpush.msra.mxu0 %v305
    %500 = vmatpush.msra.mxu0 %v301
    %501 = vmatmul.f32.gmra.mxu0 %v290
    %v502 = vpop.f32.mrf.mxu0
    %v503 = vadd.f32 0.0, %v502
    %504 = vmatmul.f32.gmra.mxu0 %v291
    %v505 = vpop.f32.mrf.mxu0
    %v506 = vadd.f32 0.0, %v505
    %507 = vmatmul.f32.gmra.mxu0 %v292
    %v508 = vpop.f32.mrf.mxu0
    %v509 = vadd.f32 0.0, %v508
    %510 = vmatmul.f32.gmra.mxu0 %v293
    %v511 = vpop.f32.mrf.mxu0
    %v512 = vadd.f32 0.0, %v511
    %513 = vmatmul.f32.gmra.mxu0 %v294
    %v514 = vpop.f32.mrf.mxu0
    %v515 = vadd.f32 0.0, %v514
    %516 = vmatmul.f32.gmra.mxu0 %v295
    %v517 = vpop.f32.mrf.mxu0
    %v518 = vadd.f32 0.0, %v517
    %519 = vmatmul.f32.gmra.mxu0 %v296
    %v520 = vpop.f32.mrf.mxu0
    %v521 = vadd.f32 0.0, %v520
    %522 = vmatmul.f32.gmra.mxu0 %v297
    %v523 = vpop.f32.mrf.mxu0
    %v524 = vadd.f32 0.0, %v523
    %525 = vdwg.mxu0
    %526 = vst [vmem:[#allocation2] sm:$0xff] %v380
    %527 = vst [vmem:[#allocation2 + $0x8] sm:$0xff] %v421
    %528 = vst [vmem:[#allocation2 + $0x10] sm:$0xff] %v462
    %529 = vst [vmem:[#allocation2 + $0x18] sm:$0xff] %v503
    %530 = vst [vmem:[#allocation2 + $0x20] sm:$0xff] %v383
    %531 = vst [vmem:[#allocation2 + $0x28] sm:$0xff] %v424
    %532 = vst [vmem:[#allocation2 + $0x30] sm:$0xff] %v465
    %533 = vst [vmem:[#allocation2 + $0x38] sm:$0xff] %v506
    %534 = vst [vmem:[#allocation2 + $0x40] sm:$0xff] %v386
    %535 = vst [vmem:[#allocation2 + $0x48] sm:$0xff] %v427
    %536 = vst [vmem:[#allocation2 + $0x50] sm:$0xff] %v468
    %537 = vst [vmem:[#allocation2 + $0x58] sm:$0xff] %v509
    %538 = vst [vmem:[#allocation2 + $0x60] sm:$0xff] %v389
    %539 = vst [vmem:[#allocation2 + $0x68] sm:$0xff] %v430
    %540 = vst [vmem:[#allocation2 + $0x70] sm:$0xff] %v471
    %541 = vst [vmem:[#allocation2 + $0x78] sm:$0xff] %v512
    %542 = vst [vmem:[#allocation2 + $0x80] sm:$0xff] %v392
    %543 = vst [vmem:[#allocation2 + $0x88] sm:$0xff] %v433
    %544 = vst [vmem:[#allocation2 + $0x90] sm:$0xff] %v474
    %545 = vst [vmem:[#allocation2 + $0x98] sm:$0xff] %v515
    %546 = vst [vmem:[#allocation2 + $0xa0] sm:$0xff] %v395
    %547 = vst [vmem:[#allocation2 + $0xa8] sm:$0xff] %v436
    %548 = vst [vmem:[#allocation2 + $0xb0] sm:$0xff] %v477
    %549 = vst [vmem:[#allocation2 + $0xb8] sm:$0xff] %v518
    %550 = vst [vmem:[#allocation2 + $0xc0] sm:$0xff] %v398
    %551 = vst [vmem:[#allocation2 + $0xc8] sm:$0xff] %v439
    %552 = vst [vmem:[#allocation2 + $0xd0] sm:$0xff] %v480
    %553 = vst [vmem:[#allocation2 + $0xd8] sm:$0xff] %v521
    %554 = vst [vmem:[#allocation2 + $0xe0] sm:$0xff] %v401
    %555 = vst [vmem:[#allocation2 + $0xe8] sm:$0xff] %v442
    %556 = vst [vmem:[#allocation2 + $0xf0] sm:$0xff] %v483
    %557 = vst [vmem:[#allocation2 + $0xf8] sm:$0xff] %v524
    %v558 = vld [vmem:[#allocation2] sm:$0xff]
    %v559 = vld [vmem:[#allocation2 + $0x8] sm:$0xff]
    %v560 = vld [vmem:[#allocation2 + $0x10] sm:$0xff]
    %v561 = vld [vmem:[#allocation2 + $0x18] sm:$0xff]
    %562 = vmatpush.msra.mxu0 %v157
    %563 = vmatpush.msra.mxu0 %v153
    %564 = vmatpush.msra.mxu0 %v149
    %565 = vmatpush.msra.mxu0 %v145
    %566 = vmatpush.msra.mxu0 %v141
    %567 = vmatpush.msra.mxu0 %v137
    %568 = vmatpush.msra.mxu0 %v133
    %569 = vmatpush.msra.mxu0 %v129
    %570 = vmatpush.msra.mxu0 %v125
    %571 = vmatpush.msra.mxu0 %v121
    %572 = vmatpush.msra.mxu0 %v117
    %573 = vmatpush.msra.mxu0 %v113
    %574 = vmatpush.msra.mxu0 %v109
    %575 = vmatpush.msra.mxu0 %v105
    %576 = vmatpush.msra.mxu0 %v101
    %577 = vmatpush.msra.mxu0 %v97
    %578 = vmatmul.f32.gmra.mxu0 0.0
    %v579 = vpop.f32.mrf.mxu0
    %v580 = vadd.f32 0.0, %v579
    %581 = vdwg.mxu0
    %582 = vmatpush.msra.mxu0 %v158
    %583 = vmatpush.msra.mxu0 %v154
    %584 = vmatpush.msra.mxu0 %v150
    %585 = vmatpush.msra.mxu0 %v146
    %586 = vmatpush.msra.mxu0 %v142
    %587 = vmatpush.msra.mxu0 %v138
    %588 = vmatpush.msra.mxu0 %v134
    %589 = vmatpush.msra.mxu0 %v130
    %590 = vmatpush.msra.mxu0 %v126
    %591 = vmatpush.msra.mxu0 %v122
    %592 = vmatpush.msra.mxu0 %v118
    %593 = vmatpush.msra.mxu0 %v114
    %594 = vmatpush.msra.mxu0 %v110
    %595 = vmatpush.msra.mxu0 %v106
    %596 = vmatpush.msra.mxu0 %v102
    %597 = vmatpush.msra.mxu0 %v98
    %598 = vmatmul.f32.gmra.mxu0 0.0
    %v599 = vpop.f32.mrf.mxu0
    %v600 = vadd.f32 0.0, %v599
    %601 = vdwg.mxu0
    %602 = vmatpush.msra.mxu0 %v159
    %603 = vmatpush.msra.mxu0 %v155
    %604 = vmatpush.msra.mxu0 %v151
    %605 = vmatpush.msra.mxu0 %v147
    %606 = vmatpush.msra.mxu0 %v143
    %607 = vmatpush.msra.mxu0 %v139
    %608 = vmatpush.msra.mxu0 %v135
    %609 = vmatpush.msra.mxu0 %v131
    %610 = vmatpush.msra.mxu0 %v127
    %611 = vmatpush.msra.mxu0 %v123
    %612 = vmatpush.msra.mxu0 %v119
    %613 = vmatpush.msra.mxu0 %v115
    %614 = vmatpush.msra.mxu0 %v111
    %615 = vmatpush.msra.mxu0 %v107
    %616 = vmatpush.msra.mxu0 %v103
    %617 = vmatpush.msra.mxu0 %v99
    %618 = vmatmul.f32.gmra.mxu0 0.0
    %v619 = vpop.f32.mrf.mxu0
    %v620 = vadd.f32 0.0, %v619
    %621 = vdwg.mxu0
    %622 = vmatpush.msra.mxu0 %v160
    %623 = vmatpush.msra.mxu0 %v156
    %624 = vmatpush.msra.mxu0 %v152
    %625 = vmatpush.msra.mxu0 %v148
    %626 = vmatpush.msra.mxu0 %v144
    %627 = vmatpush.msra.mxu0 %v140
    %628 = vmatpush.msra.mxu0 %v136
    %629 = vmatpush.msra.mxu0 %v132
    %630 = vmatpush.msra.mxu0 %v128
    %631 = vmatpush.msra.mxu0 %v124
    %632 = vmatpush.msra.mxu0 %v120
    %633 = vmatpush.msra.mxu0 %v116
    %634 = vmatpush.msra.mxu0 %v112
    %635 = vmatpush.msra.mxu0 %v108
    %636 = vmatpush.msra.mxu0 %v104
    %637 = vmatpush.msra.mxu0 %v100
    %638 = vmatmul.f32.gmra.mxu0 0.0
    %v639 = vpop.f32.mrf.mxu0
    %v640 = vadd.f32 0.0, %v639
    %641 = vdwg.mxu0
    %v642 = vadd.f32 %v558, %v580
    %v643 = vadd.f32 %v559, %v600
    %v644 = vadd.f32 %v560, %v620
    %v645 = vadd.f32 %v561, %v640
    %v646 = vxor.u32 %v642, 2147483648
    %v647 = vxor.u32 %v643, 2147483648
    %v648 = vmul.f32 %v646, 1.442695
    %v649 = vpow.pop %v648
    %v650 = vmul.f32 %v647, 1.442695
    %v651 = vpow.pop %v650
    %v652 = vadd.f32 %v649, 1.0
    %v653 = vadd.f32 %v651, 1.0
    %v654 = vrcp.pop %v652
    %v655 = vmul.f32 %v652, %v654
    %v656 = vsub.f32 1.0, %v655
    %v657 = vmul.f32 %v654, %v656
    %v658 = vadd.f32 %v654, %v657
    %vm659 = vweird.f32 %v652
    %vm660 = vweird.f32 %v654
    %vm661 = vmor %vm659, %vm660
    %v662 = vsel %vm661, %v654, %v658
    %v663 = vand.u32 2147483647, %v652
    %vm664 = vcmp.eq.f32.partialorder %v663, 8.507059e+37
    %v665 = vand.u32 %v652, 2147483648
    %v666 = vor.u32 1.1754944e-38, %v665
    %v667 = vsel %vm664, %v666, %v662
    %v668 = vmul.f32 1.0, %v667
    %v669 = vrcp.pop %v653
    %v670 = vmul.f32 %v653, %v669
    %v671 = vsub.f32 1.0, %v670
    %v672 = vmul.f32 %v669, %v671
    %v673 = vadd.f32 %v669, %v672
    %vm674 = vweird.f32 %v653
    %vm675 = vweird.f32 %v669
    %vm676 = vmor %vm674, %vm675
    %v677 = vsel %vm676, %v669, %v673
    %v678 = vand.u32 2147483647, %v653
    %vm679 = vcmp.eq.f32.partialorder %v678, 8.507059e+37
    %v680 = vand.u32 %v653, 2147483648
    %v681 = vor.u32 1.1754944e-38, %v680
    %v682 = vsel %vm679, %v681, %v677
    %v683 = vmul.f32 1.0, %v682
    %v684 = vtanh.pop %v644
    %v685 = vxor.u32 %v645, 2147483648
    %v686 = vmul.f32 %v685, 1.442695
    %v687 = vpow.pop %v686
    %v688 = vadd.f32 %v687, 1.0
    %v689 = vrcp.pop %v688
    %v690 = vmul.f32 %v688, %v689
    %v691 = vsub.f32 1.0, %v690
    %v692 = vmul.f32 %v689, %v691
    %v693 = vadd.f32 %v689, %v692
    %vm694 = vweird.f32 %v688
    %vm695 = vweird.f32 %v689
    %vm696 = vmor %vm694, %vm695
    %v697 = vsel %vm696, %v689, %v693
    %v698 = vand.u32 2147483647, %v688
    %vm699 = vcmp.eq.f32.partialorder %v698, 8.507059e+37
    %v700 = vand.u32 %v688, 2147483648
    %v701 = vor.u32 1.1754944e-38, %v700
    %v702 = vsel %vm699, %v701, %v697
    %v703 = vmul.f32 1.0, %v702
    %v704 = vmul.f32 %v683, 0.0
    %v705 = vmul.f32 %v668, %v684
    %v706 = vadd.f32 %v704, %v705
    %v707 = vtanh.pop %v706
    %v708 = vmul.f32 %v703, %v707
    %709 = vst [vmem:[#allocation3] sm:$0xff] %v708
    %s710 = scalar_lea.vmem [#allocation2], 32
    %v711 = vld [vmem:[%s710] sm:$0xff]
    %v712 = vld [vmem:[%s710 + $0x8] sm:$0xff]
    %v713 = vld [vmem:[%s710 + $0x10] sm:$0xff]
    %v714 = vld [vmem:[%s710 + $0x18] sm:$0xff]
    %715 = vmatpush.msra.mxu0 %v157
    %716 = vmatpush.msra.mxu0 %v153
    %717 = vmatpush.msra.mxu0 %v149
    %718 = vmatpush.msra.mxu0 %v145
    %719 = vmatpush.msra.mxu0 %v141
    %720 = vmatpush.msra.mxu0 %v137
    %721 = vmatpush.msra.mxu0 %v133
    %722 = vmatpush.msra.mxu0 %v129
    %723 = vmatpush.msra.mxu0 %v125
    %724 = vmatpush.msra.mxu0 %v121
    %725 = vmatpush.msra.mxu0 %v117
    %726 = vmatpush.msra.mxu0 %v113
    %727 = vmatpush.msra.mxu0 %v109
    %728 = vmatpush.msra.mxu0 %v105
    %729 = vmatpush.msra.mxu0 %v101
    %730 = vmatpush.msra.mxu0 %v97
    %731 = vmatmul.f32.gmra.mxu0 %v708
    %v732 = vpop.f32.mrf.mxu0
    %v733 = vadd.f32 0.0, %v732
    %734 = vdwg.mxu0
    %735 = vmatpush.msra.mxu0 %v158
    %736 = vmatpush.msra.mxu0 %v154
    %737 = vmatpush.msra.mxu0 %v150
    %738 = vmatpush.msra.mxu0 %v146
    %739 = vmatpush.msra.mxu0 %v142
    %740 = vmatpush.msra.mxu0 %v138
    %741 = vmatpush.msra.mxu0 %v134
    %742 = vmatpush.msra.mxu0 %v130
    %743 = vmatpush.msra.mxu0 %v126
    %744 = vmatpush.msra.mxu0 %v122
    %745 = vmatpush.msra.mxu0 %v118
    %746 = vmatpush.msra.mxu0 %v114
    %747 = vmatpush.msra.mxu0 %v110
    %748 = vmatpush.msra.mxu0 %v106
    %749 = vmatpush.msra.mxu0 %v102
    %750 = vmatpush.msra.mxu0 %v98
    %751 = vmatmul.f32.gmra.mxu0 %v708
    %v752 = vpop.f32.mrf.mxu0
    %v753 = vadd.f32 0.0, %v752
    %754 = vdwg.mxu0
    %755 = vmatpush.msra.mxu0 %v159
    %756 = vmatpush.msra.mxu0 %v155
    %757 = vmatpush.msra.mxu0 %v151
    %758 = vmatpush.msra.mxu0 %v147
    %759 = vmatpush.msra.mxu0 %v143
    %760 = vmatpush.msra.mxu0 %v139
    %761 = vmatpush.msra.mxu0 %v135
    %762 = vmatpush.msra.mxu0 %v131
    %763 = vmatpush.msra.mxu0 %v127
    %764 = vmatpush.msra.mxu0 %v123
    %765 = vmatpush.msra.mxu0 %v119
    %766 = vmatpush.msra.mxu0 %v115
    %767 = vmatpush.msra.mxu0 %v111
    %768 = vmatpush.msra.mxu0 %v107
    %769 = vmatpush.msra.mxu0 %v103
    %770 = vmatpush.msra.mxu0 %v99
    %771 = vmatmul.f32.gmra.mxu0 %v708
    %v772 = vpop.f32.mrf.mxu0
    %v773 = vadd.f32 0.0, %v772
    %774 = vdwg.mxu0
    %775 = vmatpush.msra.mxu0 %v160
    %776 = vmatpush.msra.mxu0 %v156
    %777 = vmatpush.msra.mxu0 %v152
    %778 = vmatpush.msra.mxu0 %v148
    %779 = vmatpush.msra.mxu0 %v144
    %780 = vmatpush.msra.mxu0 %v140
    %781 = vmatpush.msra.mxu0 %v136
    %782 = vmatpush.msra.mxu0 %v132
    %783 = vmatpush.msra.mxu0 %v128
    %784 = vmatpush.msra.mxu0 %v124
    %785 = vmatpush.msra.mxu0 %v120
    %786 = vmatpush.msra.mxu0 %v116
    %787 = vmatpush.msra.mxu0 %v112
    %788 = vmatpush.msra.mxu0 %v108
    %789 = vmatpush.msra.mxu0 %v104
    %790 = vmatpush.msra.mxu0 %v100
    %791 = vmatmul.f32.gmra.mxu0 %v708
    %v792 = vpop.f32.mrf.mxu0
    %v793 = vadd.f32 0.0, %v792
    %794 = vdwg.mxu0
    %v795 = vadd.f32 %v711, %v733
    %v796 = vadd.f32 %v712, %v753
    %v797 = vadd.f32 %v713, %v773
    %v798 = vadd.f32 %v714, %v793
    %v799 = vxor.u32 %v795, 2147483648
    %v800 = vxor.u32 %v796, 2147483648
    %v801 = vmul.f32 %v799, 1.442695
    %v802 = vpow.pop %v801
    %v803 = vmul.f32 %v800, 1.442695
    %v804 = vpow.pop %v803
    %v805 = vadd.f32 %v802, 1.0
    %v806 = vadd.f32 %v804, 1.0
    %v807 = vrcp.pop %v805
    %v808 = vmul.f32 %v805, %v807
    %v809 = vsub.f32 1.0, %v808
    %v810 = vmul.f32 %v807, %v809
    %v811 = vadd.f32 %v807, %v810
    %vm812 = vweird.f32 %v805
    %vm813 = vweird.f32 %v807
    %vm814 = vmor %vm812, %vm813
    %v815 = vsel %vm814, %v807, %v811
    %v816 = vand.u32 2147483647, %v805
    %vm817 = vcmp.eq.f32.partialorder %v816, 8.507059e+37
    %v818 = vand.u32 %v805, 2147483648
    %v819 = vor.u32 1.1754944e-38, %v818
    %v820 = vsel %vm817, %v819, %v815
    %v821 = vmul.f32 1.0, %v820
    %v822 = vrcp.pop %v806
    %v823 = vmul.f32 %v806, %v822
    %v824 = vsub.f32 1.0, %v823
    %v825 = vmul.f32 %v822, %v824
    %v826 = vadd.f32 %v822, %v825
    %vm827 = vweird.f32 %v806
    %vm828 = vweird.f32 %v822
    %vm829 = vmor %vm827, %vm828
    %v830 = vsel %vm829, %v822, %v826
    %v831 = vand.u32 2147483647, %v806
    %vm832 = vcmp.eq.f32.partialorder %v831, 8.507059e+37
    %v833 = vand.u32 %v806, 2147483648
    %v834 = vor.u32 1.1754944e-38, %v833
    %v835 = vsel %vm832, %v834, %v830
    %v836 = vmul.f32 1.0, %v835
    %v837 = vtanh.pop %v797
    %v838 = vxor.u32 %v798, 2147483648
    %v839 = vmul.f32 %v838, 1.442695
    %v840 = vpow.pop %v839
    %v841 = vadd.f32 %v840, 1.0
    %v842 = vrcp.pop %v841
    %v843 = vmul.f32 %v841, %v842
    %v844 = vsub.f32 1.0, %v843
    %v845 = vmul.f32 %v842, %v844
    %v846 = vadd.f32 %v842, %v845
    %vm847 = vweird.f32 %v841
    %vm848 = vweird.f32 %v842
    %vm849 = vmor %vm847, %vm848
    %v850 = vsel %vm849, %v842, %v846
    %v851 = vand.u32 2147483647, %v841
    %vm852 = vcmp.eq.f32.partialorder %v851, 8.507059e+37
    %v853 = vand.u32 %v841, 2147483648
    %v854 = vor.u32 1.1754944e-38, %v853
    %v855 = vsel %vm852, %v854, %v850
    %v856 = vmul.f32 1.0, %v855
    %v857 = vmul.f32 %v836, %v706
    %v858 = vmul.f32 %v821, %v837
    %v859 = vadd.f32 %v857, %v858
    %v860 = vtanh.pop %v859
    %v861 = vmul.f32 %v856, %v860
    %s862 = scalar_lea.vmem [#allocation3], 8
    %863 = vst [vmem:[%s862] sm:$0xff] %v861
    %s864 = scalar_lea.vmem [#allocation2], 64
    %v865 = vld [vmem:[%s864] sm:$0xff]
    %v866 = vld [vmem:[%s864 + $0x8] sm:$0xff]
    %v867 = vld [vmem:[%s864 + $0x10] sm:$0xff]
    %v868 = vld [vmem:[%s864 + $0x18] sm:$0xff]
    %869 = vmatpush.msra.mxu0 %v157
    %870 = vmatpush.msra.mxu0 %v153
    %871 = vmatpush.msra.mxu0 %v149
    %872 = vmatpush.msra.mxu0 %v145
    %873 = vmatpush.msra.mxu0 %v141
    %874 = vmatpush.msra.mxu0 %v137
    %875 = vmatpush.msra.mxu0 %v133
    %876 = vmatpush.msra.mxu0 %v129
    %877 = vmatpush.msra.mxu0 %v125
    %878 = vmatpush.msra.mxu0 %v121
    %879 = vmatpush.msra.mxu0 %v117
    %880 = vmatpush.msra.mxu0 %v113
    %881 = vmatpush.msra.mxu0 %v109
    %882 = vmatpush.msra.mxu0 %v105
    %883 = vmatpush.msra.mxu0 %v101
    %884 = vmatpush.msra.mxu0 %v97
    %885 = vmatmul.f32.gmra.mxu0 %v861
    %v886 = vpop.f32.mrf.mxu0
    %v887 = vadd.f32 0.0, %v886
    %888 = vdwg.mxu0
    %889 = vmatpush.msra.mxu0 %v158
    %890 = vmatpush.msra.mxu0 %v154
    %891 = vmatpush.msra.mxu0 %v150
    %892 = vmatpush.msra.mxu0 %v146
    %893 = vmatpush.msra.mxu0 %v142
    %894 = vmatpush.msra.mxu0 %v138
    %895 = vmatpush.msra.mxu0 %v134
    %896 = vmatpush.msra.mxu0 %v130
    %897 = vmatpush.msra.mxu0 %v126
    %898 = vmatpush.msra.mxu0 %v122
    %899 = vmatpush.msra.mxu0 %v118
    %900 = vmatpush.msra.mxu0 %v114
    %901 = vmatpush.msra.mxu0 %v110
    %902 = vmatpush.msra.mxu0 %v106
    %903 = vmatpush.msra.mxu0 %v102
    %904 = vmatpush.msra.mxu0 %v98
    %905 = vmatmul.f32.gmra.mxu0 %v861
    %v906 = vpop.f32.mrf.mxu0
    %v907 = vadd.f32 0.0, %v906
    %908 = vdwg.mxu0
    %909 = vmatpush.msra.mxu0 %v159
    %910 = vmatpush.msra.mxu0 %v155
    %911 = vmatpush.msra.mxu0 %v151
    %912 = vmatpush.msra.mxu0 %v147
    %913 = vmatpush.msra.mxu0 %v143
    %914 = vmatpush.msra.mxu0 %v139
    %915 = vmatpush.msra.mxu0 %v135
    %916 = vmatpush.msra.mxu0 %v131
    %917 = vmatpush.msra.mxu0 %v127
    %918 = vmatpush.msra.mxu0 %v123
    %919 = vmatpush.msra.mxu0 %v119
    %920 = vmatpush.msra.mxu0 %v115
    %921 = vmatpush.msra.mxu0 %v111
    %922 = vmatpush.msra.mxu0 %v107
    %923 = vmatpush.msra.mxu0 %v103
    %924 = vmatpush.msra.mxu0 %v99
    %925 = vmatmul.f32.gmra.mxu0 %v861
    %v926 = vpop.f32.mrf.mxu0
    %v927 = vadd.f32 0.0, %v926
    %928 = vdwg.mxu0
    %929 = vmatpush.msra.mxu0 %v160
    %930 = vmatpush.msra.mxu0 %v156
    %931 = vmatpush.msra.mxu0 %v152
    %932 = vmatpush.msra.mxu0 %v148
    %933 = vmatpush.msra.mxu0 %v144
    %934 = vmatpush.msra.mxu0 %v140
    %935 = vmatpush.msra.mxu0 %v136
    %936 = vmatpush.msra.mxu0 %v132
    %937 = vmatpush.msra.mxu0 %v128
    %938 = vmatpush.msra.mxu0 %v124
    %939 = vmatpush.msra.mxu0 %v120
    %940 = vmatpush.msra.mxu0 %v116
    %941 = vmatpush.msra.mxu0 %v112
    %942 = vmatpush.msra.mxu0 %v108
    %943 = vmatpush.msra.mxu0 %v104
    %944 = vmatpush.msra.mxu0 %v100
    %945 = vmatmul.f32.gmra.mxu0 %v861
    %v946 = vpop.f32.mrf.mxu0
    %v947 = vadd.f32 0.0, %v946
    %948 = vdwg.mxu0
    %v949 = vadd.f32 %v865, %v887
    %v950 = vadd.f32 %v866, %v907
    %v951 = vadd.f32 %v867, %v927
    %v952 = vadd.f32 %v868, %v947
    %v953 = vxor.u32 %v949, 2147483648
    %v954 = vxor.u32 %v950, 2147483648
    %v955 = vmul.f32 %v953, 1.442695
    %v956 = vpow.pop %v955
    %v957 = vmul.f32 %v954, 1.442695
    %v958 = vpow.pop %v957
    %v959 = vadd.f32 %v956, 1.0
    %v960 = vadd.f32 %v958, 1.0
    %v961 = vrcp.pop %v959
    %v962 = vmul.f32 %v959, %v961
    %v963 = vsub.f32 1.0, %v962
    %v964 = vmul.f32 %v961, %v963
    %v965 = vadd.f32 %v961, %v964
    %vm966 = vweird.f32 %v959
    %vm967 = vweird.f32 %v961
    %vm968 = vmor %vm966, %vm967
    %v969 = vsel %vm968, %v961, %v965
    %v970 = vand.u32 2147483647, %v959
    %vm971 = vcmp.eq.f32.partialorder %v970, 8.507059e+37
    %v972 = vand.u32 %v959, 2147483648
    %v973 = vor.u32 1.1754944e-38, %v972
    %v974 = vsel %vm971, %v973, %v969
    %v975 = vmul.f32 1.0, %v974
    %v976 = vrcp.pop %v960
    %v977 = vmul.f32 %v960, %v976
    %v978 = vsub.f32 1.0, %v977
    %v979 = vmul.f32 %v976, %v978
    %v980 = vadd.f32 %v976, %v979
    %vm981 = vweird.f32 %v960
    %vm982 = vweird.f32 %v976
    %vm983 = vmor %vm981, %vm982
    %v984 = vsel %vm983, %v976, %v980
    %v985 = vand.u32 2147483647, %v960
    %vm986 = vcmp.eq.f32.partialorder %v985, 8.507059e+37
    %v987 = vand.u32 %v960, 2147483648
    %v988 = vor.u32 1.1754944e-38, %v987
    %v989 = vsel %vm986, %v988, %v984
    %v990 = vmul.f32 1.0, %v989
    %v991 = vtanh.pop %v951
    %v992 = vxor.u32 %v952, 2147483648
    %v993 = vmul.f32 %v992, 1.442695
    %v994 = vpow.pop %v993
    %v995 = vadd.f32 %v994, 1.0
    %v996 = vrcp.pop %v995
    %v997 = vmul.f32 %v995, %v996
    %v998 = vsub.f32 1.0, %v997
    %v999 = vmul.f32 %v996, %v998
    %v1000 = vadd.f32 %v996, %v999
    %vm1001 = vweird.f32 %v995
    %vm1002 = vweird.f32 %v996
    %vm1003 = vmor %vm1001, %vm1002
    %v1004 = vsel %vm1003, %v996, %v1000
    %v1005 = vand.u32 2147483647, %v995
    %vm1006 = vcmp.eq.f32.partialorder %v1005, 8.507059e+37
    %v1007 = vand.u32 %v995, 2147483648
    %v1008 = vor.u32 1.1754944e-38, %v1007
    %v1009 = vsel %vm1006, %v1008, %v1004
    %v1010 = vmul.f32 1.0, %v1009
    %v1011 = vmul.f32 %v990, %v859
    %v1012 = vmul.f32 %v975, %v991
    %v1013 = vadd.f32 %v1011, %v1012
    %v1014 = vtanh.pop %v1013
    %v1015 = vmul.f32 %v1010, %v1014
    %s1016 = scalar_lea.vmem [#allocation3], 16
    %1017 = vst [vmem:[%s1016] sm:$0xff] %v1015
    %s1018 = scalar_lea.vmem [#allocation2], 96
    %v1019 = vld [vmem:[%s1018] sm:$0xff]
    %v1020 = vld [vmem:[%s1018 + $0x8] sm:$0xff]
    %v1021 = vld [vmem:[%s1018 + $0x10] sm:$0xff]
    %v1022 = vld [vmem:[%s1018 + $0x18] sm:$0xff]
    %1023 = vmatpush.msra.mxu0 %v157
    %1024 = vmatpush.msra.mxu0 %v153
    %1025 = vmatpush.msra.mxu0 %v149
    %1026 = vmatpush.msra.mxu0 %v145
    %1027 = vmatpush.msra.mxu0 %v141
    %1028 = vmatpush.msra.mxu0 %v137
    %1029 = vmatpush.msra.mxu0 %v133
    %1030 = vmatpush.msra.mxu0 %v129
    %1031 = vmatpush.msra.mxu0 %v125
    %1032 = vmatpush.msra.mxu0 %v121
    %1033 = vmatpush.msra.mxu0 %v117
    %1034 = vmatpush.msra.mxu0 %v113
    %1035 = vmatpush.msra.mxu0 %v109
    %1036 = vmatpush.msra.mxu0 %v105
    %1037 = vmatpush.msra.mxu0 %v101
    %1038 = vmatpush.msra.mxu0 %v97
    %1039 = vmatmul.f32.gmra.mxu0 %v1015
    %v1040 = vpop.f32.mrf.mxu0
    %v1041 = vadd.f32 0.0, %v1040
    %1042 = vdwg.mxu0
    %1043 = vmatpush.msra.mxu0 %v158
    %1044 = vmatpush.msra.mxu0 %v154
    %1045 = vmatpush.msra.mxu0 %v150
    %1046 = vmatpush.msra.mxu0 %v146
    %1047 = vmatpush.msra.mxu0 %v142
    %1048 = vmatpush.msra.mxu0 %v138
    %1049 = vmatpush.msra.mxu0 %v134
    %1050 = vmatpush.msra.mxu0 %v130
    %1051 = vmatpush.msra.mxu0 %v126
    %1052 = vmatpush.msra.mxu0 %v122
    %1053 = vmatpush.msra.mxu0 %v118
    %1054 = vmatpush.msra.mxu0 %v114
    %1055 = vmatpush.msra.mxu0 %v110
    %1056 = vmatpush.msra.mxu0 %v106
    %1057 = vmatpush.msra.mxu0 %v102
    %1058 = vmatpush.msra.mxu0 %v98
    %1059 = vmatmul.f32.gmra.mxu0 %v1015
    %v1060 = vpop.f32.mrf.mxu0
    %v1061 = vadd.f32 0.0, %v1060
    %1062 = vdwg.mxu0
    %1063 = vmatpush.msra.mxu0 %v159
    %1064 = vmatpush.msra.mxu0 %v155
    %1065 = vmatpush.msra.mxu0 %v151
    %1066 = vmatpush.msra.mxu0 %v147
    %1067 = vmatpush.msra.mxu0 %v143
    %1068 = vmatpush.msra.mxu0 %v139
    %1069 = vmatpush.msra.mxu0 %v135
    %1070 = vmatpush.msra.mxu0 %v131
    %1071 = vmatpush.msra.mxu0 %v127
    %1072 = vmatpush.msra.mxu0 %v123
    %1073 = vmatpush.msra.mxu0 %v119
    %1074 = vmatpush.msra.mxu0 %v115
    %1075 = vmatpush.msra.mxu0 %v111
    %1076 = vmatpush.msra.mxu0 %v107
    %1077 = vmatpush.msra.mxu0 %v103
    %1078 = vmatpush.msra.mxu0 %v99
    %1079 = vmatmul.f32.gmra.mxu0 %v1015
    %v1080 = vpop.f32.mrf.mxu0
    %v1081 = vadd.f32 0.0, %v1080
    %1082 = vdwg.mxu0
    %1083 = vmatpush.msra.mxu0 %v160
    %1084 = vmatpush.msra.mxu0 %v156
    %1085 = vmatpush.msra.mxu0 %v152
    %1086 = vmatpush.msra.mxu0 %v148
    %1087 = vmatpush.msra.mxu0 %v144
    %1088 = vmatpush.msra.mxu0 %v140
    %1089 = vmatpush.msra.mxu0 %v136
    %1090 = vmatpush.msra.mxu0 %v132
    %1091 = vmatpush.msra.mxu0 %v128
    %1092 = vmatpush.msra.mxu0 %v124
    %1093 = vmatpush.msra.mxu0 %v120
    %1094 = vmatpush.msra.mxu0 %v116
    %1095 = vmatpush.msra.mxu0 %v112
    %1096 = vmatpush.msra.mxu0 %v108
    %1097 = vmatpush.msra.mxu0 %v104
    %1098 = vmatpush.msra.mxu0 %v100
    %1099 = vmatmul.f32.gmra.mxu0 %v1015
    %v1100 = vpop.f32.mrf.mxu0
    %v1101 = vadd.f32 0.0, %v1100
    %1102 = vdwg.mxu0
    %v1103 = vadd.f32 %v1019, %v1041
    %v1104 = vadd.f32 %v1020, %v1061
    %v1105 = vadd.f32 %v1021, %v1081
    %v1106 = vadd.f32 %v1022, %v1101
    %v1107 = vxor.u32 %v1103, 2147483648
    %v1108 = vxor.u32 %v1104, 2147483648
    %v1109 = vmul.f32 %v1107, 1.442695
    %v1110 = vpow.pop %v1109
    %v1111 = vmul.f32 %v1108, 1.442695
    %v1112 = vpow.pop %v1111
    %v1113 = vadd.f32 %v1110, 1.0
    %v1114 = vadd.f32 %v1112, 1.0
    %v1115 = vrcp.pop %v1113
    %v1116 = vmul.f32 %v1113, %v1115
    %v1117 = vsub.f32 1.0, %v1116
    %v1118 = vmul.f32 %v1115, %v1117
    %v1119 = vadd.f32 %v1115, %v1118
    %vm1120 = vweird.f32 %v1113
    %vm1121 = vweird.f32 %v1115
    %vm1122 = vmor %vm1120, %vm1121
    %v1123 = vsel %vm1122, %v1115, %v1119
    %v1124 = vand.u32 2147483647, %v1113
    %vm1125 = vcmp.eq.f32.partialorder %v1124, 8.507059e+37
    %v1126 = vand.u32 %v1113, 2147483648
    %v1127 = vor.u32 1.1754944e-38, %v1126
    %v1128 = vsel %vm1125, %v1127, %v1123
    %v1129 = vmul.f32 1.0, %v1128
    %v1130 = vrcp.pop %v1114
    %v1131 = vmul.f32 %v1114, %v1130
    %v1132 = vsub.f32 1.0, %v1131
    %v1133 = vmul.f32 %v1130, %v1132
    %v1134 = vadd.f32 %v1130, %v1133
    %vm1135 = vweird.f32 %v1114
    %vm1136 = vweird.f32 %v1130
    %vm1137 = vmor %vm1135, %vm1136
    %v1138 = vsel %vm1137, %v1130, %v1134
    %v1139 = vand.u32 2147483647, %v1114
    %vm1140 = vcmp.eq.f32.partialorder %v1139, 8.507059e+37
    %v1141 = vand.u32 %v1114, 2147483648
    %v1142 = vor.u32 1.1754944e-38, %v1141
    %v1143 = vsel %vm1140, %v1142, %v1138
    %v1144 = vmul.f32 1.0, %v1143
    %v1145 = vtanh.pop %v1105
    %v1146 = vxor.u32 %v1106, 2147483648
    %v1147 = vmul.f32 %v1146, 1.442695
    %v1148 = vpow.pop %v1147
    %v1149 = vadd.f32 %v1148, 1.0
    %v1150 = vrcp.pop %v1149
    %v1151 = vmul.f32 %v1149, %v1150
    %v1152 = vsub.f32 1.0, %v1151
    %v1153 = vmul.f32 %v1150, %v1152
    %v1154 = vadd.f32 %v1150, %v1153
    %vm1155 = vweird.f32 %v1149
    %vm1156 = vweird.f32 %v1150
    %vm1157 = vmor %vm1155, %vm1156
    %v1158 = vsel %vm1157, %v1150, %v1154
    %v1159 = vand.u32 2147483647, %v1149
    %vm1160 = vcmp.eq.f32.partialorder %v1159, 8.507059e+37
    %v1161 = vand.u32 %v1149, 2147483648
    %v1162 = vor.u32 1.1754944e-38, %v1161
    %v1163 = vsel %vm1160, %v1162, %v1158
    %v1164 = vmul.f32 1.0, %v1163
    %v1165 = vmul.f32 %v1144, %v1013
    %v1166 = vmul.f32 %v1129, %v1145
    %v1167 = vadd.f32 %v1165, %v1166
    %v1168 = vtanh.pop %v1167
    %v1169 = vmul.f32 %v1164, %v1168
    %s1170 = scalar_lea.vmem [#allocation3], 24
    %1171 = vst [vmem:[%s1170] sm:$0xff] %v1169
    %s1172 = scalar_lea.vmem [#allocation2], 128
    %v1173 = vld [vmem:[%s1172] sm:$0xff]
    %v1174 = vld [vmem:[%s1172 + $0x8] sm:$0xff]
    %v1175 = vld [vmem:[%s1172 + $0x10] sm:$0xff]
    %v1176 = vld [vmem:[%s1172 + $0x18] sm:$0xff]
    %1177 = vmatpush.msra.mxu0 %v157
    %1178 = vmatpush.msra.mxu0 %v153
    %1179 = vmatpush.msra.mxu0 %v149
    %1180 = vmatpush.msra.mxu0 %v145
    %1181 = vmatpush.msra.mxu0 %v141
    %1182 = vmatpush.msra.mxu0 %v137
    %1183 = vmatpush.msra.mxu0 %v133
    %1184 = vmatpush.msra.mxu0 %v129
    %1185 = vmatpush.msra.mxu0 %v125
    %1186 = vmatpush.msra.mxu0 %v121
    %1187 = vmatpush.msra.mxu0 %v117
    %1188 = vmatpush.msra.mxu0 %v113
    %1189 = vmatpush.msra.mxu0 %v109
    %1190 = vmatpush.msra.mxu0 %v105
    %1191 = vmatpush.msra.mxu0 %v101
    %1192 = vmatpush.msra.mxu0 %v97
    %1193 = vmatmul.f32.gmra.mxu0 %v1169
    %v1194 = vpop.f32.mrf.mxu0
    %v1195 = vadd.f32 0.0, %v1194
    %1196 = vdwg.mxu0
    %1197 = vmatpush.msra.mxu0 %v158
    %1198 = vmatpush.msra.mxu0 %v154
    %1199 = vmatpush.msra.mxu0 %v150
    %1200 = vmatpush.msra.mxu0 %v146
    %1201 = vmatpush.msra.mxu0 %v142
    %1202 = vmatpush.msra.mxu0 %v138
    %1203 = vmatpush.msra.mxu0 %v134
    %1204 = vmatpush.msra.mxu0 %v130
    %1205 = vmatpush.msra.mxu0 %v126
    %1206 = vmatpush.msra.mxu0 %v122
    %1207 = vmatpush.msra.mxu0 %v118
    %1208 = vmatpush.msra.mxu0 %v114
    %1209 = vmatpush.msra.mxu0 %v110
    %1210 = vmatpush.msra.mxu0 %v106
    %1211 = vmatpush.msra.mxu0 %v102
    %1212 = vmatpush.msra.mxu0 %v98
    %1213 = vmatmul.f32.gmra.mxu0 %v1169
    %v1214 = vpop.f32.mrf.mxu0
    %v1215 = vadd.f32 0.0, %v1214
    %1216 = vdwg.mxu0
    %1217 = vmatpush.msra.mxu0 %v159
    %1218 = vmatpush.msra.mxu0 %v155
    %1219 = vmatpush.msra.mxu0 %v151
    %1220 = vmatpush.msra.mxu0 %v147
    %1221 = vmatpush.msra.mxu0 %v143
    %1222 = vmatpush.msra.mxu0 %v139
    %1223 = vmatpush.msra.mxu0 %v135
    %1224 = vmatpush.msra.mxu0 %v131
    %1225 = vmatpush.msra.mxu0 %v127
    %1226 = vmatpush.msra.mxu0 %v123
    %1227 = vmatpush.msra.mxu0 %v119
    %1228 = vmatpush.msra.mxu0 %v115
    %1229 = vmatpush.msra.mxu0 %v111
    %1230 = vmatpush.msra.mxu0 %v107
    %1231 = vmatpush.msra.mxu0 %v103
    %1232 = vmatpush.msra.mxu0 %v99
    %1233 = vmatmul.f32.gmra.mxu0 %v1169
    %v1234 = vpop.f32.mrf.mxu0
    %v1235 = vadd.f32 0.0, %v1234
    %1236 = vdwg.mxu0
    %1237 = vmatpush.msra.mxu0 %v160
    %1238 = vmatpush.msra.mxu0 %v156
    %1239 = vmatpush.msra.mxu0 %v152
    %1240 = vmatpush.msra.mxu0 %v148
    %1241 = vmatpush.msra.mxu0 %v144
    %1242 = vmatpush.msra.mxu0 %v140
    %1243 = vmatpush.msra.mxu0 %v136
    %1244 = vmatpush.msra.mxu0 %v132
    %1245 = vmatpush.msra.mxu0 %v128
    %1246 = vmatpush.msra.mxu0 %v124
    %1247 = vmatpush.msra.mxu0 %v120
    %1248 = vmatpush.msra.mxu0 %v116
    %1249 = vmatpush.msra.mxu0 %v112
    %1250 = vmatpush.msra.mxu0 %v108
    %1251 = vmatpush.msra.mxu0 %v104
    %1252 = vmatpush.msra.mxu0 %v100
    %1253 = vmatmul.f32.gmra.mxu0 %v1169
    %v1254 = vpop.f32.mrf.mxu0
    %v1255 = vadd.f32 0.0, %v1254
    %1256 = vdwg.mxu0
    %v1257 = vadd.f32 %v1173, %v1195
    %v1258 = vadd.f32 %v1174, %v1215
    %v1259 = vadd.f32 %v1175, %v1235
    %v1260 = vadd.f32 %v1176, %v1255
    %v1261 = vxor.u32 %v1257, 2147483648
    %v1262 = vxor.u32 %v1258, 2147483648
    %v1263 = vmul.f32 %v1261, 1.442695
    %v1264 = vpow.pop %v1263
    %v1265 = vmul.f32 %v1262, 1.442695
    %v1266 = vpow.pop %v1265
    %v1267 = vadd.f32 %v1264, 1.0
    %v1268 = vadd.f32 %v1266, 1.0
    %v1269 = vrcp.pop %v1267
    %v1270 = vmul.f32 %v1267, %v1269
    %v1271 = vsub.f32 1.0, %v1270
    %v1272 = vmul.f32 %v1269, %v1271
    %v1273 = vadd.f32 %v1269, %v1272
    %vm1274 = vweird.f32 %v1267
    %vm1275 = vweird.f32 %v1269
    %vm1276 = vmor %vm1274, %vm1275
    %v1277 = vsel %vm1276, %v1269, %v1273
    %v1278 = vand.u32 2147483647, %v1267
    %vm1279 = vcmp.eq.f32.partialorder %v1278, 8.507059e+37
    %v1280 = vand.u32 %v1267, 2147483648
    %v1281 = vor.u32 1.1754944e-38, %v1280
    %v1282 = vsel %vm1279, %v1281, %v1277
    %v1283 = vmul.f32 1.0, %v1282
    %v1284 = vrcp.pop %v1268
    %v1285 = vmul.f32 %v1268, %v1284
    %v1286 = vsub.f32 1.0, %v1285
    %v1287 = vmul.f32 %v1284, %v1286
    %v1288 = vadd.f32 %v1284, %v1287
    %vm1289 = vweird.f32 %v1268
    %vm1290 = vweird.f32 %v1284
    %vm1291 = vmor %vm1289, %vm1290
    %v1292 = vsel %vm1291, %v1284, %v1288
    %v1293 = vand.u32 2147483647, %v1268
    %vm1294 = vcmp.eq.f32.partialorder %v1293, 8.507059e+37
    %v1295 = vand.u32 %v1268, 2147483648
    %v1296 = vor.u32 1.1754944e-38, %v1295
    %v1297 = vsel %vm1294, %v1296, %v1292
    %v1298 = vmul.f32 1.0, %v1297
    %v1299 = vtanh.pop %v1259
    %v1300 = vxor.u32 %v1260, 2147483648
    %v1301 = vmul.f32 %v1300, 1.442695
    %v1302 = vpow.pop %v1301
    %v1303 = vadd.f32 %v1302, 1.0
    %v1304 = vrcp.pop %v1303
    %v1305 = vmul.f32 %v1303, %v1304
    %v1306 = vsub.f32 1.0, %v1305
    %v1307 = vmul.f32 %v1304, %v1306
    %v1308 = vadd.f32 %v1304, %v1307
    %vm1309 = vweird.f32 %v1303
    %vm1310 = vweird.f32 %v1304
    %vm1311 = vmor %vm1309, %vm1310
    %v1312 = vsel %vm1311, %v1304, %v1308
    %v1313 = vand.u32 2147483647, %v1303
    %vm1314 = vcmp.eq.f32.partialorder %v1313, 8.507059e+37
    %v1315 = vand.u32 %v1303, 2147483648
    %v1316 = vor.u32 1.1754944e-38, %v1315
    %v1317 = vsel %vm1314, %v1316, %v1312
    %v1318 = vmul.f32 1.0, %v1317
    %v1319 = vmul.f32 %v1298, %v1167
    %v1320 = vmul.f32 %v1283, %v1299
    %v1321 = vadd.f32 %v1319, %v1320
    %v1322 = vtanh.pop %v1321
    %v1323 = vmul.f32 %v1318, %v1322
    %s1324 = scalar_lea.vmem [#allocation3], 32
    %1325 = vst [vmem:[%s1324] sm:$0xff] %v1323
    %s1326 = scalar_lea.vmem [#allocation2], 160
    %v1327 = vld [vmem:[%s1326] sm:$0xff]
    %v1328 = vld [vmem:[%s1326 + $0x8] sm:$0xff]
    %v1329 = vld [vmem:[%s1326 + $0x10] sm:$0xff]
    %v1330 = vld [vmem:[%s1326 + $0x18] sm:$0xff]
    %1331 = vmatpush.msra.mxu0 %v157
    %1332 = vmatpush.msra.mxu0 %v153
    %1333 = vmatpush.msra.mxu0 %v149
    %1334 = vmatpush.msra.mxu0 %v145
    %1335 = vmatpush.msra.mxu0 %v141
    %1336 = vmatpush.msra.mxu0 %v137
    %1337 = vmatpush.msra.mxu0 %v133
    %1338 = vmatpush.msra.mxu0 %v129
    %1339 = vmatpush.msra.mxu0 %v125
    %1340 = vmatpush.msra.mxu0 %v121
    %1341 = vmatpush.msra.mxu0 %v117
    %1342 = vmatpush.msra.mxu0 %v113
    %1343 = vmatpush.msra.mxu0 %v109
    %1344 = vmatpush.msra.mxu0 %v105
    %1345 = vmatpush.msra.mxu0 %v101
    %1346 = vmatpush.msra.mxu0 %v97
    %1347 = vmatmul.f32.gmra.mxu0 %v1323
    %v1348 = vpop.f32.mrf.mxu0
    %v1349 = vadd.f32 0.0, %v1348
    %1350 = vdwg.mxu0
    %1351 = vmatpush.msra.mxu0 %v158
    %1352 = vmatpush.msra.mxu0 %v154
    %1353 = vmatpush.msra.mxu0 %v150
    %1354 = vmatpush.msra.mxu0 %v146
    %1355 = vmatpush.msra.mxu0 %v142
    %1356 = vmatpush.msra.mxu0 %v138
    %1357 = vmatpush.msra.mxu0 %v134
    %1358 = vmatpush.msra.mxu0 %v130
    %1359 = vmatpush.msra.mxu0 %v126
    %1360 = vmatpush.msra.mxu0 %v122
    %1361 = vmatpush.msra.mxu0 %v118
    %1362 = vmatpush.msra.mxu0 %v114
    %1363 = vmatpush.msra.mxu0 %v110
    %1364 = vmatpush.msra.mxu0 %v106
    %1365 = vmatpush.msra.mxu0 %v102
    %1366 = vmatpush.msra.mxu0 %v98
    %1367 = vmatmul.f32.gmra.mxu0 %v1323
    %v1368 = vpop.f32.mrf.mxu0
    %v1369 = vadd.f32 0.0, %v1368
    %1370 = vdwg.mxu0
    %1371 = vmatpush.msra.mxu0 %v159
    %1372 = vmatpush.msra.mxu0 %v155
    %1373 = vmatpush.msra.mxu0 %v151
    %1374 = vmatpush.msra.mxu0 %v147
    %1375 = vmatpush.msra.mxu0 %v143
    %1376 = vmatpush.msra.mxu0 %v139
    %1377 = vmatpush.msra.mxu0 %v135
    %1378 = vmatpush.msra.mxu0 %v131
    %1379 = vmatpush.msra.mxu0 %v127
    %1380 = vmatpush.msra.mxu0 %v123
    %1381 = vmatpush.msra.mxu0 %v119
    %1382 = vmatpush.msra.mxu0 %v115
    %1383 = vmatpush.msra.mxu0 %v111
    %1384 = vmatpush.msra.mxu0 %v107
    %1385 = vmatpush.msra.mxu0 %v103
    %1386 = vmatpush.msra.mxu0 %v99
    %1387 = vmatmul.f32.gmra.mxu0 %v1323
    %v1388 = vpop.f32.mrf.mxu0
    %v1389 = vadd.f32 0.0, %v1388
    %1390 = vdwg.mxu0
    %1391 = vmatpush.msra.mxu0 %v160
    %1392 = vmatpush.msra.mxu0 %v156
    %1393 = vmatpush.msra.mxu0 %v152
    %1394 = vmatpush.msra.mxu0 %v148
    %1395 = vmatpush.msra.mxu0 %v144
    %1396 = vmatpush.msra.mxu0 %v140
    %1397 = vmatpush.msra.mxu0 %v136
    %1398 = vmatpush.msra.mxu0 %v132
    %1399 = vmatpush.msra.mxu0 %v128
    %1400 = vmatpush.msra.mxu0 %v124
    %1401 = vmatpush.msra.mxu0 %v120
    %1402 = vmatpush.msra.mxu0 %v116
    %1403 = vmatpush.msra.mxu0 %v112
    %1404 = vmatpush.msra.mxu0 %v108
    %1405 = vmatpush.msra.mxu0 %v104
    %1406 = vmatpush.msra.mxu0 %v100
    %1407 = vmatmul.f32.gmra.mxu0 %v1323
    %v1408 = vpop.f32.mrf.mxu0
    %v1409 = vadd.f32 0.0, %v1408
    %1410 = vdwg.mxu0
    %v1411 = vadd.f32 %v1327, %v1349
    %v1412 = vadd.f32 %v1328, %v1369
    %v1413 = vadd.f32 %v1329, %v1389
    %v1414 = vadd.f32 %v1330, %v1409
    %v1415 = vxor.u32 %v1411, 2147483648
    %v1416 = vxor.u32 %v1412, 2147483648
    %v1417 = vmul.f32 %v1415, 1.442695
    %v1418 = vpow.pop %v1417
    %v1419 = vmul.f32 %v1416, 1.442695
    %v1420 = vpow.pop %v1419
    %v1421 = vadd.f32 %v1418, 1.0
    %v1422 = vadd.f32 %v1420, 1.0
    %v1423 = vrcp.pop %v1421
    %v1424 = vmul.f32 %v1421, %v1423
    %v1425 = vsub.f32 1.0, %v1424
    %v1426 = vmul.f32 %v1423, %v1425
    %v1427 = vadd.f32 %v1423, %v1426
    %vm1428 = vweird.f32 %v1421
    %vm1429 = vweird.f32 %v1423
    %vm1430 = vmor %vm1428, %vm1429
    %v1431 = vsel %vm1430, %v1423, %v1427
    %v1432 = vand.u32 2147483647, %v1421
    %vm1433 = vcmp.eq.f32.partialorder %v1432, 8.507059e+37
    %v1434 = vand.u32 %v1421, 2147483648
    %v1435 = vor.u32 1.1754944e-38, %v1434
    %v1436 = vsel %vm1433, %v1435, %v1431
    %v1437 = vmul.f32 1.0, %v1436
    %v1438 = vrcp.pop %v1422
    %v1439 = vmul.f32 %v1422, %v1438
    %v1440 = vsub.f32 1.0, %v1439
    %v1441 = vmul.f32 %v1438, %v1440
    %v1442 = vadd.f32 %v1438, %v1441
    %vm1443 = vweird.f32 %v1422
    %vm1444 = vweird.f32 %v1438
    %vm1445 = vmor %vm1443, %vm1444
    %v1446 = vsel %vm1445, %v1438, %v1442
    %v1447 = vand.u32 2147483647, %v1422
    %vm1448 = vcmp.eq.f32.partialorder %v1447, 8.507059e+37
    %v1449 = vand.u32 %v1422, 2147483648
    %v1450 = vor.u32 1.1754944e-38, %v1449
    %v1451 = vsel %vm1448, %v1450, %v1446
    %v1452 = vmul.f32 1.0, %v1451
    %v1453 = vtanh.pop %v1413
    %v1454 = vxor.u32 %v1414, 2147483648
    %v1455 = vmul.f32 %v1454, 1.442695
    %v1456 = vpow.pop %v1455
    %v1457 = vadd.f32 %v1456, 1.0
    %v1458 = vrcp.pop %v1457
    %v1459 = vmul.f32 %v1457, %v1458
    %v1460 = vsub.f32 1.0, %v1459
    %v1461 = vmul.f32 %v1458, %v1460
    %v1462 = vadd.f32 %v1458, %v1461
    %vm1463 = vweird.f32 %v1457
    %vm1464 = vweird.f32 %v1458
    %vm1465 = vmor %vm1463, %vm1464
    %v1466 = vsel %vm1465, %v1458, %v1462
    %v1467 = vand.u32 2147483647, %v1457
    %vm1468 = vcmp.eq.f32.partialorder %v1467, 8.507059e+37
    %v1469 = vand.u32 %v1457, 2147483648
    %v1470 = vor.u32 1.1754944e-38, %v1469
    %v1471 = vsel %vm1468, %v1470, %v1466
    %v1472 = vmul.f32 1.0, %v1471
    %v1473 = vmul.f32 %v1452, %v1321
    %v1474 = vmul.f32 %v1437, %v1453
    %v1475 = vadd.f32 %v1473, %v1474
    %v1476 = vtanh.pop %v1475
    %v1477 = vmul.f32 %v1472, %v1476
    %s1478 = scalar_lea.vmem [#allocation3], 40
    %1479 = vst [vmem:[%s1478] sm:$0xff] %v1477
    %s1480 = scalar_lea.vmem [#allocation2], 192
    %v1481 = vld [vmem:[%s1480] sm:$0xff]
    %v1482 = vld [vmem:[%s1480 + $0x8] sm:$0xff]
    %v1483 = vld [vmem:[%s1480 + $0x10] sm:$0xff]
    %v1484 = vld [vmem:[%s1480 + $0x18] sm:$0xff]
    %1485 = vmatpush.msra.mxu0 %v157
    %1486 = vmatpush.msra.mxu0 %v153
    %1487 = vmatpush.msra.mxu0 %v149
    %1488 = vmatpush.msra.mxu0 %v145
    %1489 = vmatpush.msra.mxu0 %v141
    %1490 = vmatpush.msra.mxu0 %v137
    %1491 = vmatpush.msra.mxu0 %v133
    %1492 = vmatpush.msra.mxu0 %v129
    %1493 = vmatpush.msra.mxu0 %v125
    %1494 = vmatpush.msra.mxu0 %v121
    %1495 = vmatpush.msra.mxu0 %v117
    %1496 = vmatpush.msra.mxu0 %v113
    %1497 = vmatpush.msra.mxu0 %v109
    %1498 = vmatpush.msra.mxu0 %v105
    %1499 = vmatpush.msra.mxu0 %v101
    %1500 = vmatpush.msra.mxu0 %v97
    %1501 = vmatmul.f32.gmra.mxu0 %v1477
    %v1502 = vpop.f32.mrf.mxu0
    %v1503 = vadd.f32 0.0, %v1502
    %1504 = vdwg.mxu0
    %1505 = vmatpush.msra.mxu0 %v158
    %1506 = vmatpush.msra.mxu0 %v154
    %1507 = vmatpush.msra.mxu0 %v150
    %1508 = vmatpush.msra.mxu0 %v146
    %1509 = vmatpush.msra.mxu0 %v142
    %1510 = vmatpush.msra.mxu0 %v138
    %1511 = vmatpush.msra.mxu0 %v134
    %1512 = vmatpush.msra.mxu0 %v130
    %1513 = vmatpush.msra.mxu0 %v126
    %1514 = vmatpush.msra.mxu0 %v122
    %1515 = vmatpush.msra.mxu0 %v118
    %1516 = vmatpush.msra.mxu0 %v114
    %1517 = vmatpush.msra.mxu0 %v110
    %1518 = vmatpush.msra.mxu0 %v106
    %1519 = vmatpush.msra.mxu0 %v102
    %1520 = vmatpush.msra.mxu0 %v98
    %1521 = vmatmul.f32.gmra.mxu0 %v1477
    %v1522 = vpop.f32.mrf.mxu0
    %v1523 = vadd.f32 0.0, %v1522
    %1524 = vdwg.mxu0
    %1525 = vmatpush.msra.mxu0 %v159
    %1526 = vmatpush.msra.mxu0 %v155
    %1527 = vmatpush.msra.mxu0 %v151
    %1528 = vmatpush.msra.mxu0 %v147
    %1529 = vmatpush.msra.mxu0 %v143
    %1530 = vmatpush.msra.mxu0 %v139
    %1531 = vmatpush.msra.mxu0 %v135
    %1532 = vmatpush.msra.mxu0 %v131
    %1533 = vmatpush.msra.mxu0 %v127
    %1534 = vmatpush.msra.mxu0 %v123
    %1535 = vmatpush.msra.mxu0 %v119
    %1536 = vmatpush.msra.mxu0 %v115
    %1537 = vmatpush.msra.mxu0 %v111
    %1538 = vmatpush.msra.mxu0 %v107
    %1539 = vmatpush.msra.mxu0 %v103
    %1540 = vmatpush.msra.mxu0 %v99
    %1541 = vmatmul.f32.gmra.mxu0 %v1477
    %v1542 = vpop.f32.mrf.mxu0
    %v1543 = vadd.f32 0.0, %v1542
    %1544 = vdwg.mxu0
    %1545 = vmatpush.msra.mxu0 %v160
    %1546 = vmatpush.msra.mxu0 %v156
    %1547 = vmatpush.msra.mxu0 %v152
    %1548 = vmatpush.msra.mxu0 %v148
    %1549 = vmatpush.msra.mxu0 %v144
    %1550 = vmatpush.msra.mxu0 %v140
    %1551 = vmatpush.msra.mxu0 %v136
    %1552 = vmatpush.msra.mxu0 %v132
    %1553 = vmatpush.msra.mxu0 %v128
    %1554 = vmatpush.msra.mxu0 %v124
    %1555 = vmatpush.msra.mxu0 %v120
    %1556 = vmatpush.msra.mxu0 %v116
    %1557 = vmatpush.msra.mxu0 %v112
    %1558 = vmatpush.msra.mxu0 %v108
    %1559 = vmatpush.msra.mxu0 %v104
    %1560 = vmatpush.msra.mxu0 %v100
    %1561 = vmatmul.f32.gmra.mxu0 %v1477
    %v1562 = vpop.f32.mrf.mxu0
    %v1563 = vadd.f32 0.0, %v1562
    %1564 = vdwg.mxu0
    %v1565 = vadd.f32 %v1481, %v1503
    %v1566 = vadd.f32 %v1482, %v1523
    %v1567 = vadd.f32 %v1483, %v1543
    %v1568 = vadd.f32 %v1484, %v1563
    %v1569 = vxor.u32 %v1565, 2147483648
    %v1570 = vxor.u32 %v1566, 2147483648
    %v1571 = vmul.f32 %v1569, 1.442695
    %v1572 = vpow.pop %v1571
    %v1573 = vmul.f32 %v1570, 1.442695
    %v1574 = vpow.pop %v1573
    %v1575 = vadd.f32 %v1572, 1.0
    %v1576 = vadd.f32 %v1574, 1.0
    %v1577 = vrcp.pop %v1575
    %v1578 = vmul.f32 %v1575, %v1577
    %v1579 = vsub.f32 1.0, %v1578
    %v1580 = vmul.f32 %v1577, %v1579
    %v1581 = vadd.f32 %v1577, %v1580
    %vm1582 = vweird.f32 %v1575
    %vm1583 = vweird.f32 %v1577
    %vm1584 = vmor %vm1582, %vm1583
    %v1585 = vsel %vm1584, %v1577, %v1581
    %v1586 = vand.u32 2147483647, %v1575
    %vm1587 = vcmp.eq.f32.partialorder %v1586, 8.507059e+37
    %v1588 = vand.u32 %v1575, 2147483648
    %v1589 = vor.u32 1.1754944e-38, %v1588
    %v1590 = vsel %vm1587, %v1589, %v1585
    %v1591 = vmul.f32 1.0, %v1590
    %v1592 = vrcp.pop %v1576
    %v1593 = vmul.f32 %v1576, %v1592
    %v1594 = vsub.f32 1.0, %v1593
    %v1595 = vmul.f32 %v1592, %v1594
    %v1596 = vadd.f32 %v1592, %v1595
    %vm1597 = vweird.f32 %v1576
    %vm1598 = vweird.f32 %v1592
    %vm1599 = vmor %vm1597, %vm1598
    %v1600 = vsel %vm1599, %v1592, %v1596
    %v1601 = vand.u32 2147483647, %v1576
    %vm1602 = vcmp.eq.f32.partialorder %v1601, 8.507059e+37
    %v1603 = vand.u32 %v1576, 2147483648
    %v1604 = vor.u32 1.1754944e-38, %v1603
    %v1605 = vsel %vm1602, %v1604, %v1600
    %v1606 = vmul.f32 1.0, %v1605
    %v1607 = vtanh.pop %v1567
    %v1608 = vxor.u32 %v1568, 2147483648
    %v1609 = vmul.f32 %v1608, 1.442695
    %v1610 = vpow.pop %v1609
    %v1611 = vadd.f32 %v1610, 1.0
    %v1612 = vrcp.pop %v1611
    %v1613 = vmul.f32 %v1611, %v1612
    %v1614 = vsub.f32 1.0, %v1613
    %v1615 = vmul.f32 %v1612, %v1614
    %v1616 = vadd.f32 %v1612, %v1615
    %vm1617 = vweird.f32 %v1611
    %vm1618 = vweird.f32 %v1612
    %vm1619 = vmor %vm1617, %vm1618
    %v1620 = vsel %vm1619, %v1612, %v1616
    %v1621 = vand.u32 2147483647, %v1611
    %vm1622 = vcmp.eq.f32.partialorder %v1621, 8.507059e+37
    %v1623 = vand.u32 %v1611, 2147483648
    %v1624 = vor.u32 1.1754944e-38, %v1623
    %v1625 = vsel %vm1622, %v1624, %v1620
    %v1626 = vmul.f32 1.0, %v1625
    %v1627 = vmul.f32 %v1606, %v1475
    %v1628 = vmul.f32 %v1591, %v1607
    %v1629 = vadd.f32 %v1627, %v1628
    %v1630 = vtanh.pop %v1629
    %v1631 = vmul.f32 %v1626, %v1630
    %s1632 = scalar_lea.vmem [#allocation3], 48
    %1633 = vst [vmem:[%s1632] sm:$0xff] %v1631
    %s1634 = scalar_lea.vmem [#allocation2], 224
    %v1635 = vld [vmem:[%s1634] sm:$0xff]
    %v1636 = vld [vmem:[%s1634 + $0x8] sm:$0xff]
    %v1637 = vld [vmem:[%s1634 + $0x10] sm:$0xff]
    %v1638 = vld [vmem:[%s1634 + $0x18] sm:$0xff]
    %1639 = vmatpush.msra.mxu0 %v157
    %1640 = vmatpush.msra.mxu0 %v153
    %1641 = vmatpush.msra.mxu0 %v149
    %1642 = vmatpush.msra.mxu0 %v145
    %1643 = vmatpush.msra.mxu0 %v141
    %1644 = vmatpush.msra.mxu0 %v137
    %1645 = vmatpush.msra.mxu0 %v133
    %1646 = vmatpush.msra.mxu0 %v129
    %1647 = vmatpush.msra.mxu0 %v125
    %1648 = vmatpush.msra.mxu0 %v121
    %1649 = vmatpush.msra.mxu0 %v117
    %1650 = vmatpush.msra.mxu0 %v113
    %1651 = vmatpush.msra.mxu0 %v109
    %1652 = vmatpush.msra.mxu0 %v105
    %1653 = vmatpush.msra.mxu0 %v101
    %1654 = vmatpush.msra.mxu0 %v97
    %1655 = vmatmul.f32.gmra.mxu0 %v1631
    %v1656 = vpop.f32.mrf.mxu0
    %v1657 = vadd.f32 0.0, %v1656
    %1658 = vdwg.mxu0
    %1659 = vmatpush.msra.mxu0 %v158
    %1660 = vmatpush.msra.mxu0 %v154
    %1661 = vmatpush.msra.mxu0 %v150
    %1662 = vmatpush.msra.mxu0 %v146
    %1663 = vmatpush.msra.mxu0 %v142
    %1664 = vmatpush.msra.mxu0 %v138
    %1665 = vmatpush.msra.mxu0 %v134
    %1666 = vmatpush.msra.mxu0 %v130
    %1667 = vmatpush.msra.mxu0 %v126
    %1668 = vmatpush.msra.mxu0 %v122
    %1669 = vmatpush.msra.mxu0 %v118
    %1670 = vmatpush.msra.mxu0 %v114
    %1671 = vmatpush.msra.mxu0 %v110
    %1672 = vmatpush.msra.mxu0 %v106
    %1673 = vmatpush.msra.mxu0 %v102
    %1674 = vmatpush.msra.mxu0 %v98
    %1675 = vmatmul.f32.gmra.mxu0 %v1631
    %v1676 = vpop.f32.mrf.mxu0
    %v1677 = vadd.f32 0.0, %v1676
    %1678 = vdwg.mxu0
    %1679 = vmatpush.msra.mxu0 %v159
    %1680 = vmatpush.msra.mxu0 %v155
    %1681 = vmatpush.msra.mxu0 %v151
    %1682 = vmatpush.msra.mxu0 %v147
    %1683 = vmatpush.msra.mxu0 %v143
    %1684 = vmatpush.msra.mxu0 %v139
    %1685 = vmatpush.msra.mxu0 %v135
    %1686 = vmatpush.msra.mxu0 %v131
    %1687 = vmatpush.msra.mxu0 %v127
    %1688 = vmatpush.msra.mxu0 %v123
    %1689 = vmatpush.msra.mxu0 %v119
    %1690 = vmatpush.msra.mxu0 %v115
    %1691 = vmatpush.msra.mxu0 %v111
    %1692 = vmatpush.msra.mxu0 %v107
    %1693 = vmatpush.msra.mxu0 %v103
    %1694 = vmatpush.msra.mxu0 %v99
    %1695 = vmatmul.f32.gmra.mxu0 %v1631
    %v1696 = vpop.f32.mrf.mxu0
    %v1697 = vadd.f32 0.0, %v1696
    %1698 = vdwg.mxu0
    %1699 = vmatpush.msra.mxu0 %v160
    %1700 = vmatpush.msra.mxu0 %v156
    %1701 = vmatpush.msra.mxu0 %v152
    %1702 = vmatpush.msra.mxu0 %v148
    %1703 = vmatpush.msra.mxu0 %v144
    %1704 = vmatpush.msra.mxu0 %v140
    %1705 = vmatpush.msra.mxu0 %v136
    %1706 = vmatpush.msra.mxu0 %v132
    %1707 = vmatpush.msra.mxu0 %v128
    %1708 = vmatpush.msra.mxu0 %v124
    %1709 = vmatpush.msra.mxu0 %v120
    %1710 = vmatpush.msra.mxu0 %v116
    %1711 = vmatpush.msra.mxu0 %v112
    %1712 = vmatpush.msra.mxu0 %v108
    %1713 = vmatpush.msra.mxu0 %v104
    %1714 = vmatpush.msra.mxu0 %v100
    %1715 = vmatmul.f32.gmra.mxu0 %v1631
    %v1716 = vpop.f32.mrf.mxu0
    %v1717 = vadd.f32 0.0, %v1716
    %1718 = vdwg.mxu0
    %v1719 = vadd.f32 %v1635, %v1657
    %v1720 = vadd.f32 %v1636, %v1677
    %v1721 = vadd.f32 %v1637, %v1697
    %v1722 = vadd.f32 %v1638, %v1717
    %v1723 = vxor.u32 %v1719, 2147483648
    %v1724 = vxor.u32 %v1720, 2147483648
    %v1725 = vmul.f32 %v1723, 1.442695
    %v1726 = vpow.pop %v1725
    %v1727 = vmul.f32 %v1724, 1.442695
    %v1728 = vpow.pop %v1727
    %v1729 = vadd.f32 %v1726, 1.0
    %v1730 = vadd.f32 %v1728, 1.0
    %v1731 = vrcp.pop %v1729
    %v1732 = vmul.f32 %v1729, %v1731
    %v1733 = vsub.f32 1.0, %v1732
    %v1734 = vmul.f32 %v1731, %v1733
    %v1735 = vadd.f32 %v1731, %v1734
    %vm1736 = vweird.f32 %v1729
    %vm1737 = vweird.f32 %v1731
    %vm1738 = vmor %vm1736, %vm1737
    %v1739 = vsel %vm1738, %v1731, %v1735
    %v1740 = vand.u32 2147483647, %v1729
    %vm1741 = vcmp.eq.f32.partialorder %v1740, 8.507059e+37
    %v1742 = vand.u32 %v1729, 2147483648
    %v1743 = vor.u32 1.1754944e-38, %v1742
    %v1744 = vsel %vm1741, %v1743, %v1739
    %v1745 = vmul.f32 1.0, %v1744
    %v1746 = vrcp.pop %v1730
    %v1747 = vmul.f32 %v1730, %v1746
    %v1748 = vsub.f32 1.0, %v1747
    %v1749 = vmul.f32 %v1746, %v1748
    %v1750 = vadd.f32 %v1746, %v1749
    %vm1751 = vweird.f32 %v1730
    %vm1752 = vweird.f32 %v1746
    %vm1753 = vmor %vm1751, %vm1752
    %v1754 = vsel %vm1753, %v1746, %v1750
    %v1755 = vand.u32 2147483647, %v1730
    %vm1756 = vcmp.eq.f32.partialorder %v1755, 8.507059e+37
    %v1757 = vand.u32 %v1730, 2147483648
    %v1758 = vor.u32 1.1754944e-38, %v1757
    %v1759 = vsel %vm1756, %v1758, %v1754
    %v1760 = vmul.f32 1.0, %v1759
    %v1761 = vtanh.pop %v1721
    %v1762 = vxor.u32 %v1722, 2147483648
    %v1763 = vmul.f32 %v1762, 1.442695
    %v1764 = vpow.pop %v1763
    %v1765 = vadd.f32 %v1764, 1.0
    %v1766 = vrcp.pop %v1765
    %v1767 = vmul.f32 %v1765, %v1766
    %v1768 = vsub.f32 1.0, %v1767
    %v1769 = vmul.f32 %v1766, %v1768
    %v1770 = vadd.f32 %v1766, %v1769
    %vm1771 = vweird.f32 %v1765
    %vm1772 = vweird.f32 %v1766
    %vm1773 = vmor %vm1771, %vm1772
    %v1774 = vsel %vm1773, %v1766, %v1770
    %v1775 = vand.u32 2147483647, %v1765
    %vm1776 = vcmp.eq.f32.partialorder %v1775, 8.507059e+37
    %v1777 = vand.u32 %v1765, 2147483648
    %v1778 = vor.u32 1.1754944e-38, %v1777
    %v1779 = vsel %vm1776, %v1778, %v1774
    %v1780 = vmul.f32 1.0, %v1779
    %v1781 = vmul.f32 %v1760, %v1629
    %v1782 = vmul.f32 %v1745, %v1761
    %v1783 = vadd.f32 %v1781, %v1782
    %v1784 = vtanh.pop %v1783
    %v1785 = vmul.f32 %v1780, %v1784
    %s1786 = scalar_lea.vmem [#allocation3], 56
    %1787 = vst [vmem:[%s1786] sm:$0xff] %v1785
    %v1788 = vld [vmem:[#allocation3] sm:$0xff]
    %v1789 = vld [vmem:[#allocation3 + $0x8] sm:$0xff]
    %v1790 = vld [vmem:[#allocation3 + $0x10] sm:$0xff]
    %v1791 = vld [vmem:[#allocation3 + $0x18] sm:$0xff]
    %v1792 = vld [vmem:[#allocation3 + $0x20] sm:$0xff]
    %v1793 = vld [vmem:[#allocation3 + $0x28] sm:$0xff]
    %v1794 = vld [vmem:[#allocation3 + $0x30] sm:$0xff]
    %v1795 = vld [vmem:[#allocation3 + $0x38] sm:$0xff]
    %v1797 = vperm.slane %v289, 0
    %v1798 = vperm.slane %v289, 1
    %v1799 = vperm.slane %v289, 2
    %v1800 = vperm.slane %v289, 3
    %1805 = vmatpush.msra.mxu0 %v221
    %1806 = vmatpush.msra.mxu0 %v217
    %1807 = vmatpush.msra.mxu0 %v213
    %1808 = vmatpush.msra.mxu0 %v209
    %1809 = vmatpush.msra.mxu0 %v205
    %1810 = vmatpush.msra.mxu0 %v201
    %1811 = vmatpush.msra.mxu0 %v197
    %1812 = vmatpush.msra.mxu0 %v193
    %1813 = vmatpush.msra.mxu0 %v189
    %1814 = vmatpush.msra.mxu0 %v185
    %1815 = vmatpush.msra.mxu0 %v181
    %1816 = vmatpush.msra.mxu0 %v177
    %1817 = vmatpush.msra.mxu0 %v173
    %1818 = vmatpush.msra.mxu0 %v169
    %1819 = vmatpush.msra.mxu0 %v165
    %1820 = vmatpush.msra.mxu0 %v161
    %1821 = vmatmul.f32.gmra.mxu0 %v1788
    %v1822 = vpop.f32.mrf.mxu0
    %v1823 = vadd.f32 %v1797, %v1822
    %1824 = vmatmul.f32.gmra.mxu0 %v1789
    %v1825 = vpop.f32.mrf.mxu0
    %v1826 = vadd.f32 %v1797, %v1825
    %1827 = vmatmul.f32.gmra.mxu0 %v1790
    %v1828 = vpop.f32.mrf.mxu0
    %v1829 = vadd.f32 %v1797, %v1828
    %1830 = vmatmul.f32.gmra.mxu0 %v1791
    %v1831 = vpop.f32.mrf.mxu0
    %v1832 = vadd.f32 %v1797, %v1831
    %1833 = vmatmul.f32.gmra.mxu0 %v1792
    %v1834 = vpop.f32.mrf.mxu0
    %v1835 = vadd.f32 %v1797, %v1834
    %1836 = vmatmul.f32.gmra.mxu0 %v1793
    %v1837 = vpop.f32.mrf.mxu0
    %v1838 = vadd.f32 %v1797, %v1837
    %1839 = vmatmul.f32.gmra.mxu0 %v1794
    %v1840 = vpop.f32.mrf.mxu0
    %v1841 = vadd.f32 %v1797, %v1840
    %1842 = vmatmul.f32.gmra.mxu0 %v1795
    %v1843 = vpop.f32.mrf.mxu0
    %v1844 = vadd.f32 %v1797, %v1843
    %1845 = vdwg.mxu0
    %1846 = vmatpush.msra.mxu0 %v222
    %1847 = vmatpush.msra.mxu0 %v218
    %1848 = vmatpush.msra.mxu0 %v214
    %1849 = vmatpush.msra.mxu0 %v210
    %1850 = vmatpush.msra.mxu0 %v206
    %1851 = vmatpush.msra.mxu0 %v202
    %1852 = vmatpush.msra.mxu0 %v198
    %1853 = vmatpush.msra.mxu0 %v194
    %1854 = vmatpush.msra.mxu0 %v190
    %1855 = vmatpush.msra.mxu0 %v186
    %1856 = vmatpush.msra.mxu0 %v182
    %1857 = vmatpush.msra.mxu0 %v178
    %1858 = vmatpush.msra.mxu0 %v174
    %1859 = vmatpush.msra.mxu0 %v170
    %1860 = vmatpush.msra.mxu0 %v166
    %1861 = vmatpush.msra.mxu0 %v162
    %1862 = vmatmul.f32.gmra.mxu0 %v1788
    %v1863 = vpop.f32.mrf.mxu0
    %v1864 = vadd.f32 %v1798, %v1863
    %1865 = vmatmul.f32.gmra.mxu0 %v1789
    %v1866 = vpop.f32.mrf.mxu0
    %v1867 = vadd.f32 %v1798, %v1866
    %1868 = vmatmul.f32.gmra.mxu0 %v1790
    %v1869 = vpop.f32.mrf.mxu0
    %v1870 = vadd.f32 %v1798, %v1869
    %1871 = vmatmul.f32.gmra.mxu0 %v1791
    %v1872 = vpop.f32.mrf.mxu0
    %v1873 = vadd.f32 %v1798, %v1872
    %1874 = vmatmul.f32.gmra.mxu0 %v1792
    %v1875 = vpop.f32.mrf.mxu0
    %v1876 = vadd.f32 %v1798, %v1875
    %1877 = vmatmul.f32.gmra.mxu0 %v1793
    %v1878 = vpop.f32.mrf.mxu0
    %v1879 = vadd.f32 %v1798, %v1878
    %1880 = vmatmul.f32.gmra.mxu0 %v1794
    %v1881 = vpop.f32.mrf.mxu0
    %v1882 = vadd.f32 %v1798, %v1881
    %1883 = vmatmul.f32.gmra.mxu0 %v1795
    %v1884 = vpop.f32.mrf.mxu0
    %v1885 = vadd.f32 %v1798, %v1884
    %1886 = vdwg.mxu0
    %1887 = vmatpush.msra.mxu0 %v223
    %1888 = vmatpush.msra.mxu0 %v219
    %1889 = vmatpush.msra.mxu0 %v215
    %1890 = vmatpush.msra.mxu0 %v211
    %1891 = vmatpush.msra.mxu0 %v207
    %1892 = vmatpush.msra.mxu0 %v203
    %1893 = vmatpush.msra.mxu0 %v199
    %1894 = vmatpush.msra.mxu0 %v195
    %1895 = vmatpush.msra.mxu0 %v191
    %1896 = vmatpush.msra.mxu0 %v187
    %1897 = vmatpush.msra.mxu0 %v183
    %1898 = vmatpush.msra.mxu0 %v179
    %1899 = vmatpush.msra.mxu0 %v175
    %1900 = vmatpush.msra.mxu0 %v171
    %1901 = vmatpush.msra.mxu0 %v167
    %1902 = vmatpush.msra.mxu0 %v163
    %1903 = vmatmul.f32.gmra.mxu0 %v1788
    %v1904 = vpop.f32.mrf.mxu0
    %v1905 = vadd.f32 %v1799, %v1904
    %1906 = vmatmul.f32.gmra.mxu0 %v1789
    %v1907 = vpop.f32.mrf.mxu0
    %v1908 = vadd.f32 %v1799, %v1907
    %1909 = vmatmul.f32.gmra.mxu0 %v1790
    %v1910 = vpop.f32.mrf.mxu0
    %v1911 = vadd.f32 %v1799, %v1910
    %1912 = vmatmul.f32.gmra.mxu0 %v1791
    %v1913 = vpop.f32.mrf.mxu0
    %v1914 = vadd.f32 %v1799, %v1913
    %1915 = vmatmul.f32.gmra.mxu0 %v1792
    %v1916 = vpop.f32.mrf.mxu0
    %v1917 = vadd.f32 %v1799, %v1916
    %1918 = vmatmul.f32.gmra.mxu0 %v1793
    %v1919 = vpop.f32.mrf.mxu0
    %v1920 = vadd.f32 %v1799, %v1919
    %1921 = vmatmul.f32.gmra.mxu0 %v1794
    %v1922 = vpop.f32.mrf.mxu0
    %v1923 = vadd.f32 %v1799, %v1922
    %1924 = vmatmul.f32.gmra.mxu0 %v1795
    %v1925 = vpop.f32.mrf.mxu0
    %v1926 = vadd.f32 %v1799, %v1925
    %1927 = vdwg.mxu0
    %1928 = vmatpush.msra.mxu0 %v224
    %1929 = vmatpush.msra.mxu0 %v220
    %1930 = vmatpush.msra.mxu0 %v216
    %1931 = vmatpush.msra.mxu0 %v212
    %1932 = vmatpush.msra.mxu0 %v208
    %1933 = vmatpush.msra.mxu0 %v204
    %1934 = vmatpush.msra.mxu0 %v200
    %1935 = vmatpush.msra.mxu0 %v196
    %1936 = vmatpush.msra.mxu0 %v192
    %1937 = vmatpush.msra.mxu0 %v188
    %1938 = vmatpush.msra.mxu0 %v184
    %1939 = vmatpush.msra.mxu0 %v180
    %1940 = vmatpush.msra.mxu0 %v176
    %1941 = vmatpush.msra.mxu0 %v172
    %1942 = vmatpush.msra.mxu0 %v168
    %1943 = vmatpush.msra.mxu0 %v164
    %1944 = vmatmul.f32.gmra.mxu0 %v1788
    %v1945 = vpop.f32.mrf.mxu0
    %v1946 = vadd.f32 %v1800, %v1945
    %1947 = vmatmul.f32.gmra.mxu0 %v1789
    %v1948 = vpop.f32.mrf.mxu0
    %v1949 = vadd.f32 %v1800, %v1948
    %1950 = vmatmul.f32.gmra.mxu0 %v1790
    %v1951 = vpop.f32.mrf.mxu0
    %v1952 = vadd.f32 %v1800, %v1951
    %1953 = vmatmul.f32.gmra.mxu0 %v1791
    %v1954 = vpop.f32.mrf.mxu0
    %v1955 = vadd.f32 %v1800, %v1954
    %1956 = vmatmul.f32.gmra.mxu0 %v1792
    %v1957 = vpop.f32.mrf.mxu0
    %v1958 = vadd.f32 %v1800, %v1957
    %1959 = vmatmul.f32.gmra.mxu0 %v1793
    %v1960 = vpop.f32.mrf.mxu0
    %v1961 = vadd.f32 %v1800, %v1960
    %1962 = vmatmul.f32.gmra.mxu0 %v1794
    %v1963 = vpop.f32.mrf.mxu0
    %v1964 = vadd.f32 %v1800, %v1963
    %1965 = vmatmul.f32.gmra.mxu0 %v1795
    %v1966 = vpop.f32.mrf.mxu0
    %v1967 = vadd.f32 %v1800, %v1966
    %1968 = vdwg.mxu0
    %1969 = vst [vmem:[#allocation2] sm:$0xff] %v1823
    %1970 = vst [vmem:[#allocation2 + $0x8] sm:$0xff] %v1864
    %1971 = vst [vmem:[#allocation2 + $0x10] sm:$0xff] %v1905
    %1972 = vst [vmem:[#allocation2 + $0x18] sm:$0xff] %v1946
    %1973 = vst [vmem:[#allocation2 + $0x20] sm:$0xff] %v1826
    %1974 = vst [vmem:[#allocation2 + $0x28] sm:$0xff] %v1867
    %1975 = vst [vmem:[#allocation2 + $0x30] sm:$0xff] %v1908
    %1976 = vst [vmem:[#allocation2 + $0x38] sm:$0xff] %v1949
    %1977 = vst [vmem:[#allocation2 + $0x40] sm:$0xff] %v1829
    %1978 = vst [vmem:[#allocation2 + $0x48] sm:$0xff] %v1870
    %1979 = vst [vmem:[#allocation2 + $0x50] sm:$0xff] %v1911
    %1980 = vst [vmem:[#allocation2 + $0x58] sm:$0xff] %v1952
    %1981 = vst [vmem:[#allocation2 + $0x60] sm:$0xff] %v1832
    %1982 = vst [vmem:[#allocation2 + $0x68] sm:$0xff] %v1873
    %1983 = vst [vmem:[#allocation2 + $0x70] sm:$0xff] %v1914
    %1984 = vst [vmem:[#allocation2 + $0x78] sm:$0xff] %v1955
    %1985 = vst [vmem:[#allocation2 + $0x80] sm:$0xff] %v1835
    %1986 = vst [vmem:[#allocation2 + $0x88] sm:$0xff] %v1876
    %1987 = vst [vmem:[#allocation2 + $0x90] sm:$0xff] %v1917
    %1988 = vst [vmem:[#allocation2 + $0x98] sm:$0xff] %v1958
    %1989 = vst [vmem:[#allocation2 + $0xa0] sm:$0xff] %v1838
    %1990 = vst [vmem:[#allocation2 + $0xa8] sm:$0xff] %v1879
    %1991 = vst [vmem:[#allocation2 + $0xb0] sm:$0xff] %v1920
    %1992 = vst [vmem:[#allocation2 + $0xb8] sm:$0xff] %v1961
    %1993 = vst [vmem:[#allocation2 + $0xc0] sm:$0xff] %v1841
    %1994 = vst [vmem:[#allocation2 + $0xc8] sm:$0xff] %v1882
    %1995 = vst [vmem:[#allocation2 + $0xd0] sm:$0xff] %v1923
    %1996 = vst [vmem:[#allocation2 + $0xd8] sm:$0xff] %v1964
    %1997 = vst [vmem:[#allocation2 + $0xe0] sm:$0xff] %v1844
    %1998 = vst [vmem:[#allocation2 + $0xe8] sm:$0xff] %v1885
    %1999 = vst [vmem:[#allocation2 + $0xf0] sm:$0xff] %v1926
    %2000 = vst [vmem:[#allocation2 + $0xf8] sm:$0xff] %v1967
    %v2001 = vld [vmem:[#allocation2] sm:$0xff]
    %v2002 = vld [vmem:[#allocation2 + $0x8] sm:$0xff]
    %v2003 = vld [vmem:[#allocation2 + $0x10] sm:$0xff]
    %v2004 = vld [vmem:[#allocation2 + $0x18] sm:$0xff]
    %2005 = vmatpush.msra.mxu0 %v285
    %2006 = vmatpush.msra.mxu0 %v281
    %2007 = vmatpush.msra.mxu0 %v277
    %2008 = vmatpush.msra.mxu0 %v273
    %2009 = vmatpush.msra.mxu0 %v269
    %2010 = vmatpush.msra.mxu0 %v265
    %2011 = vmatpush.msra.mxu0 %v261
    %2012 = vmatpush.msra.mxu0 %v257
    %2013 = vmatpush.msra.mxu0 %v253
    %2014 = vmatpush.msra.mxu0 %v249
    %2015 = vmatpush.msra.mxu0 %v245
    %2016 = vmatpush.msra.mxu0 %v241
    %2017 = vmatpush.msra.mxu0 %v237
    %2018 = vmatpush.msra.mxu0 %v233
    %2019 = vmatpush.msra.mxu0 %v229
    %2020 = vmatpush.msra.mxu0 %v225
    %2021 = vmatmul.f32.gmra.mxu0 0.0
    %v2022 = vpop.f32.mrf.mxu0
    %v2023 = vadd.f32 0.0, %v2022
    %2024 = vdwg.mxu0
    %2025 = vmatpush.msra.mxu0 %v286
    %2026 = vmatpush.msra.mxu0 %v282
    %2027 = vmatpush.msra.mxu0 %v278
    %2028 = vmatpush.msra.mxu0 %v274
    %2029 = vmatpush.msra.mxu0 %v270
    %2030 = vmatpush.msra.mxu0 %v266
    %2031 = vmatpush.msra.mxu0 %v262
    %2032 = vmatpush.msra.mxu0 %v258
    %2033 = vmatpush.msra.mxu0 %v254
    %2034 = vmatpush.msra.mxu0 %v250
    %2035 = vmatpush.msra.mxu0 %v246
    %2036 = vmatpush.msra.mxu0 %v242
    %2037 = vmatpush.msra.mxu0 %v238
    %2038 = vmatpush.msra.mxu0 %v234
    %2039 = vmatpush.msra.mxu0 %v230
    %2040 = vmatpush.msra.mxu0 %v226
    %2041 = vmatmul.f32.gmra.mxu0 0.0
    %v2042 = vpop.f32.mrf.mxu0
    %v2043 = vadd.f32 0.0, %v2042
    %2044 = vdwg.mxu0
    %2045 = vmatpush.msra.mxu0 %v287
    %2046 = vmatpush.msra.mxu0 %v283
    %2047 = vmatpush.msra.mxu0 %v279
    %2048 = vmatpush.msra.mxu0 %v275
    %2049 = vmatpush.msra.mxu0 %v271
    %2050 = vmatpush.msra.mxu0 %v267
    %2051 = vmatpush.msra.mxu0 %v263
    %2052 = vmatpush.msra.mxu0 %v259
    %2053 = vmatpush.msra.mxu0 %v255
    %2054 = vmatpush.msra.mxu0 %v251
    %2055 = vmatpush.msra.mxu0 %v247
    %2056 = vmatpush.msra.mxu0 %v243
    %2057 = vmatpush.msra.mxu0 %v239
    %2058 = vmatpush.msra.mxu0 %v235
    %2059 = vmatpush.msra.mxu0 %v231
    %2060 = vmatpush.msra.mxu0 %v227
    %2061 = vmatmul.f32.gmra.mxu0 0.0
    %v2062 = vpop.f32.mrf.mxu0
    %v2063 = vadd.f32 0.0, %v2062
    %2064 = vdwg.mxu0
    %2065 = vmatpush.msra.mxu0 %v288
    %2066 = vmatpush.msra.mxu0 %v284
    %2067 = vmatpush.msra.mxu0 %v280
    %2068 = vmatpush.msra.mxu0 %v276
    %2069 = vmatpush.msra.mxu0 %v272
    %2070 = vmatpush.msra.mxu0 %v268
    %2071 = vmatpush.msra.mxu0 %v264
    %2072 = vmatpush.msra.mxu0 %v260
    %2073 = vmatpush.msra.mxu0 %v256
    %2074 = vmatpush.msra.mxu0 %v252
    %2075 = vmatpush.msra.mxu0 %v248
    %2076 = vmatpush.msra.mxu0 %v244
    %2077 = vmatpush.msra.mxu0 %v240
    %2078 = vmatpush.msra.mxu0 %v236
    %2079 = vmatpush.msra.mxu0 %v232
    %2080 = vmatpush.msra.mxu0 %v228
    %2081 = vmatmul.f32.gmra.mxu0 0.0
    %v2082 = vpop.f32.mrf.mxu0
    %v2083 = vadd.f32 0.0, %v2082
    %2084 = vdwg.mxu0
    %v2085 = vadd.f32 %v2001, %v2023
    %v2086 = vadd.f32 %v2002, %v2043
    %v2087 = vadd.f32 %v2003, %v2063
    %v2088 = vadd.f32 %v2004, %v2083
    %v2089 = vxor.u32 %v2085, 2147483648
    %v2090 = vxor.u32 %v2086, 2147483648
    %v2091 = vmul.f32 %v2089, 1.442695
    %v2092 = vpow.pop %v2091
    %v2093 = vmul.f32 %v2090, 1.442695
    %v2094 = vpow.pop %v2093
    %v2095 = vadd.f32 %v2092, 1.0
    %v2096 = vadd.f32 %v2094, 1.0
    %v2097 = vrcp.pop %v2095
    %v2098 = vmul.f32 %v2095, %v2097
    %v2099 = vsub.f32 1.0, %v2098
    %v2100 = vmul.f32 %v2097, %v2099
    %v2101 = vadd.f32 %v2097, %v2100
    %vm2102 = vweird.f32 %v2095
    %vm2103 = vweird.f32 %v2097
    %vm2104 = vmor %vm2102, %vm2103
    %v2105 = vsel %vm2104, %v2097, %v2101
    %v2106 = vand.u32 2147483647, %v2095
    %vm2107 = vcmp.eq.f32.partialorder %v2106, 8.507059e+37
    %v2108 = vand.u32 %v2095, 2147483648
    %v2109 = vor.u32 1.1754944e-38, %v2108
    %v2110 = vsel %vm2107, %v2109, %v2105
    %v2111 = vmul.f32 1.0, %v2110
    %v2112 = vrcp.pop %v2096
    %v2113 = vmul.f32 %v2096, %v2112
    %v2114 = vsub.f32 1.0, %v2113
    %v2115 = vmul.f32 %v2112, %v2114
    %v2116 = vadd.f32 %v2112, %v2115
    %vm2117 = vweird.f32 %v2096
    %vm2118 = vweird.f32 %v2112
    %vm2119 = vmor %vm2117, %vm2118
    %v2120 = vsel %vm2119, %v2112, %v2116
    %v2121 = vand.u32 2147483647, %v2096
    %vm2122 = vcmp.eq.f32.partialorder %v2121, 8.507059e+37
    %v2123 = vand.u32 %v2096, 2147483648
    %v2124 = vor.u32 1.1754944e-38, %v2123
    %v2125 = vsel %vm2122, %v2124, %v2120
    %v2126 = vmul.f32 1.0, %v2125
    %v2127 = vtanh.pop %v2087
    %v2128 = vxor.u32 %v2088, 2147483648
    %v2129 = vmul.f32 %v2128, 1.442695
    %v2130 = vpow.pop %v2129
    %v2131 = vadd.f32 %v2130, 1.0
    %v2132 = vrcp.pop %v2131
    %v2133 = vmul.f32 %v2131, %v2132
    %v2134 = vsub.f32 1.0, %v2133
    %v2135 = vmul.f32 %v2132, %v2134
    %v2136 = vadd.f32 %v2132, %v2135
    %vm2137 = vweird.f32 %v2131
    %vm2138 = vweird.f32 %v2132
    %vm2139 = vmor %vm2137, %vm2138
    %v2140 = vsel %vm2139, %v2132, %v2136
    %v2141 = vand.u32 2147483647, %v2131
    %vm2142 = vcmp.eq.f32.partialorder %v2141, 8.507059e+37
    %v2143 = vand.u32 %v2131, 2147483648
    %v2144 = vor.u32 1.1754944e-38, %v2143
    %v2145 = vsel %vm2142, %v2144, %v2140
    %v2146 = vmul.f32 1.0, %v2145
    %v2147 = vmul.f32 %v2126, 0.0
    %v2148 = vmul.f32 %v2111, %v2127
    %v2149 = vadd.f32 %v2147, %v2148
    %v2150 = vtanh.pop %v2149
    %v2151 = vmul.f32 %v2146, %v2150
    %v2152 = vld [vmem:[%s710] sm:$0xff]
    %v2153 = vld [vmem:[%s710 + $0x8] sm:$0xff]
    %v2154 = vld [vmem:[%s710 + $0x10] sm:$0xff]
    %v2155 = vld [vmem:[%s710 + $0x18] sm:$0xff]
    %2156 = vmatpush.msra.mxu0 %v285
    %2157 = vmatpush.msra.mxu0 %v281
    %2158 = vmatpush.msra.mxu0 %v277
    %2159 = vmatpush.msra.mxu0 %v273
    %2160 = vmatpush.msra.mxu0 %v269
    %2161 = vmatpush.msra.mxu0 %v265
    %2162 = vmatpush.msra.mxu0 %v261
    %2163 = vmatpush.msra.mxu0 %v257
    %2164 = vmatpush.msra.mxu0 %v253
    %2165 = vmatpush.msra.mxu0 %v249
    %2166 = vmatpush.msra.mxu0 %v245
    %2167 = vmatpush.msra.mxu0 %v241
    %2168 = vmatpush.msra.mxu0 %v237
    %2169 = vmatpush.msra.mxu0 %v233
    %2170 = vmatpush.msra.mxu0 %v229
    %2171 = vmatpush.msra.mxu0 %v225
    %2172 = vmatmul.f32.gmra.mxu0 %v2151
    %v2173 = vpop.f32.mrf.mxu0
    %v2174 = vadd.f32 0.0, %v2173
    %2175 = vdwg.mxu0
    %2176 = vmatpush.msra.mxu0 %v286
    %2177 = vmatpush.msra.mxu0 %v282
    %2178 = vmatpush.msra.mxu0 %v278
    %2179 = vmatpush.msra.mxu0 %v274
    %2180 = vmatpush.msra.mxu0 %v270
    %2181 = vmatpush.msra.mxu0 %v266
    %2182 = vmatpush.msra.mxu0 %v262
    %2183 = vmatpush.msra.mxu0 %v258
    %2184 = vmatpush.msra.mxu0 %v254
    %2185 = vmatpush.msra.mxu0 %v250
    %2186 = vmatpush.msra.mxu0 %v246
    %2187 = vmatpush.msra.mxu0 %v242
    %2188 = vmatpush.msra.mxu0 %v238
    %2189 = vmatpush.msra.mxu0 %v234
    %2190 = vmatpush.msra.mxu0 %v230
    %2191 = vmatpush.msra.mxu0 %v226
    %2192 = vmatmul.f32.gmra.mxu0 %v2151
    %v2193 = vpop.f32.mrf.mxu0
    %v2194 = vadd.f32 0.0, %v2193
    %2195 = vdwg.mxu0
    %2196 = vmatpush.msra.mxu0 %v287
    %2197 = vmatpush.msra.mxu0 %v283
    %2198 = vmatpush.msra.mxu0 %v279
    %2199 = vmatpush.msra.mxu0 %v275
    %2200 = vmatpush.msra.mxu0 %v271
    %2201 = vmatpush.msra.mxu0 %v267
    %2202 = vmatpush.msra.mxu0 %v263
    %2203 = vmatpush.msra.mxu0 %v259
    %2204 = vmatpush.msra.mxu0 %v255
    %2205 = vmatpush.msra.mxu0 %v251
    %2206 = vmatpush.msra.mxu0 %v247
    %2207 = vmatpush.msra.mxu0 %v243
    %2208 = vmatpush.msra.mxu0 %v239
    %2209 = vmatpush.msra.mxu0 %v235
    %2210 = vmatpush.msra.mxu0 %v231
    %2211 = vmatpush.msra.mxu0 %v227
    %2212 = vmatmul.f32.gmra.mxu0 %v2151
    %v2213 = vpop.f32.mrf.mxu0
    %v2214 = vadd.f32 0.0, %v2213
    %2215 = vdwg.mxu0
    %2216 = vmatpush.msra.mxu0 %v288
    %2217 = vmatpush.msra.mxu0 %v284
    %2218 = vmatpush.msra.mxu0 %v280
    %2219 = vmatpush.msra.mxu0 %v276
    %2220 = vmatpush.msra.mxu0 %v272
    %2221 = vmatpush.msra.mxu0 %v268
    %2222 = vmatpush.msra.mxu0 %v264
    %2223 = vmatpush.msra.mxu0 %v260
    %2224 = vmatpush.msra.mxu0 %v256
    %2225 = vmatpush.msra.mxu0 %v252
    %2226 = vmatpush.msra.mxu0 %v248
    %2227 = vmatpush.msra.mxu0 %v244
    %2228 = vmatpush.msra.mxu0 %v240
    %2229 = vmatpush.msra.mxu0 %v236
    %2230 = vmatpush.msra.mxu0 %v232
    %2231 = vmatpush.msra.mxu0 %v228
    %2232 = vmatmul.f32.gmra.mxu0 %v2151
    %v2233 = vpop.f32.mrf.mxu0
    %v2234 = vadd.f32 0.0, %v2233
    %2235 = vdwg.mxu0
    %v2236 = vadd.f32 %v2152, %v2174
    %v2237 = vadd.f32 %v2153, %v2194
    %v2238 = vadd.f32 %v2154, %v2214
    %v2239 = vadd.f32 %v2155, %v2234
    %v2240 = vxor.u32 %v2236, 2147483648
    %v2241 = vxor.u32 %v2237, 2147483648
    %v2242 = vmul.f32 %v2240, 1.442695
    %v2243 = vpow.pop %v2242
    %v2244 = vmul.f32 %v2241, 1.442695
    %v2245 = vpow.pop %v2244
    %v2246 = vadd.f32 %v2243, 1.0
    %v2247 = vadd.f32 %v2245, 1.0
    %v2248 = vrcp.pop %v2246
    %v2249 = vmul.f32 %v2246, %v2248
    %v2250 = vsub.f32 1.0, %v2249
    %v2251 = vmul.f32 %v2248, %v2250
    %v2252 = vadd.f32 %v2248, %v2251
    %vm2253 = vweird.f32 %v2246
    %vm2254 = vweird.f32 %v2248
    %vm2255 = vmor %vm2253, %vm2254
    %v2256 = vsel %vm2255, %v2248, %v2252
    %v2257 = vand.u32 2147483647, %v2246
    %vm2258 = vcmp.eq.f32.partialorder %v2257, 8.507059e+37
    %v2259 = vand.u32 %v2246, 2147483648
    %v2260 = vor.u32 1.1754944e-38, %v2259
    %v2261 = vsel %vm2258, %v2260, %v2256
    %v2262 = vmul.f32 1.0, %v2261
    %v2263 = vrcp.pop %v2247
    %v2264 = vmul.f32 %v2247, %v2263
    %v2265 = vsub.f32 1.0, %v2264
    %v2266 = vmul.f32 %v2263, %v2265
    %v2267 = vadd.f32 %v2263, %v2266
    %vm2268 = vweird.f32 %v2247
    %vm2269 = vweird.f32 %v2263
    %vm2270 = vmor %vm2268, %vm2269
    %v2271 = vsel %vm2270, %v2263, %v2267
    %v2272 = vand.u32 2147483647, %v2247
    %vm2273 = vcmp.eq.f32.partialorder %v2272, 8.507059e+37
    %v2274 = vand.u32 %v2247, 2147483648
    %v2275 = vor.u32 1.1754944e-38, %v2274
    %v2276 = vsel %vm2273, %v2275, %v2271
    %v2277 = vmul.f32 1.0, %v2276
    %v2278 = vtanh.pop %v2238
    %v2279 = vxor.u32 %v2239, 2147483648
    %v2280 = vmul.f32 %v2279, 1.442695
    %v2281 = vpow.pop %v2280
    %v2282 = vadd.f32 %v2281, 1.0
    %v2283 = vrcp.pop %v2282
    %v2284 = vmul.f32 %v2282, %v2283
    %v2285 = vsub.f32 1.0, %v2284
    %v2286 = vmul.f32 %v2283, %v2285
    %v2287 = vadd.f32 %v2283, %v2286
    %vm2288 = vweird.f32 %v2282
    %vm2289 = vweird.f32 %v2283
    %vm2290 = vmor %vm2288, %vm2289
    %v2291 = vsel %vm2290, %v2283, %v2287
    %v2292 = vand.u32 2147483647, %v2282
    %vm2293 = vcmp.eq.f32.partialorder %v2292, 8.507059e+37
    %v2294 = vand.u32 %v2282, 2147483648
    %v2295 = vor.u32 1.1754944e-38, %v2294
    %v2296 = vsel %vm2293, %v2295, %v2291
    %v2297 = vmul.f32 1.0, %v2296
    %v2298 = vmul.f32 %v2277, %v2149
    %v2299 = vmul.f32 %v2262, %v2278
    %v2300 = vadd.f32 %v2298, %v2299
    %v2301 = vtanh.pop %v2300
    %v2302 = vmul.f32 %v2297, %v2301
    %v2303 = vld [vmem:[%s864] sm:$0xff]
    %v2304 = vld [vmem:[%s864 + $0x8] sm:$0xff]
    %v2305 = vld [vmem:[%s864 + $0x10] sm:$0xff]
    %v2306 = vld [vmem:[%s864 + $0x18] sm:$0xff]
    %2307 = vmatpush.msra.mxu0 %v285
    %2308 = vmatpush.msra.mxu0 %v281
    %2309 = vmatpush.msra.mxu0 %v277
    %2310 = vmatpush.msra.mxu0 %v273
    %2311 = vmatpush.msra.mxu0 %v269
    %2312 = vmatpush.msra.mxu0 %v265
    %2313 = vmatpush.msra.mxu0 %v261
    %2314 = vmatpush.msra.mxu0 %v257
    %2315 = vmatpush.msra.mxu0 %v253
    %2316 = vmatpush.msra.mxu0 %v249
    %2317 = vmatpush.msra.mxu0 %v245
    %2318 = vmatpush.msra.mxu0 %v241
    %2319 = vmatpush.msra.mxu0 %v237
    %2320 = vmatpush.msra.mxu0 %v233
    %2321 = vmatpush.msra.mxu0 %v229
    %2322 = vmatpush.msra.mxu0 %v225
    %2323 = vmatmul.f32.gmra.mxu0 %v2302
    %v2324 = vpop.f32.mrf.mxu0
    %v2325 = vadd.f32 0.0, %v2324
    %2326 = vdwg.mxu0
    %2327 = vmatpush.msra.mxu0 %v286
    %2328 = vmatpush.msra.mxu0 %v282
    %2329 = vmatpush.msra.mxu0 %v278
    %2330 = vmatpush.msra.mxu0 %v274
    %2331 = vmatpush.msra.mxu0 %v270
    %2332 = vmatpush.msra.mxu0 %v266
    %2333 = vmatpush.msra.mxu0 %v262
    %2334 = vmatpush.msra.mxu0 %v258
    %2335 = vmatpush.msra.mxu0 %v254
    %2336 = vmatpush.msra.mxu0 %v250
    %2337 = vmatpush.msra.mxu0 %v246
    %2338 = vmatpush.msra.mxu0 %v242
    %2339 = vmatpush.msra.mxu0 %v238
    %2340 = vmatpush.msra.mxu0 %v234
    %2341 = vmatpush.msra.mxu0 %v230
    %2342 = vmatpush.msra.mxu0 %v226
    %2343 = vmatmul.f32.gmra.mxu0 %v2302
    %v2344 = vpop.f32.mrf.mxu0
    %v2345 = vadd.f32 0.0, %v2344
    %2346 = vdwg.mxu0
    %2347 = vmatpush.msra.mxu0 %v287
    %2348 = vmatpush.msra.mxu0 %v283
    %2349 = vmatpush.msra.mxu0 %v279
    %2350 = vmatpush.msra.mxu0 %v275
    %2351 = vmatpush.msra.mxu0 %v271
    %2352 = vmatpush.msra.mxu0 %v267
    %2353 = vmatpush.msra.mxu0 %v263
    %2354 = vmatpush.msra.mxu0 %v259
    %2355 = vmatpush.msra.mxu0 %v255
    %2356 = vmatpush.msra.mxu0 %v251
    %2357 = vmatpush.msra.mxu0 %v247
    %2358 = vmatpush.msra.mxu0 %v243
    %2359 = vmatpush.msra.mxu0 %v239
    %2360 = vmatpush.msra.mxu0 %v235
    %2361 = vmatpush.msra.mxu0 %v231
    %2362 = vmatpush.msra.mxu0 %v227
    %2363 = vmatmul.f32.gmra.mxu0 %v2302
    %v2364 = vpop.f32.mrf.mxu0
    %v2365 = vadd.f32 0.0, %v2364
    %2366 = vdwg.mxu0
    %2367 = vmatpush.msra.mxu0 %v288
    %2368 = vmatpush.msra.mxu0 %v284
    %2369 = vmatpush.msra.mxu0 %v280
    %2370 = vmatpush.msra.mxu0 %v276
    %2371 = vmatpush.msra.mxu0 %v272
    %2372 = vmatpush.msra.mxu0 %v268
    %2373 = vmatpush.msra.mxu0 %v264
    %2374 = vmatpush.msra.mxu0 %v260
    %2375 = vmatpush.msra.mxu0 %v256
    %2376 = vmatpush.msra.mxu0 %v252
    %2377 = vmatpush.msra.mxu0 %v248
    %2378 = vmatpush.msra.mxu0 %v244
    %2379 = vmatpush.msra.mxu0 %v240
    %2380 = vmatpush.msra.mxu0 %v236
    %2381 = vmatpush.msra.mxu0 %v232
    %2382 = vmatpush.msra.mxu0 %v228
    %2383 = vmatmul.f32.gmra.mxu0 %v2302
    %v2384 = vpop.f32.mrf.mxu0
    %v2385 = vadd.f32 0.0, %v2384
    %2386 = vdwg.mxu0
    %v2387 = vadd.f32 %v2303, %v2325
    %v2388 = vadd.f32 %v2304, %v2345
    %v2389 = vadd.f32 %v2305, %v2365
    %v2390 = vadd.f32 %v2306, %v2385
    %v2391 = vxor.u32 %v2387, 2147483648
    %v2392 = vxor.u32 %v2388, 2147483648
    %v2393 = vmul.f32 %v2391, 1.442695
    %v2394 = vpow.pop %v2393
    %v2395 = vmul.f32 %v2392, 1.442695
    %v2396 = vpow.pop %v2395
    %v2397 = vadd.f32 %v2394, 1.0
    %v2398 = vadd.f32 %v2396, 1.0
    %v2399 = vrcp.pop %v2397
    %v2400 = vmul.f32 %v2397, %v2399
    %v2401 = vsub.f32 1.0, %v2400
    %v2402 = vmul.f32 %v2399, %v2401
    %v2403 = vadd.f32 %v2399, %v2402
    %vm2404 = vweird.f32 %v2397
    %vm2405 = vweird.f32 %v2399
    %vm2406 = vmor %vm2404, %vm2405
    %v2407 = vsel %vm2406, %v2399, %v2403
    %v2408 = vand.u32 2147483647, %v2397
    %vm2409 = vcmp.eq.f32.partialorder %v2408, 8.507059e+37
    %v2410 = vand.u32 %v2397, 2147483648
    %v2411 = vor.u32 1.1754944e-38, %v2410
    %v2412 = vsel %vm2409, %v2411, %v2407
    %v2413 = vmul.f32 1.0, %v2412
    %v2414 = vrcp.pop %v2398
    %v2415 = vmul.f32 %v2398, %v2414
    %v2416 = vsub.f32 1.0, %v2415
    %v2417 = vmul.f32 %v2414, %v2416
    %v2418 = vadd.f32 %v2414, %v2417
    %vm2419 = vweird.f32 %v2398
    %vm2420 = vweird.f32 %v2414
    %vm2421 = vmor %vm2419, %vm2420
    %v2422 = vsel %vm2421, %v2414, %v2418
    %v2423 = vand.u32 2147483647, %v2398
    %vm2424 = vcmp.eq.f32.partialorder %v2423, 8.507059e+37
    %v2425 = vand.u32 %v2398, 2147483648
    %v2426 = vor.u32 1.1754944e-38, %v2425
    %v2427 = vsel %vm2424, %v2426, %v2422
    %v2428 = vmul.f32 1.0, %v2427
    %v2429 = vtanh.pop %v2389
    %v2430 = vxor.u32 %v2390, 2147483648
    %v2431 = vmul.f32 %v2430, 1.442695
    %v2432 = vpow.pop %v2431
    %v2433 = vadd.f32 %v2432, 1.0
    %v2434 = vrcp.pop %v2433
    %v2435 = vmul.f32 %v2433, %v2434
    %v2436 = vsub.f32 1.0, %v2435
    %v2437 = vmul.f32 %v2434, %v2436
    %v2438 = vadd.f32 %v2434, %v2437
    %vm2439 = vweird.f32 %v2433
    %vm2440 = vweird.f32 %v2434
    %vm2441 = vmor %vm2439, %vm2440
    %v2442 = vsel %vm2441, %v2434, %v2438
    %v2443 = vand.u32 2147483647, %v2433
    %vm2444 = vcmp.eq.f32.partialorder %v2443, 8.507059e+37
    %v2445 = vand.u32 %v2433, 2147483648
    %v2446 = vor.u32 1.1754944e-38, %v2445
    %v2447 = vsel %vm2444, %v2446, %v2442
    %v2448 = vmul.f32 1.0, %v2447
    %v2449 = vmul.f32 %v2428, %v2300
    %v2450 = vmul.f32 %v2413, %v2429
    %v2451 = vadd.f32 %v2449, %v2450
    %v2452 = vtanh.pop %v2451
    %v2453 = vmul.f32 %v2448, %v2452
    %v2454 = vld [vmem:[%s1018] sm:$0xff]
    %v2455 = vld [vmem:[%s1018 + $0x8] sm:$0xff]
    %v2456 = vld [vmem:[%s1018 + $0x10] sm:$0xff]
    %v2457 = vld [vmem:[%s1018 + $0x18] sm:$0xff]
    %2458 = vmatpush.msra.mxu0 %v285
    %2459 = vmatpush.msra.mxu0 %v281
    %2460 = vmatpush.msra.mxu0 %v277
    %2461 = vmatpush.msra.mxu0 %v273
    %2462 = vmatpush.msra.mxu0 %v269
    %2463 = vmatpush.msra.mxu0 %v265
    %2464 = vmatpush.msra.mxu0 %v261
    %2465 = vmatpush.msra.mxu0 %v257
    %2466 = vmatpush.msra.mxu0 %v253
    %2467 = vmatpush.msra.mxu0 %v249
    %2468 = vmatpush.msra.mxu0 %v245
    %2469 = vmatpush.msra.mxu0 %v241
    %2470 = vmatpush.msra.mxu0 %v237
    %2471 = vmatpush.msra.mxu0 %v233
    %2472 = vmatpush.msra.mxu0 %v229
    %2473 = vmatpush.msra.mxu0 %v225
    %2474 = vmatmul.f32.gmra.mxu0 %v2453
    %v2475 = vpop.f32.mrf.mxu0
    %v2476 = vadd.f32 0.0, %v2475
    %2477 = vdwg.mxu0
    %2478 = vmatpush.msra.mxu0 %v286
    %2479 = vmatpush.msra.mxu0 %v282
    %2480 = vmatpush.msra.mxu0 %v278
    %2481 = vmatpush.msra.mxu0 %v274
    %2482 = vmatpush.msra.mxu0 %v270
    %2483 = vmatpush.msra.mxu0 %v266
    %2484 = vmatpush.msra.mxu0 %v262
    %2485 = vmatpush.msra.mxu0 %v258
    %2486 = vmatpush.msra.mxu0 %v254
    %2487 = vmatpush.msra.mxu0 %v250
    %2488 = vmatpush.msra.mxu0 %v246
    %2489 = vmatpush.msra.mxu0 %v242
    %2490 = vmatpush.msra.mxu0 %v238
    %2491 = vmatpush.msra.mxu0 %v234
    %2492 = vmatpush.msra.mxu0 %v230
    %2493 = vmatpush.msra.mxu0 %v226
    %2494 = vmatmul.f32.gmra.mxu0 %v2453
    %v2495 = vpop.f32.mrf.mxu0
    %v2496 = vadd.f32 0.0, %v2495
    %2497 = vdwg.mxu0
    %2498 = vmatpush.msra.mxu0 %v287
    %2499 = vmatpush.msra.mxu0 %v283
    %2500 = vmatpush.msra.mxu0 %v279
    %2501 = vmatpush.msra.mxu0 %v275
    %2502 = vmatpush.msra.mxu0 %v271
    %2503 = vmatpush.msra.mxu0 %v267
    %2504 = vmatpush.msra.mxu0 %v263
    %2505 = vmatpush.msra.mxu0 %v259
    %2506 = vmatpush.msra.mxu0 %v255
    %2507 = vmatpush.msra.mxu0 %v251
    %2508 = vmatpush.msra.mxu0 %v247
    %2509 = vmatpush.msra.mxu0 %v243
    %2510 = vmatpush.msra.mxu0 %v239
    %2511 = vmatpush.msra.mxu0 %v235
    %2512 = vmatpush.msra.mxu0 %v231
    %2513 = vmatpush.msra.mxu0 %v227
    %2514 = vmatmul.f32.gmra.mxu0 %v2453
    %v2515 = vpop.f32.mrf.mxu0
    %v2516 = vadd.f32 0.0, %v2515
    %2517 = vdwg.mxu0
    %2518 = vmatpush.msra.mxu0 %v288
    %2519 = vmatpush.msra.mxu0 %v284
    %2520 = vmatpush.msra.mxu0 %v280
    %2521 = vmatpush.msra.mxu0 %v276
    %2522 = vmatpush.msra.mxu0 %v272
    %2523 = vmatpush.msra.mxu0 %v268
    %2524 = vmatpush.msra.mxu0 %v264
    %2525 = vmatpush.msra.mxu0 %v260
    %2526 = vmatpush.msra.mxu0 %v256
    %2527 = vmatpush.msra.mxu0 %v252
    %2528 = vmatpush.msra.mxu0 %v248
    %2529 = vmatpush.msra.mxu0 %v244
    %2530 = vmatpush.msra.mxu0 %v240
    %2531 = vmatpush.msra.mxu0 %v236
    %2532 = vmatpush.msra.mxu0 %v232
    %2533 = vmatpush.msra.mxu0 %v228
    %2534 = vmatmul.f32.gmra.mxu0 %v2453
    %v2535 = vpop.f32.mrf.mxu0
    %v2536 = vadd.f32 0.0, %v2535
    %2537 = vdwg.mxu0
    %v2538 = vadd.f32 %v2454, %v2476
    %v2539 = vadd.f32 %v2455, %v2496
    %v2540 = vadd.f32 %v2456, %v2516
    %v2541 = vadd.f32 %v2457, %v2536
    %v2542 = vxor.u32 %v2538, 2147483648
    %v2543 = vxor.u32 %v2539, 2147483648
    %v2544 = vmul.f32 %v2542, 1.442695
    %v2545 = vpow.pop %v2544
    %v2546 = vmul.f32 %v2543, 1.442695
    %v2547 = vpow.pop %v2546
    %v2548 = vadd.f32 %v2545, 1.0
    %v2549 = vadd.f32 %v2547, 1.0
    %v2550 = vrcp.pop %v2548
    %v2551 = vmul.f32 %v2548, %v2550
    %v2552 = vsub.f32 1.0, %v2551
    %v2553 = vmul.f32 %v2550, %v2552
    %v2554 = vadd.f32 %v2550, %v2553
    %vm2555 = vweird.f32 %v2548
    %vm2556 = vweird.f32 %v2550
    %vm2557 = vmor %vm2555, %vm2556
    %v2558 = vsel %vm2557, %v2550, %v2554
    %v2559 = vand.u32 2147483647, %v2548
    %vm2560 = vcmp.eq.f32.partialorder %v2559, 8.507059e+37
    %v2561 = vand.u32 %v2548, 2147483648
    %v2562 = vor.u32 1.1754944e-38, %v2561
    %v2563 = vsel %vm2560, %v2562, %v2558
    %v2564 = vmul.f32 1.0, %v2563
    %v2565 = vrcp.pop %v2549
    %v2566 = vmul.f32 %v2549, %v2565
    %v2567 = vsub.f32 1.0, %v2566
    %v2568 = vmul.f32 %v2565, %v2567
    %v2569 = vadd.f32 %v2565, %v2568
    %vm2570 = vweird.f32 %v2549
    %vm2571 = vweird.f32 %v2565
    %vm2572 = vmor %vm2570, %vm2571
    %v2573 = vsel %vm2572, %v2565, %v2569
    %v2574 = vand.u32 2147483647, %v2549
    %vm2575 = vcmp.eq.f32.partialorder %v2574, 8.507059e+37
    %v2576 = vand.u32 %v2549, 2147483648
    %v2577 = vor.u32 1.1754944e-38, %v2576
    %v2578 = vsel %vm2575, %v2577, %v2573
    %v2579 = vmul.f32 1.0, %v2578
    %v2580 = vtanh.pop %v2540
    %v2581 = vxor.u32 %v2541, 2147483648
    %v2582 = vmul.f32 %v2581, 1.442695
    %v2583 = vpow.pop %v2582
    %v2584 = vadd.f32 %v2583, 1.0
    %v2585 = vrcp.pop %v2584
    %v2586 = vmul.f32 %v2584, %v2585
    %v2587 = vsub.f32 1.0, %v2586
    %v2588 = vmul.f32 %v2585, %v2587
    %v2589 = vadd.f32 %v2585, %v2588
    %vm2590 = vweird.f32 %v2584
    %vm2591 = vweird.f32 %v2585
    %vm2592 = vmor %vm2590, %vm2591
    %v2593 = vsel %vm2592, %v2585, %v2589
    %v2594 = vand.u32 2147483647, %v2584
    %vm2595 = vcmp.eq.f32.partialorder %v2594, 8.507059e+37
    %v2596 = vand.u32 %v2584, 2147483648
    %v2597 = vor.u32 1.1754944e-38, %v2596
    %v2598 = vsel %vm2595, %v2597, %v2593
    %v2599 = vmul.f32 1.0, %v2598
    %v2600 = vmul.f32 %v2579, %v2451
    %v2601 = vmul.f32 %v2564, %v2580
    %v2602 = vadd.f32 %v2600, %v2601
    %v2603 = vtanh.pop %v2602
    %v2604 = vmul.f32 %v2599, %v2603
    %v2605 = vld [vmem:[%s1172] sm:$0xff]
    %v2606 = vld [vmem:[%s1172 + $0x8] sm:$0xff]
    %v2607 = vld [vmem:[%s1172 + $0x10] sm:$0xff]
    %v2608 = vld [vmem:[%s1172 + $0x18] sm:$0xff]
    %2609 = vmatpush.msra.mxu0 %v285
    %2610 = vmatpush.msra.mxu0 %v281
    %2611 = vmatpush.msra.mxu0 %v277
    %2612 = vmatpush.msra.mxu0 %v273
    %2613 = vmatpush.msra.mxu0 %v269
    %2614 = vmatpush.msra.mxu0 %v265
    %2615 = vmatpush.msra.mxu0 %v261
    %2616 = vmatpush.msra.mxu0 %v257
    %2617 = vmatpush.msra.mxu0 %v253
    %2618 = vmatpush.msra.mxu0 %v249
    %2619 = vmatpush.msra.mxu0 %v245
    %2620 = vmatpush.msra.mxu0 %v241
    %2621 = vmatpush.msra.mxu0 %v237
    %2622 = vmatpush.msra.mxu0 %v233
    %2623 = vmatpush.msra.mxu0 %v229
    %2624 = vmatpush.msra.mxu0 %v225
    %2625 = vmatmul.f32.gmra.mxu0 %v2604
    %v2626 = vpop.f32.mrf.mxu0
    %v2627 = vadd.f32 0.0, %v2626
    %2628 = vdwg.mxu0
    %2629 = vmatpush.msra.mxu0 %v286
    %2630 = vmatpush.msra.mxu0 %v282
    %2631 = vmatpush.msra.mxu0 %v278
    %2632 = vmatpush.msra.mxu0 %v274
    %2633 = vmatpush.msra.mxu0 %v270
    %2634 = vmatpush.msra.mxu0 %v266
    %2635 = vmatpush.msra.mxu0 %v262
    %2636 = vmatpush.msra.mxu0 %v258
    %2637 = vmatpush.msra.mxu0 %v254
    %2638 = vmatpush.msra.mxu0 %v250
    %2639 = vmatpush.msra.mxu0 %v246
    %2640 = vmatpush.msra.mxu0 %v242
    %2641 = vmatpush.msra.mxu0 %v238
    %2642 = vmatpush.msra.mxu0 %v234
    %2643 = vmatpush.msra.mxu0 %v230
    %2644 = vmatpush.msra.mxu0 %v226
    %2645 = vmatmul.f32.gmra.mxu0 %v2604
    %v2646 = vpop.f32.mrf.mxu0
    %v2647 = vadd.f32 0.0, %v2646
    %2648 = vdwg.mxu0
    %2649 = vmatpush.msra.mxu0 %v287
    %2650 = vmatpush.msra.mxu0 %v283
    %2651 = vmatpush.msra.mxu0 %v279
    %2652 = vmatpush.msra.mxu0 %v275
    %2653 = vmatpush.msra.mxu0 %v271
    %2654 = vmatpush.msra.mxu0 %v267
    %2655 = vmatpush.msra.mxu0 %v263
    %2656 = vmatpush.msra.mxu0 %v259
    %2657 = vmatpush.msra.mxu0 %v255
    %2658 = vmatpush.msra.mxu0 %v251
    %2659 = vmatpush.msra.mxu0 %v247
    %2660 = vmatpush.msra.mxu0 %v243
    %2661 = vmatpush.msra.mxu0 %v239
    %2662 = vmatpush.msra.mxu0 %v235
    %2663 = vmatpush.msra.mxu0 %v231
    %2664 = vmatpush.msra.mxu0 %v227
    %2665 = vmatmul.f32.gmra.mxu0 %v2604
    %v2666 = vpop.f32.mrf.mxu0
    %v2667 = vadd.f32 0.0, %v2666
    %2668 = vdwg.mxu0
    %2669 = vmatpush.msra.mxu0 %v288
    %2670 = vmatpush.msra.mxu0 %v284
    %2671 = vmatpush.msra.mxu0 %v280
    %2672 = vmatpush.msra.mxu0 %v276
    %2673 = vmatpush.msra.mxu0 %v272
    %2674 = vmatpush.msra.mxu0 %v268
    %2675 = vmatpush.msra.mxu0 %v264
    %2676 = vmatpush.msra.mxu0 %v260
    %2677 = vmatpush.msra.mxu0 %v256
    %2678 = vmatpush.msra.mxu0 %v252
    %2679 = vmatpush.msra.mxu0 %v248
    %2680 = vmatpush.msra.mxu0 %v244
    %2681 = vmatpush.msra.mxu0 %v240
    %2682 = vmatpush.msra.mxu0 %v236
    %2683 = vmatpush.msra.mxu0 %v232
    %2684 = vmatpush.msra.mxu0 %v228
    %2685 = vmatmul.f32.gmra.mxu0 %v2604
    %v2686 = vpop.f32.mrf.mxu0
    %v2687 = vadd.f32 0.0, %v2686
    %2688 = vdwg.mxu0
    %v2689 = vadd.f32 %v2605, %v2627
    %v2690 = vadd.f32 %v2606, %v2647
    %v2691 = vadd.f32 %v2607, %v2667
    %v2692 = vadd.f32 %v2608, %v2687
    %v2693 = vxor.u32 %v2689, 2147483648
    %v2694 = vxor.u32 %v2690, 2147483648
    %v2695 = vmul.f32 %v2693, 1.442695
    %v2696 = vpow.pop %v2695
    %v2697 = vmul.f32 %v2694, 1.442695
    %v2698 = vpow.pop %v2697
    %v2699 = vadd.f32 %v2696, 1.0
    %v2700 = vadd.f32 %v2698, 1.0
    %v2701 = vrcp.pop %v2699
    %v2702 = vmul.f32 %v2699, %v2701
    %v2703 = vsub.f32 1.0, %v2702
    %v2704 = vmul.f32 %v2701, %v2703
    %v2705 = vadd.f32 %v2701, %v2704
    %vm2706 = vweird.f32 %v2699
    %vm2707 = vweird.f32 %v2701
    %vm2708 = vmor %vm2706, %vm2707
    %v2709 = vsel %vm2708, %v2701, %v2705
    %v2710 = vand.u32 2147483647, %v2699
    %vm2711 = vcmp.eq.f32.partialorder %v2710, 8.507059e+37
    %v2712 = vand.u32 %v2699, 2147483648
    %v2713 = vor.u32 1.1754944e-38, %v2712
    %v2714 = vsel %vm2711, %v2713, %v2709
    %v2715 = vmul.f32 1.0, %v2714
    %v2716 = vrcp.pop %v2700
    %v2717 = vmul.f32 %v2700, %v2716
    %v2718 = vsub.f32 1.0, %v2717
    %v2719 = vmul.f32 %v2716, %v2718
    %v2720 = vadd.f32 %v2716, %v2719
    %vm2721 = vweird.f32 %v2700
    %vm2722 = vweird.f32 %v2716
    %vm2723 = vmor %vm2721, %vm2722
    %v2724 = vsel %vm2723, %v2716, %v2720
    %v2725 = vand.u32 2147483647, %v2700
    %vm2726 = vcmp.eq.f32.partialorder %v2725, 8.507059e+37
    %v2727 = vand.u32 %v2700, 2147483648
    %v2728 = vor.u32 1.1754944e-38, %v2727
    %v2729 = vsel %vm2726, %v2728, %v2724
    %v2730 = vmul.f32 1.0, %v2729
    %v2731 = vtanh.pop %v2691
    %v2732 = vxor.u32 %v2692, 2147483648
    %v2733 = vmul.f32 %v2732, 1.442695
    %v2734 = vpow.pop %v2733
    %v2735 = vadd.f32 %v2734, 1.0
    %v2736 = vrcp.pop %v2735
    %v2737 = vmul.f32 %v2735, %v2736
    %v2738 = vsub.f32 1.0, %v2737
    %v2739 = vmul.f32 %v2736, %v2738
    %v2740 = vadd.f32 %v2736, %v2739
    %vm2741 = vweird.f32 %v2735
    %vm2742 = vweird.f32 %v2736
    %vm2743 = vmor %vm2741, %vm2742
    %v2744 = vsel %vm2743, %v2736, %v2740
    %v2745 = vand.u32 2147483647, %v2735
    %vm2746 = vcmp.eq.f32.partialorder %v2745, 8.507059e+37
    %v2747 = vand.u32 %v2735, 2147483648
    %v2748 = vor.u32 1.1754944e-38, %v2747
    %v2749 = vsel %vm2746, %v2748, %v2744
    %v2750 = vmul.f32 1.0, %v2749
    %v2751 = vmul.f32 %v2730, %v2602
    %v2752 = vmul.f32 %v2715, %v2731
    %v2753 = vadd.f32 %v2751, %v2752
    %v2754 = vtanh.pop %v2753
    %v2755 = vmul.f32 %v2750, %v2754
    %v2756 = vld [vmem:[%s1326] sm:$0xff]
    %v2757 = vld [vmem:[%s1326 + $0x8] sm:$0xff]
    %v2758 = vld [vmem:[%s1326 + $0x10] sm:$0xff]
    %v2759 = vld [vmem:[%s1326 + $0x18] sm:$0xff]
    %2760 = vmatpush.msra.mxu0 %v285
    %2761 = vmatpush.msra.mxu0 %v281
    %2762 = vmatpush.msra.mxu0 %v277
    %2763 = vmatpush.msra.mxu0 %v273
    %2764 = vmatpush.msra.mxu0 %v269
    %2765 = vmatpush.msra.mxu0 %v265
    %2766 = vmatpush.msra.mxu0 %v261
    %2767 = vmatpush.msra.mxu0 %v257
    %2768 = vmatpush.msra.mxu0 %v253
    %2769 = vmatpush.msra.mxu0 %v249
    %2770 = vmatpush.msra.mxu0 %v245
    %2771 = vmatpush.msra.mxu0 %v241
    %2772 = vmatpush.msra.mxu0 %v237
    %2773 = vmatpush.msra.mxu0 %v233
    %2774 = vmatpush.msra.mxu0 %v229
    %2775 = vmatpush.msra.mxu0 %v225
    %2776 = vmatmul.f32.gmra.mxu0 %v2755
    %v2777 = vpop.f32.mrf.mxu0
    %v2778 = vadd.f32 0.0, %v2777
    %2779 = vdwg.mxu0
    %2780 = vmatpush.msra.mxu0 %v286
    %2781 = vmatpush.msra.mxu0 %v282
    %2782 = vmatpush.msra.mxu0 %v278
    %2783 = vmatpush.msra.mxu0 %v274
    %2784 = vmatpush.msra.mxu0 %v270
    %2785 = vmatpush.msra.mxu0 %v266
    %2786 = vmatpush.msra.mxu0 %v262
    %2787 = vmatpush.msra.mxu0 %v258
    %2788 = vmatpush.msra.mxu0 %v254
    %2789 = vmatpush.msra.mxu0 %v250
    %2790 = vmatpush.msra.mxu0 %v246
    %2791 = vmatpush.msra.mxu0 %v242
    %2792 = vmatpush.msra.mxu0 %v238
    %2793 = vmatpush.msra.mxu0 %v234
    %2794 = vmatpush.msra.mxu0 %v230
    %2795 = vmatpush.msra.mxu0 %v226
    %2796 = vmatmul.f32.gmra.mxu0 %v2755
    %v2797 = vpop.f32.mrf.mxu0
    %v2798 = vadd.f32 0.0, %v2797
    %2799 = vdwg.mxu0
    %2800 = vmatpush.msra.mxu0 %v287
    %2801 = vmatpush.msra.mxu0 %v283
    %2802 = vmatpush.msra.mxu0 %v279
    %2803 = vmatpush.msra.mxu0 %v275
    %2804 = vmatpush.msra.mxu0 %v271
    %2805 = vmatpush.msra.mxu0 %v267
    %2806 = vmatpush.msra.mxu0 %v263
    %2807 = vmatpush.msra.mxu0 %v259
    %2808 = vmatpush.msra.mxu0 %v255
    %2809 = vmatpush.msra.mxu0 %v251
    %2810 = vmatpush.msra.mxu0 %v247
    %2811 = vmatpush.msra.mxu0 %v243
    %2812 = vmatpush.msra.mxu0 %v239
    %2813 = vmatpush.msra.mxu0 %v235
    %2814 = vmatpush.msra.mxu0 %v231
    %2815 = vmatpush.msra.mxu0 %v227
    %2816 = vmatmul.f32.gmra.mxu0 %v2755
    %v2817 = vpop.f32.mrf.mxu0
    %v2818 = vadd.f32 0.0, %v2817
    %2819 = vdwg.mxu0
    %2820 = vmatpush.msra.mxu0 %v288
    %2821 = vmatpush.msra.mxu0 %v284
    %2822 = vmatpush.msra.mxu0 %v280
    %2823 = vmatpush.msra.mxu0 %v276
    %2824 = vmatpush.msra.mxu0 %v272
    %2825 = vmatpush.msra.mxu0 %v268
    %2826 = vmatpush.msra.mxu0 %v264
    %2827 = vmatpush.msra.mxu0 %v260
    %2828 = vmatpush.msra.mxu0 %v256
    %2829 = vmatpush.msra.mxu0 %v252
    %2830 = vmatpush.msra.mxu0 %v248
    %2831 = vmatpush.msra.mxu0 %v244
    %2832 = vmatpush.msra.mxu0 %v240
    %2833 = vmatpush.msra.mxu0 %v236
    %2834 = vmatpush.msra.mxu0 %v232
    %2835 = vmatpush.msra.mxu0 %v228
    %2836 = vmatmul.f32.gmra.mxu0 %v2755
    %v2837 = vpop.f32.mrf.mxu0
    %v2838 = vadd.f32 0.0, %v2837
    %2839 = vdwg.mxu0
    %v2840 = vadd.f32 %v2756, %v2778
    %v2841 = vadd.f32 %v2757, %v2798
    %v2842 = vadd.f32 %v2758, %v2818
    %v2843 = vadd.f32 %v2759, %v2838
    %v2844 = vxor.u32 %v2840, 2147483648
    %v2845 = vxor.u32 %v2841, 2147483648
    %v2846 = vmul.f32 %v2844, 1.442695
    %v2847 = vpow.pop %v2846
    %v2848 = vmul.f32 %v2845, 1.442695
    %v2849 = vpow.pop %v2848
    %v2850 = vadd.f32 %v2847, 1.0
    %v2851 = vadd.f32 %v2849, 1.0
    %v2852 = vrcp.pop %v2850
    %v2853 = vmul.f32 %v2850, %v2852
    %v2854 = vsub.f32 1.0, %v2853
    %v2855 = vmul.f32 %v2852, %v2854
    %v2856 = vadd.f32 %v2852, %v2855
    %vm2857 = vweird.f32 %v2850
    %vm2858 = vweird.f32 %v2852
    %vm2859 = vmor %vm2857, %vm2858
    %v2860 = vsel %vm2859, %v2852, %v2856
    %v2861 = vand.u32 2147483647, %v2850
    %vm2862 = vcmp.eq.f32.partialorder %v2861, 8.507059e+37
    %v2863 = vand.u32 %v2850, 2147483648
    %v2864 = vor.u32 1.1754944e-38, %v2863
    %v2865 = vsel %vm2862, %v2864, %v2860
    %v2866 = vmul.f32 1.0, %v2865
    %v2867 = vrcp.pop %v2851
    %v2868 = vmul.f32 %v2851, %v2867
    %v2869 = vsub.f32 1.0, %v2868
    %v2870 = vmul.f32 %v2867, %v2869
    %v2871 = vadd.f32 %v2867, %v2870
    %vm2872 = vweird.f32 %v2851
    %vm2873 = vweird.f32 %v2867
    %vm2874 = vmor %vm2872, %vm2873
    %v2875 = vsel %vm2874, %v2867, %v2871
    %v2876 = vand.u32 2147483647, %v2851
    %vm2877 = vcmp.eq.f32.partialorder %v2876, 8.507059e+37
    %v2878 = vand.u32 %v2851, 2147483648
    %v2879 = vor.u32 1.1754944e-38, %v2878
    %v2880 = vsel %vm2877, %v2879, %v2875
    %v2881 = vmul.f32 1.0, %v2880
    %v2882 = vtanh.pop %v2842
    %v2883 = vxor.u32 %v2843, 2147483648
    %v2884 = vmul.f32 %v2883, 1.442695
    %v2885 = vpow.pop %v2884
    %v2886 = vadd.f32 %v2885, 1.0
    %v2887 = vrcp.pop %v2886
    %v2888 = vmul.f32 %v2886, %v2887
    %v2889 = vsub.f32 1.0, %v2888
    %v2890 = vmul.f32 %v2887, %v2889
    %v2891 = vadd.f32 %v2887, %v2890
    %vm2892 = vweird.f32 %v2886
    %vm2893 = vweird.f32 %v2887
    %vm2894 = vmor %vm2892, %vm2893
    %v2895 = vsel %vm2894, %v2887, %v2891
    %v2896 = vand.u32 2147483647, %v2886
    %vm2897 = vcmp.eq.f32.partialorder %v2896, 8.507059e+37
    %v2898 = vand.u32 %v2886, 2147483648
    %v2899 = vor.u32 1.1754944e-38, %v2898
    %v2900 = vsel %vm2897, %v2899, %v2895
    %v2901 = vmul.f32 1.0, %v2900
    %v2902 = vmul.f32 %v2881, %v2753
    %v2903 = vmul.f32 %v2866, %v2882
    %v2904 = vadd.f32 %v2902, %v2903
    %v2905 = vtanh.pop %v2904
    %v2906 = vmul.f32 %v2901, %v2905
    %v2907 = vld [vmem:[%s1480] sm:$0xff]
    %v2908 = vld [vmem:[%s1480 + $0x8] sm:$0xff]
    %v2909 = vld [vmem:[%s1480 + $0x10] sm:$0xff]
    %v2910 = vld [vmem:[%s1480 + $0x18] sm:$0xff]
    %2911 = vmatpush.msra.mxu0 %v285
    %2912 = vmatpush.msra.mxu0 %v281
    %2913 = vmatpush.msra.mxu0 %v277
    %2914 = vmatpush.msra.mxu0 %v273
    %2915 = vmatpush.msra.mxu0 %v269
    %2916 = vmatpush.msra.mxu0 %v265
    %2917 = vmatpush.msra.mxu0 %v261
    %2918 = vmatpush.msra.mxu0 %v257
    %2919 = vmatpush.msra.mxu0 %v253
    %2920 = vmatpush.msra.mxu0 %v249
    %2921 = vmatpush.msra.mxu0 %v245
    %2922 = vmatpush.msra.mxu0 %v241
    %2923 = vmatpush.msra.mxu0 %v237
    %2924 = vmatpush.msra.mxu0 %v233
    %2925 = vmatpush.msra.mxu0 %v229
    %2926 = vmatpush.msra.mxu0 %v225
    %2927 = vmatmul.f32.gmra.mxu0 %v2906
    %v2928 = vpop.f32.mrf.mxu0
    %v2929 = vadd.f32 0.0, %v2928
    %2930 = vdwg.mxu0
    %2931 = vmatpush.msra.mxu0 %v286
    %2932 = vmatpush.msra.mxu0 %v282
    %2933 = vmatpush.msra.mxu0 %v278
    %2934 = vmatpush.msra.mxu0 %v274
    %2935 = vmatpush.msra.mxu0 %v270
    %2936 = vmatpush.msra.mxu0 %v266
    %2937 = vmatpush.msra.mxu0 %v262
    %2938 = vmatpush.msra.mxu0 %v258
    %2939 = vmatpush.msra.mxu0 %v254
    %2940 = vmatpush.msra.mxu0 %v250
    %2941 = vmatpush.msra.mxu0 %v246
    %2942 = vmatpush.msra.mxu0 %v242
    %2943 = vmatpush.msra.mxu0 %v238
    %2944 = vmatpush.msra.mxu0 %v234
    %2945 = vmatpush.msra.mxu0 %v230
    %2946 = vmatpush.msra.mxu0 %v226
    %2947 = vmatmul.f32.gmra.mxu0 %v2906
    %v2948 = vpop.f32.mrf.mxu0
    %v2949 = vadd.f32 0.0, %v2948
    %2950 = vdwg.mxu0
    %2951 = vmatpush.msra.mxu0 %v287
    %2952 = vmatpush.msra.mxu0 %v283
    %2953 = vmatpush.msra.mxu0 %v279
    %2954 = vmatpush.msra.mxu0 %v275
    %2955 = vmatpush.msra.mxu0 %v271
    %2956 = vmatpush.msra.mxu0 %v267
    %2957 = vmatpush.msra.mxu0 %v263
    %2958 = vmatpush.msra.mxu0 %v259
    %2959 = vmatpush.msra.mxu0 %v255
    %2960 = vmatpush.msra.mxu0 %v251
    %2961 = vmatpush.msra.mxu0 %v247
    %2962 = vmatpush.msra.mxu0 %v243
    %2963 = vmatpush.msra.mxu0 %v239
    %2964 = vmatpush.msra.mxu0 %v235
    %2965 = vmatpush.msra.mxu0 %v231
    %2966 = vmatpush.msra.mxu0 %v227
    %2967 = vmatmul.f32.gmra.mxu0 %v2906
    %v2968 = vpop.f32.mrf.mxu0
    %v2969 = vadd.f32 0.0, %v2968
    %2970 = vdwg.mxu0
    %2971 = vmatpush.msra.mxu0 %v288
    %2972 = vmatpush.msra.mxu0 %v284
    %2973 = vmatpush.msra.mxu0 %v280
    %2974 = vmatpush.msra.mxu0 %v276
    %2975 = vmatpush.msra.mxu0 %v272
    %2976 = vmatpush.msra.mxu0 %v268
    %2977 = vmatpush.msra.mxu0 %v264
    %2978 = vmatpush.msra.mxu0 %v260
    %2979 = vmatpush.msra.mxu0 %v256
    %2980 = vmatpush.msra.mxu0 %v252
    %2981 = vmatpush.msra.mxu0 %v248
    %2982 = vmatpush.msra.mxu0 %v244
    %2983 = vmatpush.msra.mxu0 %v240
    %2984 = vmatpush.msra.mxu0 %v236
    %2985 = vmatpush.msra.mxu0 %v232
    %2986 = vmatpush.msra.mxu0 %v228
    %2987 = vmatmul.f32.gmra.mxu0 %v2906
    %v2988 = vpop.f32.mrf.mxu0
    %v2989 = vadd.f32 0.0, %v2988
    %2990 = vdwg.mxu0
    %v2991 = vadd.f32 %v2907, %v2929
    %v2992 = vadd.f32 %v2908, %v2949
    %v2993 = vadd.f32 %v2909, %v2969
    %v2994 = vadd.f32 %v2910, %v2989
    %v2995 = vxor.u32 %v2991, 2147483648
    %v2996 = vxor.u32 %v2992, 2147483648
    %v2997 = vmul.f32 %v2995, 1.442695
    %v2998 = vpow.pop %v2997
    %v2999 = vmul.f32 %v2996, 1.442695
    %v3000 = vpow.pop %v2999
    %v3001 = vadd.f32 %v2998, 1.0
    %v3002 = vadd.f32 %v3000, 1.0
    %v3003 = vrcp.pop %v3001
    %v3004 = vmul.f32 %v3001, %v3003
    %v3005 = vsub.f32 1.0, %v3004
    %v3006 = vmul.f32 %v3003, %v3005
    %v3007 = vadd.f32 %v3003, %v3006
    %vm3008 = vweird.f32 %v3001
    %vm3009 = vweird.f32 %v3003
    %vm3010 = vmor %vm3008, %vm3009
    %v3011 = vsel %vm3010, %v3003, %v3007
    %v3012 = vand.u32 2147483647, %v3001
    %vm3013 = vcmp.eq.f32.partialorder %v3012, 8.507059e+37
    %v3014 = vand.u32 %v3001, 2147483648
    %v3015 = vor.u32 1.1754944e-38, %v3014
    %v3016 = vsel %vm3013, %v3015, %v3011
    %v3017 = vmul.f32 1.0, %v3016
    %v3018 = vrcp.pop %v3002
    %v3019 = vmul.f32 %v3002, %v3018
    %v3020 = vsub.f32 1.0, %v3019
    %v3021 = vmul.f32 %v3018, %v3020
    %v3022 = vadd.f32 %v3018, %v3021
    %vm3023 = vweird.f32 %v3002
    %vm3024 = vweird.f32 %v3018
    %vm3025 = vmor %vm3023, %vm3024
    %v3026 = vsel %vm3025, %v3018, %v3022
    %v3027 = vand.u32 2147483647, %v3002
    %vm3028 = vcmp.eq.f32.partialorder %v3027, 8.507059e+37
    %v3029 = vand.u32 %v3002, 2147483648
    %v3030 = vor.u32 1.1754944e-38, %v3029
    %v3031 = vsel %vm3028, %v3030, %v3026
    %v3032 = vmul.f32 1.0, %v3031
    %v3033 = vtanh.pop %v2993
    %v3034 = vxor.u32 %v2994, 2147483648
    %v3035 = vmul.f32 %v3034, 1.442695
    %v3036 = vpow.pop %v3035
    %v3037 = vadd.f32 %v3036, 1.0
    %v3038 = vrcp.pop %v3037
    %v3039 = vmul.f32 %v3037, %v3038
    %v3040 = vsub.f32 1.0, %v3039
    %v3041 = vmul.f32 %v3038, %v3040
    %v3042 = vadd.f32 %v3038, %v3041
    %vm3043 = vweird.f32 %v3037
    %vm3044 = vweird.f32 %v3038
    %vm3045 = vmor %vm3043, %vm3044
    %v3046 = vsel %vm3045, %v3038, %v3042
    %v3047 = vand.u32 2147483647, %v3037
    %vm3048 = vcmp.eq.f32.partialorder %v3047, 8.507059e+37
    %v3049 = vand.u32 %v3037, 2147483648
    %v3050 = vor.u32 1.1754944e-38, %v3049
    %v3051 = vsel %vm3048, %v3050, %v3046
    %v3052 = vmul.f32 1.0, %v3051
    %v3053 = vmul.f32 %v3032, %v2904
    %v3054 = vmul.f32 %v3017, %v3033
    %v3055 = vadd.f32 %v3053, %v3054
    %v3056 = vtanh.pop %v3055
    %v3057 = vmul.f32 %v3052, %v3056
    %v3058 = vld [vmem:[%s1634] sm:$0xff]
    %v3059 = vld [vmem:[%s1634 + $0x8] sm:$0xff]
    %v3060 = vld [vmem:[%s1634 + $0x10] sm:$0xff]
    %v3061 = vld [vmem:[%s1634 + $0x18] sm:$0xff]
    %3062 = vmatpush.msra.mxu0 %v285
    %3063 = vmatpush.msra.mxu0 %v281
    %3064 = vmatpush.msra.mxu0 %v277
    %3065 = vmatpush.msra.mxu0 %v273
    %3066 = vmatpush.msra.mxu0 %v269
    %3067 = vmatpush.msra.mxu0 %v265
    %3068 = vmatpush.msra.mxu0 %v261
    %3069 = vmatpush.msra.mxu0 %v257
    %3070 = vmatpush.msra.mxu0 %v253
    %3071 = vmatpush.msra.mxu0 %v249
    %3072 = vmatpush.msra.mxu0 %v245
    %3073 = vmatpush.msra.mxu0 %v241
    %3074 = vmatpush.msra.mxu0 %v237
    %3075 = vmatpush.msra.mxu0 %v233
    %3076 = vmatpush.msra.mxu0 %v229
    %3077 = vmatpush.msra.mxu0 %v225
    %3078 = vmatmul.f32.gmra.mxu0 %v3057
    %v3079 = vpop.f32.mrf.mxu0
    %v3080 = vadd.f32 0.0, %v3079
    %3081 = vdwg.mxu0
    %3082 = vmatpush.msra.mxu0 %v286
    %3083 = vmatpush.msra.mxu0 %v282
    %3084 = vmatpush.msra.mxu0 %v278
    %3085 = vmatpush.msra.mxu0 %v274
    %3086 = vmatpush.msra.mxu0 %v270
    %3087 = vmatpush.msra.mxu0 %v266
    %3088 = vmatpush.msra.mxu0 %v262
    %3089 = vmatpush.msra.mxu0 %v258
    %3090 = vmatpush.msra.mxu0 %v254
    %3091 = vmatpush.msra.mxu0 %v250
    %3092 = vmatpush.msra.mxu0 %v246
    %3093 = vmatpush.msra.mxu0 %v242
    %3094 = vmatpush.msra.mxu0 %v238
    %3095 = vmatpush.msra.mxu0 %v234
    %3096 = vmatpush.msra.mxu0 %v230
    %3097 = vmatpush.msra.mxu0 %v226
    %3098 = vmatmul.f32.gmra.mxu0 %v3057
    %v3099 = vpop.f32.mrf.mxu0
    %v3100 = vadd.f32 0.0, %v3099
    %3101 = vdwg.mxu0
    %3102 = vmatpush.msra.mxu0 %v287
    %3103 = vmatpush.msra.mxu0 %v283
    %3104 = vmatpush.msra.mxu0 %v279
    %3105 = vmatpush.msra.mxu0 %v275
    %3106 = vmatpush.msra.mxu0 %v271
    %3107 = vmatpush.msra.mxu0 %v267
    %3108 = vmatpush.msra.mxu0 %v263
    %3109 = vmatpush.msra.mxu0 %v259
    %3110 = vmatpush.msra.mxu0 %v255
    %3111 = vmatpush.msra.mxu0 %v251
    %3112 = vmatpush.msra.mxu0 %v247
    %3113 = vmatpush.msra.mxu0 %v243
    %3114 = vmatpush.msra.mxu0 %v239
    %3115 = vmatpush.msra.mxu0 %v235
    %3116 = vmatpush.msra.mxu0 %v231
    %3117 = vmatpush.msra.mxu0 %v227
    %3118 = vmatmul.f32.gmra.mxu0 %v3057
    %v3119 = vpop.f32.mrf.mxu0
    %v3120 = vadd.f32 0.0, %v3119
    %3121 = vdwg.mxu0
    %3122 = vmatpush.msra.mxu0 %v288
    %3123 = vmatpush.msra.mxu0 %v284
    %3124 = vmatpush.msra.mxu0 %v280
    %3125 = vmatpush.msra.mxu0 %v276
    %3126 = vmatpush.msra.mxu0 %v272
    %3127 = vmatpush.msra.mxu0 %v268
    %3128 = vmatpush.msra.mxu0 %v264
    %3129 = vmatpush.msra.mxu0 %v260
    %3130 = vmatpush.msra.mxu0 %v256
    %3131 = vmatpush.msra.mxu0 %v252
    %3132 = vmatpush.msra.mxu0 %v248
    %3133 = vmatpush.msra.mxu0 %v244
    %3134 = vmatpush.msra.mxu0 %v240
    %3135 = vmatpush.msra.mxu0 %v236
    %3136 = vmatpush.msra.mxu0 %v232
    %3137 = vmatpush.msra.mxu0 %v228
    %3138 = vmatmul.f32.gmra.mxu0 %v3057
    %v3139 = vpop.f32.mrf.mxu0
    %v3140 = vadd.f32 0.0, %v3139
    %3141 = vdwg.mxu0
    %v3142 = vadd.f32 %v3058, %v3080
    %v3143 = vadd.f32 %v3059, %v3100
    %v3144 = vadd.f32 %v3060, %v3120
    %v3145 = vadd.f32 %v3061, %v3140
    %v3146 = vxor.u32 %v3142, 2147483648
    %v3147 = vxor.u32 %v3143, 2147483648
    %v3148 = vmul.f32 %v3146, 1.442695
    %v3149 = vpow.pop %v3148
    %v3150 = vmul.f32 %v3147, 1.442695
    %v3151 = vpow.pop %v3150
    %v3152 = vadd.f32 %v3149, 1.0
    %v3153 = vadd.f32 %v3151, 1.0
    %v3154 = vrcp.pop %v3152
    %v3155 = vmul.f32 %v3152, %v3154
    %v3156 = vsub.f32 1.0, %v3155
    %v3157 = vmul.f32 %v3154, %v3156
    %v3158 = vadd.f32 %v3154, %v3157
    %vm3159 = vweird.f32 %v3152
    %vm3160 = vweird.f32 %v3154
    %vm3161 = vmor %vm3159, %vm3160
    %v3162 = vsel %vm3161, %v3154, %v3158
    %v3163 = vand.u32 2147483647, %v3152
    %vm3164 = vcmp.eq.f32.partialorder %v3163, 8.507059e+37
    %v3165 = vand.u32 %v3152, 2147483648
    %v3166 = vor.u32 1.1754944e-38, %v3165
    %v3167 = vsel %vm3164, %v3166, %v3162
    %v3168 = vmul.f32 1.0, %v3167
    %v3169 = vrcp.pop %v3153
    %v3170 = vmul.f32 %v3153, %v3169
    %v3171 = vsub.f32 1.0, %v3170
    %v3172 = vmul.f32 %v3169, %v3171
    %v3173 = vadd.f32 %v3169, %v3172
    %vm3174 = vweird.f32 %v3153
    %vm3175 = vweird.f32 %v3169
    %vm3176 = vmor %vm3174, %vm3175
    %v3177 = vsel %vm3176, %v3169, %v3173
    %v3178 = vand.u32 2147483647, %v3153
    %vm3179 = vcmp.eq.f32.partialorder %v3178, 8.507059e+37
    %v3180 = vand.u32 %v3153, 2147483648
    %v3181 = vor.u32 1.1754944e-38, %v3180
    %v3182 = vsel %vm3179, %v3181, %v3177
    %v3183 = vmul.f32 1.0, %v3182
    %v3184 = vtanh.pop %v3144
    %v3185 = vxor.u32 %v3145, 2147483648
    %v3186 = vmul.f32 %v3185, 1.442695
    %v3187 = vpow.pop %v3186
    %v3188 = vadd.f32 %v3187, 1.0
    %v3189 = vrcp.pop %v3188
    %v3190 = vmul.f32 %v3188, %v3189
    %v3191 = vsub.f32 1.0, %v3190
    %v3192 = vmul.f32 %v3189, %v3191
    %v3193 = vadd.f32 %v3189, %v3192
    %vm3194 = vweird.f32 %v3188
    %vm3195 = vweird.f32 %v3189
    %vm3196 = vmor %vm3194, %vm3195
    %v3197 = vsel %vm3196, %v3189, %v3193
    %v3198 = vand.u32 2147483647, %v3188
    %vm3199 = vcmp.eq.f32.partialorder %v3198, 8.507059e+37
    %v3200 = vand.u32 %v3188, 2147483648
    %v3201 = vor.u32 1.1754944e-38, %v3200
    %v3202 = vsel %vm3199, %v3201, %v3197
    %v3203 = vmul.f32 1.0, %v3202
    %v3204 = vmul.f32 %v3183, %v3055
    %v3205 = vmul.f32 %v3168, %v3184
    %v3206 = vadd.f32 %v3204, %v3205
    %v3207 = vtanh.pop %v3206
    %v3208 = vmul.f32 %v3203, %v3207
    %v3209 = vld [vmem:[#allocation10 + $0x1] sm:$0x1]
    %v3210 = vld [vmem:[#allocation12] sm:$0xff]
    %v3211 = vld [vmem:[#allocation12 + $0x8] sm:$0xff]
    %v3212 = vld [vmem:[#allocation12 + $0x10] sm:$0xff]
    %v3213 = vld [vmem:[#allocation12 + $0x18] sm:$0xff]
    %v3214 = vld [vmem:[#allocation12 + $0x20] sm:$0xff]
    %v3215 = vld [vmem:[#allocation12 + $0x28] sm:$0xff]
    %v3216 = vld [vmem:[#allocation12 + $0x30] sm:$0xff]
    %v3217 = vld [vmem:[#allocation12 + $0x38] sm:$0xff]
    %v3218 = vld [vmem:[#allocation12 + $0x40] sm:$0xff]
    %v3219 = vld [vmem:[#allocation12 + $0x48] sm:$0xff]
    %v3220 = vld [vmem:[#allocation12 + $0x50] sm:$0xff]
    %v3221 = vld [vmem:[#allocation12 + $0x58] sm:$0xff]
    %v3222 = vld [vmem:[#allocation12 + $0x60] sm:$0xff]
    %v3223 = vld [vmem:[#allocation12 + $0x68] sm:$0xff]
    %v3224 = vld [vmem:[#allocation12 + $0x70] sm:$0xff]
    %v3225 = vld [vmem:[#allocation12 + $0x78] sm:$0xff]
    %v3226 = vperm.slane %v3209, 0
    %3227 = vmatpush.msra.mxu0 %v3225
    %3228 = vmatpush.msra.mxu0 %v3224
    %3229 = vmatpush.msra.mxu0 %v3223
    %3230 = vmatpush.msra.mxu0 %v3222
    %3231 = vmatpush.msra.mxu0 %v3221
    %3232 = vmatpush.msra.mxu0 %v3220
    %3233 = vmatpush.msra.mxu0 %v3219
    %3234 = vmatpush.msra.mxu0 %v3218
    %3235 = vmatpush.msra.mxu0 %v3217
    %3236 = vmatpush.msra.mxu0 %v3216
    %3237 = vmatpush.msra.mxu0 %v3215
    %3238 = vmatpush.msra.mxu0 %v3214
    %3239 = vmatpush.msra.mxu0 %v3213
    %3240 = vmatpush.msra.mxu0 %v3212
    %3241 = vmatpush.msra.mxu0 %v3211
    %3242 = vmatpush.msra.mxu0 %v3210
    %3243 = vmatmul.f32.gmra.mxu0 %v3208
    %v3244 = vpop.f32.mrf.mxu0
    %v3245 = vadd.f32 %v3226, %v3244
    %3246 = vdwg.mxu0
    %3247 = vst [vmem:[#allocation13] sm:$0xff] %v3245
    // Predicated region
    $region42: #{tpu_custom_call.1} parent=1 // pred_check
      _
    $region43: #{tpu_custom_call.1} parent=1 // pred_check_branch
      %3249 = sbr.rel (0) target = $region45
    $region44: #{tpu_custom_call.1} parent=1 // pred_region
      %3251 = vsyncadd [#allocation6], 0
      %s3253 = sshll.u32 [#allocation13], 4
      %s3254 = int_to_ptr.vmem [resolvable:$true] %s3253
      %s3255 = sshll.u32 %s5, 4
      %s3256 = int_to_ptr.hbm [resolvable:$true] %s3255
      %3258 = dma.vmem_to_hbm [thread:$0]  %s3254, 128, %s3256, [#allocation6]
    $region45: #{tpu_custom_call.1} parent=1 // pred_fallthru
      _
    // Predicated region
    $region46: #{tpu_custom_call.1} parent=1 // pred_check
      _
    $region47: #{tpu_custom_call.1} parent=1 // pred_check_branch
      %3260 = sbr.rel (0) target = $region49
    $region48: #{tpu_custom_call.1} parent=1 // pred_region
      %3262 = dma.done [#allocation6], 128
    $region49: #{tpu_custom_call.1} parent=1 // pred_fallthru
      _
    %3263 = vsyncpa [#allocation5], 1
    %3264 = vsyncpa [#allocation8], 1
    %3265 = vsyncpa [#allocation11], 1
    %3266 = vsyncpa [#allocation6], 1

</llo_original>
